<compile_context>
chip_gen: v5e
topology: v5e:2x2
jax: 0.10.0
libtpu: 0.0.40
codegen_flags: <defaults>
</compile_context>

<pallas_src>
import jax
import jax.numpy as jnp
from jax import lax
from jax.experimental import pallas as pl
from jax.experimental.pallas import tpu as pltpu


def _arm_kernel(xt_ref, w1_ref, w2_ref, b_ref, out_ref, feat_ref, pool_ref):
    # xt_ref  : (TH+2, W+2, Cin_p)  padded input rows for this row tile (bf16)
    # w1_ref  : (9*Cin_p, C)        packed 3x3 weights, BN1 scale folded (bf16)
    # w2_ref  : (C, C)              1x1 weights, BN2 scale and 1/HW folded (f32)
    # b_ref   : (2, C)              row 0: folded BN1 bias, row 1: folded BN2 bias (f32)
    # out_ref : (Cout, H*W)         lane-dense NCHW-ordered output (resident over t)
    # feat_ref: (H*W, C) scratch    ReLU'd conv features, resident over t
    # pool_ref: (1, C)   scratch    running channel sums for the global average pool
    t = pl.program_id(1)
    num_t = pl.num_programs(1)
    th2, wp2, cin_p = xt_ref.shape
    TH, W = th2 - 2, wp2 - 2
    tile_hw = TH * W
    cout = out_ref.shape[0]

    @pl.when(t == 0)
    def _():
        pool_ref[...] = jnp.zeros_like(pool_ref)

    # --- packed-K im2col: 9 shifted taps concatenated along the contraction (lane)
    #     axis -> a single MXU dot with K = 9*Cin_p per row tile.  Taps are sliced
    #     directly from the pipelined input buffer (no full-block copy). ---
    taps = []
    for tap in range(9):
        ky, kx = divmod(tap, 3)
        taps.append(xt_ref[ky:ky + TH, kx:kx + W, :].reshape(tile_hw, cin_p))
    packed = jnp.concatenate(taps, axis=-1)                      # (tile_hw, 9*Cin_p) bf16
    feat_t = jnp.dot(packed, w1_ref[...], preferred_element_type=jnp.float32)

    # --- folded BN1 bias + ReLU (f32), pool partial sum, park feat tile in VMEM ---
    feat_t = jnp.maximum(feat_t + b_ref[0:1, :], 0.0)            # (tile_hw, C) f32
    pool_ref[...] += jnp.sum(feat_t, axis=0, keepdims=True)
    row0 = pl.multiple_of(t * tile_hw, tile_hw)
    feat_ref[pl.ds(row0, tile_hw), :] = feat_t.astype(feat_ref.dtype)

    # --- finalize: 1x1 conv (BN2 scale + 1/HW folded) + sigmoid, channel attention,
    #     cast to the output dtype, lane-dense NCHW store ---
    @pl.when(t == num_t - 1)
    def _():
        att = jnp.dot(pool_ref[...], w2_ref[...], preferred_element_type=jnp.float32)
        att = jax.nn.sigmoid(att + b_ref[1:2, :])                # (1, C)
        scaled = (feat_ref[...].astype(jnp.float32) * att).astype(out_ref.dtype)
        res = scaled.T                                           # (C, H*W) lane-dense
        # At production Cout (multiple of 128) C == Cout, so the transpose already
        # covers exactly the real channels; only the toy Cout needs the slice below.
        out_ref[...] = res[:cout, :]


def _pick_row_tile(H, W, cin_p, packed_budget_bytes=4 << 20):
    """Largest row tile TH (a divisor of H) whose packed-K im2col operand
    (TH*W, 9*Cin_p) stays within `packed_budget_bytes` as bf16, keeping TH*W
    sublane-aligned; prefers >= 2 tiles so the pool-accumulate / finalize
    structure is actually pipelined."""
    max_rows = max(1, packed_budget_bytes // (9 * cin_p * 2 * max(W, 1)))
    cands = [th for th in range(1, H + 1)
             if H % th == 0 and (th * W) % 8 == 0 and th <= max_rows]
    if not cands:
        return H
    if len(cands) > 1 and cands[-1] == H:
        return cands[-2]
    return cands[-1]


def attention_refinement(x_nchw, w1_hwio, bn1_scale, bn1_bias, w2_io, bn2_scale,
                         bn2_bias, compute_dtype=jnp.bfloat16, feat_dtype=jnp.float32):
    """AttentionRefinementModule forward. x_nchw: (N, Cin, H, W) -> (N, Cout, H, W).

    feat_dtype: dtype of the resident feature scratch / attention multiply.  Keep
    float32 on v5e (no bf16 VALU); bf16 halves VMEM + VALU work on v6e/v7x.
    """
    N, Cin, H, W = x_nchw.shape
    Cout = w1_hwio.shape[-1]
    HW = H * W
    CIN_P = ((Cin + 127) // 128) * 128   # lane-aligned contraction chunks (no-op for Cin % 128 == 0)
    C_PAD = ((Cout + 127) // 128) * 128  # lane-dense channel width inside the kernel

    TH = _pick_row_tile(H, W, CIN_P)
    T = H // TH

    # ---- layout prep (cheap XLA: ~1x input HBM traffic + a 2-row halo per tile) ----
    x_nhwc = jnp.transpose(x_nchw, (0, 2, 3, 1))
    xp = jnp.pad(x_nhwc, ((0, 0), (1, 1), (1, 1), (0, CIN_P - Cin))).astype(compute_dtype)
    x_tiles = jnp.stack([xp[:, tt * TH:tt * TH + TH + 2] for tt in range(T)], axis=1)
    # x_tiles: (N, T, TH+2, W+2, CIN_P)

    # Fold BN1 scale into the 3x3 weights; pad Cin/Cout; pack the 9 taps along K.
    w1 = w1_hwio * bn1_scale                                     # (3, 3, Cin, Cout)
    w1 = jnp.pad(w1, ((0, 0), (0, 0), (0, CIN_P - Cin), (0, C_PAD - Cout)))
    w1 = w1.reshape(9 * CIN_P, C_PAD).astype(compute_dtype)

    # Fold BN2 scale AND the 1/HW pool normalization into the 1x1 weights (tiny, f32).
    w2 = jnp.pad((w2_io * bn2_scale / HW).astype(jnp.float32),
                 ((0, C_PAD - Cout), (0, C_PAD - Cout)))

    # Pack both folded BN biases into one operand.
    biases = jnp.stack([jnp.pad(bn1_bias, (0, C_PAD - Cout)),
                        jnp.pad(bn2_bias, (0, C_PAD - Cout))]).astype(jnp.float32)

    out_shape = jax.ShapeDtypeStruct((N, Cout, HW), x_nchw.dtype)
    feat_bytes = jnp.dtype(feat_dtype).itemsize

    def build(single_buffer_consts):
        const_kw = {"pipeline_mode": pl.Buffered(1)} if single_buffer_consts else {}
        n_const_buf = 1 if single_buffer_consts else 2
        in_specs = [
            pl.BlockSpec((None, None, TH + 2, W + 2, CIN_P),
                         lambda n, t: (n, t, 0, 0, 0)),
            pl.BlockSpec((9 * CIN_P, C_PAD), lambda n, t: (0, 0), **const_kw),
            pl.BlockSpec((C_PAD, C_PAD), lambda n, t: (0, 0), **const_kw),
            pl.BlockSpec((2, C_PAD), lambda n, t: (0, 0), **const_kw),
        ]
        out_spec = pl.BlockSpec((None, Cout, HW), lambda n, t: (n, 0, 0))
        scratch = [pltpu.VMEM((HW, C_PAD), feat_dtype),   # resident feat
                   pltpu.VMEM((1, C_PAD), jnp.float32)]   # pool partial sums
        # VMEM budget derived from the actual block / scratch sizes (+ headroom).
        est = ((TH + 2) * (W + 2) * CIN_P * 2 * 2          # input tile, double-buffered
               + TH * W * 9 * CIN_P * 2                    # transient packed-K operand
               + 9 * CIN_P * C_PAD * 2 * n_const_buf       # w1
               + C_PAD * C_PAD * 4 * n_const_buf           # w2
               + 2 * C_PAD * 4 * n_const_buf               # biases
               + Cout * HW * 4 * 2                         # output block
               + HW * C_PAD * feat_bytes                   # resident feat scratch
               + 8 * C_PAD * 4)                            # pool scratch
        vmem_limit = min(max(2 * est + (4 << 20), 32 << 20), 112 << 20)
        return pl.pallas_call(
            _arm_kernel,
            out_shape=out_shape,
            grid=(N, T),
            in_specs=in_specs,
            out_specs=out_spec,
            scratch_shapes=scratch,
            compiler_params=pltpu.CompilerParams(
                dimension_semantics=("parallel", "arbitrary"),
                vmem_limit_bytes=vmem_limit),
        )

    try:
        out = build(True)(x_tiles, w1, w2, biases)
    except Exception:
        # pl.Buffered(1) (single-buffered constant operands) rejected by this
        # jax/Mosaic version -> fall back to default double buffering.
        out = build(False)(x_tiles, w1, w2, biases)

    # Output block is already (N, C, H*W) in NCHW order: only a free reshape remains.
    return out.reshape(N, Cout, H, W)


def _reference(x_nchw, w1_hwio, bn1_scale, bn1_bias, w2_io, bn2_scale, bn2_bias,
               compute_dtype=jnp.bfloat16):
    """Pure-JAX reference with the same bf16 quantization of the conv operands."""
    x_nhwc = jnp.transpose(x_nchw, (0, 2, 3, 1))
    xq = x_nhwc.astype(compute_dtype).astype(jnp.float32)
    w1q = (w1_hwio * bn1_scale).astype(compute_dtype).astype(jnp.float32)
    feat = lax.conv_general_dilated(
        xq, w1q, window_strides=(1, 1), padding=((1, 1), (1, 1)),
        dimension_numbers=("NHWC", "HWIO", "NHWC"),
        precision=lax.Precision.HIGHEST)
    feat = jnp.maximum(feat + bn1_bias, 0.0)
    att = jnp.mean(feat, axis=(1, 2), keepdims=True)
    att = jnp.einsum("nhwi,io->nhwo", att, w2_io * bn2_scale,
                     precision=lax.Precision.HIGHEST)
    att = jax.nn.sigmoid(att + bn2_bias)
    return jnp.transpose(feat * att, (0, 3, 1, 2))    # NCHW


def _fold_bn(gamma, beta, mean, var, eps=1e-5):
    scale = gamma / jnp.sqrt(var + eps)
    bias = beta - mean * scale
    return scale, bias


if __name__ == "__main__":
    # Small shapes consistent with the module: NCHW input (2, 4, 16, 16), out_chan=8.
    N, Cin, H, W = 2, 4, 16, 16
    Cout = 8

    key = jax.random.PRNGKey(0)
    keys = jax.random.split(key, 11)

    x_nchw = jax.random.normal(keys[0], (N, Cin, H, W), jnp.float32)

    # conv weights (kaiming_normal_ with a=1 -> std = sqrt(1/fan_in)), no bias
    w1_hwio = jax.random.normal(keys[1], (3, 3, Cin, Cout), jnp.float32) * jnp.sqrt(1.0 / (9 * Cin))
    w2_io = jax.random.normal(keys[2], (Cout, Cout), jnp.float32) * jnp.sqrt(1.0 / Cout)

    # BatchNorm params (inference mode, folded)
    g1 = 0.5 + jax.random.uniform(keys[3], (Cout,), jnp.float32)
    be1 = 0.1 * jax.random.normal(keys[4], (Cout,), jnp.float32)
    m1 = 0.1 * jax.random.normal(keys[5], (Cout,), jnp.float32)
    v1 = 0.5 + jax.random.uniform(keys[6], (Cout,), jnp.float32)
    g2 = 0.5 + jax.random.uniform(keys[7], (Cout,), jnp.float32)
    be2 = 0.1 * jax.random.normal(keys[8], (Cout,), jnp.float32)
    m2 = 0.1 * jax.random.normal(keys[9], (Cout,), jnp.float32)
    v2 = 0.5 + jax.random.uniform(keys[10], (Cout,), jnp.float32)

    s1, b1 = _fold_bn(g1, be1, m1, v1)
    s2, b2 = _fold_bn(g2, be2, m2, v2)

    out_nchw = attention_refinement(x_nchw, w1_hwio, s1, b1, w2_io, s2, b2)
    out_nchw = jax.block_until_ready(out_nchw)

    ref_nchw = jax.block_until_ready(_reference(x_nchw, w1_hwio, s1, b1, w2_io, s2, b2))

    assert out_nchw.shape == (N, Cout, H, W), out_nchw.shape
    if not jnp.allclose(out_nchw, ref_nchw, atol=2e-3, rtol=2e-3):
        err = jnp.max(jnp.abs(out_nchw - ref_nchw))
        raise AssertionError(f"Pallas kernel output does not match reference (max abs err {err})")

    print("KERNEL_OK")
</pallas_src>

<mosaic_0001>
module attributes {stable_mosaic.version = 11 : i64} {
  func.func @_arm_kernel(%arg0: i32, %arg1: i32, %arg2: memref<1x1x10x18x128xbf16, #tpu.memory_space<vmem>>, %arg3: memref<1152x128xbf16, #tpu.memory_space<vmem>>, %arg4: memref<128x128xf32, #tpu.memory_space<vmem>>, %arg5: memref<2x128xf32, #tpu.memory_space<vmem>>, %arg6: memref<1x8x256xf32, #tpu.memory_space<vmem>>, %arg7: memref<256x128xf32, #tpu.memory_space<vmem>>, %arg8: memref<1x128xf32, #tpu.memory_space<vmem>>) attributes {dimension_semantics = [#tpu.dimension_semantics<parallel>, #tpu.dimension_semantics<arbitrary>], iteration_bounds = array<i64: 2, 2>, scalar_prefetch = 0 : i64, scratch_operands = 2 : i64, tpu.core_type = #tpu.core_type<tc>, window_params = [{transform_indices = @transform_0, window_bounds = array<i64: 1, 1, 10, 18, 128>}, {pipeline_mode = #tpu.pipeline_mode<synchronous>, transform_indices = @transform_1, window_bounds = array<i64: 1152, 128>}, {pipeline_mode = #tpu.pipeline_mode<synchronous>, transform_indices = @transform_2, window_bounds = array<i64: 128, 128>}, {pipeline_mode = #tpu.pipeline_mode<synchronous>, transform_indices = @transform_3, window_bounds = array<i64: 2, 128>}, {transform_indices = @transform_4, window_bounds = array<i64: 1, 8, 256>}]} {
    %c0_i32 = arith.constant 0 : i32
    %0 = arith.cmpi eq, %arg1, %c0_i32 : i32
    %1 = arith.extui %0 : i1 to i32
    %c0_i32_0 = arith.constant 0 : i32
    %2 = arith.cmpi ne, %1, %c0_i32_0 : i32
    scf.if %2 {
      %cst_55 = arith.constant 0.000000e+00 : f32
      %50 = vector.broadcast %cst_55 : f32 to vector<1x128xf32>
      %c0_56 = arith.constant 0 : index
      %c0_57 = arith.constant 0 : index
      %51 = vector.load %arg8[%c0_56, %c0_57] : memref<1x128xf32, #tpu.memory_space<vmem>>, vector<1x128xf32>
      tpu.vector_store %arg8[%c0_56, %c0_57], %50 {strides = array<i32>} : memref<1x128xf32, #tpu.memory_space<vmem>>, vector<1x128xf32>,
    } else {
    }
    %c0 = arith.constant 0 : index
    %c0_1 = arith.constant 0 : index
    %c0_2 = arith.constant 0 : index
    %c0_3 = arith.constant 0 : index
    %c0_4 = arith.constant 0 : index
    %3 = vector.load %arg2[%c0, %c0_1, %c0_2, %c0_3, %c0_4] : memref<1x1x10x18x128xbf16, #tpu.memory_space<vmem>>, vector<1x1x8x16x128xbf16>
    %4 = vector.shape_cast %3 : vector<1x1x8x16x128xbf16> to vector<8x16x128xbf16>
    %5 = vector.shape_cast %4 : vector<8x16x128xbf16> to vector<128x128xbf16>
    %c0_5 = arith.constant 0 : index
    %c0_6 = arith.constant 0 : index
    %c0_7 = arith.constant 0 : index
    %c1 = arith.constant 1 : index
    %c0_8 = arith.constant 0 : index
    %6 = vector.load %arg2[%c0_5, %c0_6, %c0_7, %c1, %c0_8] : memref<1x1x10x18x128xbf16, #tpu.memory_space<vmem>>, vector<1x1x8x16x128xbf16>
    %7 = vector.shape_cast %6 : vector<1x1x8x16x128xbf16> to vector<8x16x128xbf16>
    %8 = vector.shape_cast %7 : vector<8x16x128xbf16> to vector<128x128xbf16>
    %c0_9 = arith.constant 0 : index
    %c0_10 = arith.constant 0 : index
    %c0_11 = arith.constant 0 : index
    %c2 = arith.constant 2 : index
    %c0_12 = arith.constant 0 : index
    %9 = vector.load %arg2[%c0_9, %c0_10, %c0_11, %c2, %c0_12] : memref<1x1x10x18x128xbf16, #tpu.memory_space<vmem>>, vector<1x1x8x16x128xbf16>
    %10 = vector.shape_cast %9 : vector<1x1x8x16x128xbf16> to vector<8x16x128xbf16>
    %11 = vector.shape_cast %10 : vector<8x16x128xbf16> to vector<128x128xbf16>
    %c0_13 = arith.constant 0 : index
    %c0_14 = arith.constant 0 : index
    %c1_15 = arith.constant 1 : index
    %c0_16 = arith.constant 0 : index
    %c0_17 = arith.constant 0 : index
    %12 = vector.load %arg2[%c0_13, %c0_14, %c1_15, %c0_16, %c0_17] : memref<1x1x10x18x128xbf16, #tpu.memory_space<vmem>>, vector<1x1x8x16x128xbf16>
    %13 = vector.shape_cast %12 : vector<1x1x8x16x128xbf16> to vector<8x16x128xbf16>
    %14 = vector.shape_cast %13 : vector<8x16x128xbf16> to vector<128x128xbf16>
    %c0_18 = arith.constant 0 : index
    %c0_19 = arith.constant 0 : index
    %c1_20 = arith.constant 1 : index
    %c1_21 = arith.constant 1 : index
    %c0_22 = arith.constant 0 : index
    %15 = vector.load %arg2[%c0_18, %c0_19, %c1_20, %c1_21, %c0_22] : memref<1x1x10x18x128xbf16, #tpu.memory_space<vmem>>, vector<1x1x8x16x128xbf16>
    %16 = vector.shape_cast %15 : vector<1x1x8x16x128xbf16> to vector<8x16x128xbf16>
    %17 = vector.shape_cast %16 : vector<8x16x128xbf16> to vector<128x128xbf16>
    %c0_23 = arith.constant 0 : index
    %c0_24 = arith.constant 0 : index
    %c1_25 = arith.constant 1 : index
    %c2_26 = arith.constant 2 : index
    %c0_27 = arith.constant 0 : index
    %18 = vector.load %arg2[%c0_23, %c0_24, %c1_25, %c2_26, %c0_27] : memref<1x1x10x18x128xbf16, #tpu.memory_space<vmem>>, vector<1x1x8x16x128xbf16>
    %19 = vector.shape_cast %18 : vector<1x1x8x16x128xbf16> to vector<8x16x128xbf16>
    %20 = vector.shape_cast %19 : vector<8x16x128xbf16> to vector<128x128xbf16>
    %c0_28 = arith.constant 0 : index
    %c0_29 = arith.constant 0 : index
    %c2_30 = arith.constant 2 : index
    %c0_31 = arith.constant 0 : index
    %c0_32 = arith.constant 0 : index
    %21 = vector.load %arg2[%c0_28, %c0_29, %c2_30, %c0_31, %c0_32] : memref<1x1x10x18x128xbf16, #tpu.memory_space<vmem>>, vector<1x1x8x16x128xbf16>
    %22 = vector.shape_cast %21 : vector<1x1x8x16x128xbf16> to vector<8x16x128xbf16>
    %23 = vector.shape_cast %22 : vector<8x16x128xbf16> to vector<128x128xbf16>
    %c0_33 = arith.constant 0 : index
    %c0_34 = arith.constant 0 : index
    %c2_35 = arith.constant 2 : index
    %c1_36 = arith.constant 1 : index
    %c0_37 = arith.constant 0 : index
    %24 = vector.load %arg2[%c0_33, %c0_34, %c2_35, %c1_36, %c0_37] : memref<1x1x10x18x128xbf16, #tpu.memory_space<vmem>>, vector<1x1x8x16x128xbf16>
    %25 = vector.shape_cast %24 : vector<1x1x8x16x128xbf16> to vector<8x16x128xbf16>
    %26 = vector.shape_cast %25 : vector<8x16x128xbf16> to vector<128x128xbf16>
    %c0_38 = arith.constant 0 : index
    %c0_39 = arith.constant 0 : index
    %c2_40 = arith.constant 2 : index
    %c2_41 = arith.constant 2 : index
    %c0_42 = arith.constant 0 : index
    %27 = vector.load %arg2[%c0_38, %c0_39, %c2_40, %c2_41, %c0_42] : memref<1x1x10x18x128xbf16, #tpu.memory_space<vmem>>, vector<1x1x8x16x128xbf16>
    %28 = vector.shape_cast %27 : vector<1x1x8x16x128xbf16> to vector<8x16x128xbf16>
    %29 = vector.shape_cast %28 : vector<8x16x128xbf16> to vector<128x128xbf16>
    %30 = tpu.concatenate %5, %8, %11, %14, %17, %20, %23, %26, %29 in 1 : vector<128x128xbf16>, vector<128x128xbf16>, vector<128x128xbf16>, vector<128x128xbf16>, vector<128x128xbf16>, vector<128x128xbf16>, vector<128x128xbf16>, vector<128x128xbf16>, vector<128x128xbf16> -> vector<128x1152xbf16>
    %c0_43 = arith.constant 0 : index
    %c0_44 = arith.constant 0 : index
    %31 = vector.load %arg3[%c0_43, %c0_44] : memref<1152x128xbf16, #tpu.memory_space<vmem>>, vector<1152x128xbf16>
    %cst = arith.constant dense<0.000000e+00> : vector<128x128xf32>
    %32 = tpu.matmul %30, %31, %cst {dimension_numbers = #tpu.dot_dimension_numbers<[1], [0], [0], [1], [0, 0, 1, 1], [], []>} : vector<128x1152xbf16>, vector<1152x128xbf16>, vector<128x128xf32> -> vector<128x128xf32>
    %c0_45 = arith.constant 0 : index
    %c0_46 = arith.constant 0 : index
    %33 = vector.load %arg5[%c0_45, %c0_46] : memref<2x128xf32, #tpu.memory_space<vmem>>, vector<1x128xf32>
    %34 = vector.broadcast %33 : vector<1x128xf32> to vector<128x128xf32>
    %35 = arith.addf %32, %34 : vector<128x128xf32>
    %cst_47 = arith.constant 0.000000e+00 : f32
    %36 = vector.broadcast %cst_47 : f32 to vector<128x128xf32>
    %37 = arith.maximumf %35, %36 : vector<128x128xf32>
    %c0_48 = arith.constant 0 : index
    %c0_49 = arith.constant 0 : index
    %38 = vector.load %arg8[%c0_48, %c0_49] : memref<1x128xf32, #tpu.memory_space<vmem>>, vector<1x128xf32>
    %cst_50 = arith.constant dense<0.000000e+00> : vector<128xf32>
    %39 = vector.multi_reduction <add>, %37, %cst_50 [0] : vector<128x128xf32> to vector<128xf32>
    %40 = vector.shape_cast %39 : vector<128xf32> to vector<1x128xf32>
    %41 = arith.addf %38, %40 : vector<1x128xf32>
    %c0_51 = arith.constant 0 : index
    %c0_52 = arith.constant 0 : index
    %42 = vector.load %arg8[%c0_51, %c0_52] : memref<1x128xf32, #tpu.memory_space<vmem>>, vector<1x128xf32>
    tpu.vector_store %arg8[%c0_51, %c0_52], %41 {strides = array<i32>} : memref<1x128xf32, #tpu.memory_space<vmem>>, vector<1x128xf32>,
    %c128_i32 = arith.constant 128 : i32
    %43 = arith.muli %arg1, %c128_i32 : i32
    %44 = tpu.assume_multiple %43, 128 : i32
    %45 = arith.index_cast %44 : i32 to index
    %c0_53 = arith.constant 0 : index
    %46 = vector.load %arg7[%45, %c0_53] : memref<256x128xf32, #tpu.memory_space<vmem>>, vector<128x128xf32>
    tpu.vector_store %arg7[%45, %c0_53], %37 {strides = array<i32>} : memref<256x128xf32, #tpu.memory_space<vmem>>, vector<128x128xf32>,
    %c1_i32 = arith.constant 1 : i32
    %47 = arith.cmpi eq, %arg1, %c1_i32 : i32
    %48 = arith.extui %47 : i1 to i32
    %c0_i32_54 = arith.constant 0 : i32
    %49 = arith.cmpi ne, %48, %c0_i32_54 : i32
    scf.if %49 {
      %c0_55 = arith.constant 0 : index
      %c0_56 = arith.constant 0 : index
      %50 = vector.load %arg8[%c0_55, %c0_56] : memref<1x128xf32, #tpu.memory_space<vmem>>, vector<1x128xf32>
      %c0_57 = arith.constant 0 : index
      %c0_58 = arith.constant 0 : index
      %51 = vector.load %arg4[%c0_57, %c0_58] : memref<128x128xf32, #tpu.memory_space<vmem>>, vector<128x128xf32>
      %cst_59 = arith.constant dense<0.000000e+00> : vector<1x128xf32>
      %52 = tpu.matmul %50, %51, %cst_59 {dimension_numbers = #tpu.dot_dimension_numbers<[1], [0], [0], [1], [0, 0, 1, 1], [], []>} : vector<1x128xf32>, vector<128x128xf32>, vector<1x128xf32> -> vector<1x128xf32>
      %c1_60 = arith.constant 1 : index
      %c0_61 = arith.constant 0 : index
      %53 = vector.load %arg5[%c1_60, %c0_61] : memref<2x128xf32, #tpu.memory_space<vmem>>, vector<1x128xf32>
      %54 = arith.addf %52, %53 : vector<1x128xf32>
      %55 = arith.negf %54 : vector<1x128xf32>
      %56 = math.exp %55 : vector<1x128xf32>
      %cst_62 = arith.constant 1.000000e+00 : f32
      %57 = vector.broadcast %cst_62 : f32 to vector<1x128xf32>
      %58 = arith.addf %57, %56 : vector<1x128xf32>
      %59 = arith.divf %57, %58 : vector<1x128xf32>
      %c0_63 = arith.constant 0 : index
      %c0_64 = arith.constant 0 : index
      %60 = vector.load %arg7[%c0_63, %c0_64] : memref<256x128xf32, #tpu.memory_space<vmem>>, vector<256x128xf32>
      %61 = vector.broadcast %59 : vector<1x128xf32> to vector<256x128xf32>
      %62 = arith.mulf %60, %61 : vector<256x128xf32>
      %63 = tpu.transpose %62, [1, 0] : vector<256x128xf32> -> vector<128x256xf32>
      %64 = vector.extract_strided_slice %63 {offsets = [0, 0], sizes = [8, 256], strides = [1, 1]} : vector<128x256xf32> to vector<8x256xf32>
      %c0_65 = arith.constant 0 : index
      %c0_66 = arith.constant 0 : index
      %c0_67 = arith.constant 0 : index
      %65 = vector.load %arg6[%c0_65, %c0_66, %c0_67] : memref<1x8x256xf32, #tpu.memory_space<vmem>>, vector<1x8x256xf32>
      %66 = vector.shape_cast %65 : vector<1x8x256xf32> to vector<8x256xf32>
      %67 = vector.shape_cast %64 : vector<8x256xf32> to vector<1x8x256xf32>
      tpu.vector_store %arg6[%c0_65, %c0_66, %c0_67], %67 {strides = array<i32>} : memref<1x8x256xf32, #tpu.memory_space<vmem>>, vector<1x8x256xf32>,
    } else {
    }
    return
  }
  func.func @transform_0(%arg0: i32, %arg1: i32) -> (i32, i32, i32, i32, i32) {
    %c0_i32 = arith.constant 0 : i32
    %c0_i32_0 = arith.constant 0 : i32
    %c0_i32_1 = arith.constant 0 : i32
    %c0_i32_2 = arith.constant 0 : i32
    return %arg0, %arg1, %c0_i32, %c0_i32_0, %c0_i32_1 : i32, i32, i32, i32, i32
  }
  func.func @transform_1(%arg0: i32, %arg1: i32) -> (i32, i32) {
    %c0_i32 = arith.constant 0 : i32
    %c0_i32_0 = arith.constant 0 : i32
    %c0_i32_1 = arith.constant 0 : i32
    return %c0_i32, %c0_i32_0 : i32, i32
  }
  func.func @transform_2(%arg0: i32, %arg1: i32) -> (i32, i32) {
    %c0_i32 = arith.constant 0 : i32
    %c0_i32_0 = arith.constant 0 : i32
    %c0_i32_1 = arith.constant 0 : i32
    return %c0_i32, %c0_i32_0 : i32, i32
  }
  func.func @transform_3(%arg0: i32, %arg1: i32) -> (i32, i32) {
    %c0_i32 = arith.constant 0 : i32
    %c0_i32_0 = arith.constant 0 : i32
    %c0_i32_1 = arith.constant 0 : i32
    return %c0_i32, %c0_i32_0 : i32, i32
  }
  func.func @transform_4(%arg0: i32, %arg1: i32) -> (i32, i32, i32) {
    %c0_i32 = arith.constant 0 : i32
    %c0_i32_0 = arith.constant 0 : i32
    %c0_i32_1 = arith.constant 0 : i32
    return %arg0, %c0_i32, %c0_i32_0 : i32, i32, i32
  }
}

module attributes {stable_mosaic.version = 11 : i64} {
  func.func @_arm_kernel(%arg0: i32, %arg1: i32, %arg2: memref<1x1x10x18x128xbf16, #tpu.memory_space<vmem>>, %arg3: memref<1152x128xbf16, #tpu.memory_space<vmem>>, %arg4: memref<128x128xf32, #tpu.memory_space<vmem>>, %arg5: memref<2x128xf32, #tpu.memory_space<vmem>>, %arg6: memref<1x8x256xf32, #tpu.memory_space<vmem>>, %arg7: memref<256x128xf32, #tpu.memory_space<vmem>>, %arg8: memref<1x128xf32, #tpu.memory_space<vmem>>) attributes {dimension_semantics = [#tpu.dimension_semantics<parallel>, #tpu.dimension_semantics<arbitrary>], iteration_bounds = array<i64: 2, 2>, scalar_prefetch = 0 : i64, scratch_operands = 2 : i64, tpu.core_type = #tpu.core_type<tc>, window_params = [{transform_indices = @transform_0, window_bounds = array<i64: 1, 1, 10, 18, 128>}, {pipeline_mode = #tpu.pipeline_mode<synchronous>, transform_indices = @transform_1, window_bounds = array<i64: 1152, 128>}, {pipeline_mode = #tpu.pipeline_mode<synchronous>, transform_indices = @transform_2, window_bounds = array<i64: 128, 128>}, {pipeline_mode = #tpu.pipeline_mode<synchronous>, transform_indices = @transform_3, window_bounds = array<i64: 2, 128>}, {transform_indices = @transform_4, window_bounds = array<i64: 1, 8, 256>}]} {
    %c0_i32 = arith.constant 0 : i32
    %0 = arith.cmpi eq, %arg1, %c0_i32 : i32
    %1 = arith.extui %0 : i1 to i32
    %c0_i32_0 = arith.constant 0 : i32
    %2 = arith.cmpi ne, %1, %c0_i32_0 : i32
    scf.if %2 {
      %cst_55 = arith.constant 0.000000e+00 : f32
      %50 = vector.broadcast %cst_55 : f32 to vector<1x128xf32>
      %c0_56 = arith.constant 0 : index
      %c0_57 = arith.constant 0 : index
      %51 = vector.load %arg8[%c0_56, %c0_57] : memref<1x128xf32, #tpu.memory_space<vmem>>, vector<1x128xf32>
      tpu.vector_store %arg8[%c0_56, %c0_57], %50 {strides = array<i32>} : memref<1x128xf32, #tpu.memory_space<vmem>>, vector<1x128xf32>,
    } else {
    }
    %c0 = arith.constant 0 : index
    %c0_1 = arith.constant 0 : index
    %c0_2 = arith.constant 0 : index
    %c0_3 = arith.constant 0 : index
    %c0_4 = arith.constant 0 : index
    %3 = vector.load %arg2[%c0, %c0_1, %c0_2, %c0_3, %c0_4] : memref<1x1x10x18x128xbf16, #tpu.memory_space<vmem>>, vector<1x1x8x16x128xbf16>
    %4 = vector.shape_cast %3 : vector<1x1x8x16x128xbf16> to vector<8x16x128xbf16>
    %5 = vector.shape_cast %4 : vector<8x16x128xbf16> to vector<128x128xbf16>
    %c0_5 = arith.constant 0 : index
    %c0_6 = arith.constant 0 : index
    %c0_7 = arith.constant 0 : index
    %c1 = arith.constant 1 : index
    %c0_8 = arith.constant 0 : index
    %6 = vector.load %arg2[%c0_5, %c0_6, %c0_7, %c1, %c0_8] : memref<1x1x10x18x128xbf16, #tpu.memory_space<vmem>>, vector<1x1x8x16x128xbf16>
    %7 = vector.shape_cast %6 : vector<1x1x8x16x128xbf16> to vector<8x16x128xbf16>
    %8 = vector.shape_cast %7 : vector<8x16x128xbf16> to vector<128x128xbf16>
    %c0_9 = arith.constant 0 : index
    %c0_10 = arith.constant 0 : index
    %c0_11 = arith.constant 0 : index
    %c2 = arith.constant 2 : index
    %c0_12 = arith.constant 0 : index
    %9 = vector.load %arg2[%c0_9, %c0_10, %c0_11, %c2, %c0_12] : memref<1x1x10x18x128xbf16, #tpu.memory_space<vmem>>, vector<1x1x8x16x128xbf16>
    %10 = vector.shape_cast %9 : vector<1x1x8x16x128xbf16> to vector<8x16x128xbf16>
    %11 = vector.shape_cast %10 : vector<8x16x128xbf16> to vector<128x128xbf16>
    %c0_13 = arith.constant 0 : index
    %c0_14 = arith.constant 0 : index
    %c1_15 = arith.constant 1 : index
    %c0_16 = arith.constant 0 : index
    %c0_17 = arith.constant 0 : index
    %12 = vector.load %arg2[%c0_13, %c0_14, %c1_15, %c0_16, %c0_17] : memref<1x1x10x18x128xbf16, #tpu.memory_space<vmem>>, vector<1x1x8x16x128xbf16>
    %13 = vector.shape_cast %12 : vector<1x1x8x16x128xbf16> to vector<8x16x128xbf16>
    %14 = vector.shape_cast %13 : vector<8x16x128xbf16> to vector<128x128xbf16>
    %c0_18 = arith.constant 0 : index
    %c0_19 = arith.constant 0 : index
    %c1_20 = arith.constant 1 : index
    %c1_21 = arith.constant 1 : index
    %c0_22 = arith.constant 0 : index
    %15 = vector.load %arg2[%c0_18, %c0_19, %c1_20, %c1_21, %c0_22] : memref<1x1x10x18x128xbf16, #tpu.memory_space<vmem>>, vector<1x1x8x16x128xbf16>
    %16 = vector.shape_cast %15 : vector<1x1x8x16x128xbf16> to vector<8x16x128xbf16>
    %17 = vector.shape_cast %16 : vector<8x16x128xbf16> to vector<128x128xbf16>
    %c0_23 = arith.constant 0 : index
    %c0_24 = arith.constant 0 : index
    %c1_25 = arith.constant 1 : index
    %c2_26 = arith.constant 2 : index
    %c0_27 = arith.constant 0 : index
    %18 = vector.load %arg2[%c0_23, %c0_24, %c1_25, %c2_26, %c0_27] : memref<1x1x10x18x128xbf16, #tpu.memory_space<vmem>>, vector<1x1x8x16x128xbf16>
    %19 = vector.shape_cast %18 : vector<1x1x8x16x128xbf16> to vector<8x16x128xbf16>
    %20 = vector.shape_cast %19 : vector<8x16x128xbf16> to vector<128x128xbf16>
    %c0_28 = arith.constant 0 : index
    %c0_29 = arith.constant 0 : index
    %c2_30 = arith.constant 2 : index
    %c0_31 = arith.constant 0 : index
    %c0_32 = arith.constant 0 : index
    %21 = vector.load %arg2[%c0_28, %c0_29, %c2_30, %c0_31, %c0_32] : memref<1x1x10x18x128xbf16, #tpu.memory_space<vmem>>, vector<1x1x8x16x128xbf16>
    %22 = vector.shape_cast %21 : vector<1x1x8x16x128xbf16> to vector<8x16x128xbf16>
    %23 = vector.shape_cast %22 : vector<8x16x128xbf16> to vector<128x128xbf16>
    %c0_33 = arith.constant 0 : index
    %c0_34 = arith.constant 0 : index
    %c2_35 = arith.constant 2 : index
    %c1_36 = arith.constant 1 : index
    %c0_37 = arith.constant 0 : index
    %24 = vector.load %arg2[%c0_33, %c0_34, %c2_35, %c1_36, %c0_37] : memref<1x1x10x18x128xbf16, #tpu.memory_space<vmem>>, vector<1x1x8x16x128xbf16>
    %25 = vector.shape_cast %24 : vector<1x1x8x16x128xbf16> to vector<8x16x128xbf16>
    %26 = vector.shape_cast %25 : vector<8x16x128xbf16> to vector<128x128xbf16>
    %c0_38 = arith.constant 0 : index
    %c0_39 = arith.constant 0 : index
    %c2_40 = arith.constant 2 : index
    %c2_41 = arith.constant 2 : index
    %c0_42 = arith.constant 0 : index
    %27 = vector.load %arg2[%c0_38, %c0_39, %c2_40, %c2_41, %c0_42] : memref<1x1x10x18x128xbf16, #tpu.memory_space<vmem>>, vector<1x1x8x16x128xbf16>
    %28 = vector.shape_cast %27 : vector<1x1x8x16x128xbf16> to vector<8x16x128xbf16>
    %29 = vector.shape_cast %28 : vector<8x16x128xbf16> to vector<128x128xbf16>
    %30 = tpu.concatenate %5, %8, %11, %14, %17, %20, %23, %26, %29 in 1 : vector<128x128xbf16>, vector<128x128xbf16>, vector<128x128xbf16>, vector<128x128xbf16>, vector<128x128xbf16>, vector<128x128xbf16>, vector<128x128xbf16>, vector<128x128xbf16>, vector<128x128xbf16> -> vector<128x1152xbf16>
    %c0_43 = arith.constant 0 : index
    %c0_44 = arith.constant 0 : index
    %31 = vector.load %arg3[%c0_43, %c0_44] : memref<1152x128xbf16, #tpu.memory_space<vmem>>, vector<1152x128xbf16>
    %cst = arith.constant dense<0.000000e+00> : vector<128x128xf32>
    %32 = tpu.matmul %30, %31, %cst {dimension_numbers = #tpu.dot_dimension_numbers<[1], [0], [0], [1], [0, 0, 1, 1], [], []>} : vector<128x1152xbf16>, vector<1152x128xbf16>, vector<128x128xf32> -> vector<128x128xf32>
    %c0_45 = arith.constant 0 : index
    %c0_46 = arith.constant 0 : index
    %33 = vector.load %arg5[%c0_45, %c0_46] : memref<2x128xf32, #tpu.memory_space<vmem>>, vector<1x128xf32>
    %34 = vector.broadcast %33 : vector<1x128xf32> to vector<128x128xf32>
    %35 = arith.addf %32, %34 : vector<128x128xf32>
    %cst_47 = arith.constant 0.000000e+00 : f32
    %36 = vector.broadcast %cst_47 : f32 to vector<128x128xf32>
    %37 = arith.maximumf %35, %36 : vector<128x128xf32>
    %c0_48 = arith.constant 0 : index
    %c0_49 = arith.constant 0 : index
    %38 = vector.load %arg8[%c0_48, %c0_49] : memref<1x128xf32, #tpu.memory_space<vmem>>, vector<1x128xf32>
    %cst_50 = arith.constant dense<0.000000e+00> : vector<128xf32>
    %39 = vector.multi_reduction <add>, %37, %cst_50 [0] : vector<128x128xf32> to vector<128xf32>
    %40 = vector.shape_cast %39 : vector<128xf32> to vector<1x128xf32>
    %41 = arith.addf %38, %40 : vector<1x128xf32>
    %c0_51 = arith.constant 0 : index
    %c0_52 = arith.constant 0 : index
    %42 = vector.load %arg8[%c0_51, %c0_52] : memref<1x128xf32, #tpu.memory_space<vmem>>, vector<1x128xf32>
    tpu.vector_store %arg8[%c0_51, %c0_52], %41 {strides = array<i32>} : memref<1x128xf32, #tpu.memory_space<vmem>>, vector<1x128xf32>,
    %c128_i32 = arith.constant 128 : i32
    %43 = arith.muli %arg1, %c128_i32 : i32
    %44 = tpu.assume_multiple %43, 128 : i32
    %45 = arith.index_cast %44 : i32 to index
    %c0_53 = arith.constant 0 : index
    %46 = vector.load %arg7[%45, %c0_53] : memref<256x128xf32, #tpu.memory_space<vmem>>, vector<128x128xf32>
    tpu.vector_store %arg7[%45, %c0_53], %37 {strides = array<i32>} : memref<256x128xf32, #tpu.memory_space<vmem>>, vector<128x128xf32>,
    %c1_i32 = arith.constant 1 : i32
    %47 = arith.cmpi eq, %arg1, %c1_i32 : i32
    %48 = arith.extui %47 : i1 to i32
    %c0_i32_54 = arith.constant 0 : i32
    %49 = arith.cmpi ne, %48, %c0_i32_54 : i32
    scf.if %49 {
      %c0_55 = arith.constant 0 : index
      %c0_56 = arith.constant 0 : index
      %50 = vector.load %arg8[%c0_55, %c0_56] : memref<1x128xf32, #tpu.memory_space<vmem>>, vector<1x128xf32>
      %c0_57 = arith.constant 0 : index
      %c0_58 = arith.constant 0 : index
      %51 = vector.load %arg4[%c0_57, %c0_58] : memref<128x128xf32, #tpu.memory_space<vmem>>, vector<128x128xf32>
      %cst_59 = arith.constant dense<0.000000e+00> : vector<1x128xf32>
      %52 = tpu.matmul %50, %51, %cst_59 {dimension_numbers = #tpu.dot_dimension_numbers<[1], [0], [0], [1], [0, 0, 1, 1], [], []>} : vector<1x128xf32>, vector<128x128xf32>, vector<1x128xf32> -> vector<1x128xf32>
      %c1_60 = arith.constant 1 : index
      %c0_61 = arith.constant 0 : index
      %53 = vector.load %arg5[%c1_60, %c0_61] : memref<2x128xf32, #tpu.memory_space<vmem>>, vector<1x128xf32>
      %54 = arith.addf %52, %53 : vector<1x128xf32>
      %55 = arith.negf %54 : vector<1x128xf32>
      %56 = math.exp %55 : vector<1x128xf32>
      %cst_62 = arith.constant 1.000000e+00 : f32
      %57 = vector.broadcast %cst_62 : f32 to vector<1x128xf32>
      %58 = arith.addf %57, %56 : vector<1x128xf32>
      %59 = arith.divf %57, %58 : vector<1x128xf32>
      %c0_63 = arith.constant 0 : index
      %c0_64 = arith.constant 0 : index
      %60 = vector.load %arg7[%c0_63, %c0_64] : memref<256x128xf32, #tpu.memory_space<vmem>>, vector<256x128xf32>
      %61 = vector.broadcast %59 : vector<1x128xf32> to vector<256x128xf32>
      %62 = arith.mulf %60, %61 : vector<256x128xf32>
      %63 = tpu.transpose %62, [1, 0] : vector<256x128xf32> -> vector<128x256xf32>
      %64 = vector.extract_strided_slice %63 {offsets = [0, 0], sizes = [8, 256], strides = [1, 1]} : vector<128x256xf32> to vector<8x256xf32>
      %c0_65 = arith.constant 0 : index
      %c0_66 = arith.constant 0 : index
      %c0_67 = arith.constant 0 : index
      %65 = vector.load %arg6[%c0_65, %c0_66, %c0_67] : memref<1x8x256xf32, #tpu.memory_space<vmem>>, vector<1x8x256xf32>
      %66 = vector.shape_cast %65 : vector<1x8x256xf32> to vector<8x256xf32>
      %67 = vector.shape_cast %64 : vector<8x256xf32> to vector<1x8x256xf32>
      tpu.vector_store %arg6[%c0_65, %c0_66, %c0_67], %67 {strides = array<i32>} : memref<1x8x256xf32, #tpu.memory_space<vmem>>, vector<1x8x256xf32>,
    } else {
    }
    return
  }
  func.func @transform_0(%arg0: i32, %arg1: i32) -> (i32, i32, i32, i32, i32) {
    %c0_i32 = arith.constant 0 : i32
    %c0_i32_0 = arith.constant 0 : i32
    %c0_i32_1 = arith.constant 0 : i32
    %c0_i32_2 = arith.constant 0 : i32
    return %arg0, %arg1, %c0_i32, %c0_i32_0, %c0_i32_1 : i32, i32, i32, i32, i32
  }
  func.func @transform_1(%arg0: i32, %arg1: i32) -> (i32, i32) {
    %c0_i32 = arith.constant 0 : i32
    %c0_i32_0 = arith.constant 0 : i32
    %c0_i32_1 = arith.constant 0 : i32
    return %c0_i32, %c0_i32_0 : i32, i32
  }
  func.func @transform_2(%arg0: i32, %arg1: i32) -> (i32, i32) {
    %c0_i32 = arith.constant 0 : i32
    %c0_i32_0 = arith.constant 0 : i32
    %c0_i32_1 = arith.constant 0 : i32
    return %c0_i32, %c0_i32_0 : i32, i32
  }
  func.func @transform_3(%arg0: i32, %arg1: i32) -> (i32, i32) {
    %c0_i32 = arith.constant 0 : i32
    %c0_i32_0 = arith.constant 0 : i32
    %c0_i32_1 = arith.constant 0 : i32
    return %c0_i32, %c0_i32_0 : i32, i32
  }
  func.func @transform_4(%arg0: i32, %arg1: i32) -> (i32, i32, i32) {
    %c0_i32 = arith.constant 0 : i32
    %c0_i32_0 = arith.constant 0 : i32
    %c0_i32_1 = arith.constant 0 : i32
    return %arg0, %c0_i32, %c0_i32_0 : i32, i32, i32
  }
}

</mosaic_0001>

<llo_original>
// kernel: tpu_custom_call.1
$region0: #{tpu_custom_call.1}
  #allocation0 [shape = 'u32[]', space=smem, size = 0x4, offset = 0x4, fixed_abs, tag = 'smem constant byte address 0x4 - core index']
  #allocation1 [shape = 'u32[72,128]{1,0:T(1,128)}', space=vmem, size = 0x9000, scoped, tag = 'internal scratch']
  #allocation2 [shape = 'f32[256,128]{1,0:T(8,128)}', space=vmem, size = 0x20000, scoped, tag = 'scratch operand']
  #allocation3 [shape = 'f32[1,128]{1,0:T(1,128)}', space=vmem, size = 0x200, scoped, tag = 'scratch operand']
  %s0 = inlined_call_operand.vmem [shape: bf16[2,2,10,18,128], index: 0, kind: input, shape index: {}]
  %s1 = inlined_call_operand.vmem [shape: bf16[1152,128], index: 1, kind: input, shape index: {}]
  %s2 = inlined_call_operand.vmem [shape: f32[128,128], index: 2, kind: input, shape index: {}]
  %s3 = inlined_call_operand.vmem [shape: f32[2,128], index: 3, kind: input, shape index: {}]
  %s4 = inlined_call_operand.hbm [shape: f32[2,8,256], index: 4, kind: output, shape index: {}]
  %s5 = sld [smem:[#allocation0]]
  $region57: #{tpu_custom_call.1} parent=0
    _
  %s7 = ssub.s32 1, %s5
  %s8 = scalar_select 0, %s7, %s5
  $region1: #{tpu_custom_call.1} parent=0
    #allocation4 [shape = 'u8[16384]{0}', space=vmem, size = 0x4000, scoped, tag = 'output window, operand 0']
    #allocation5 [shape = 's32[2]{0}', space=sflag, size = 0x8, scoped, tag = 'scoped memory for tpu_custom_call.1']
    %9 = vsyncpa [#allocation5], 0
    %s10 = scalar_lea.sflag [#allocation5], 1
    %11 = vsyncpa %s10, 0
    loop: start=0, step=1, limit=6
    $region2: #{tpu_custom_call.1} parent=1 // loop_pre_header
      _
    $region3: #{tpu_custom_call.1} parent=1 // loop_header
      %s13 = sphi 0, %s17
      %p14 = scmp.ge.s32.totalorder %s13, 6
      %s20 = sphi 0, %s32
      %s21 = sphi 0, %s28
      %s22 = sphi 0, %s20
      %s23 = sphi 0, %s21
      %s24 = sphi 0, %s22
      %s25 = sphi 0, %s23
      %s37 = sphi 0, %s39
      %s40 = sphi 0, %s37
      %s41 = sphi 0, %s40
      %s57 = sphi 0, %s41
      %s61 = sphi 0, %s61
      %s63 = sphi 0, %s61
      %s64 = sphi 0, %s63
      %s78 = sphi 0, %s64
      %s82 = sphi 0, %s82
      %s84 = sphi 0, %s82
      %s85 = sphi 0, %s84
      %s99 = sphi 0, %s85
      %s103 = sphi 0, %s103
      %s105 = sphi 0, %s103
      %s106 = sphi 0, %s105
      %s120 = sphi 0, %s106
      %s126 = sphi 0, %s128
      %s129 = sphi 0, %s126
      %s130 = sphi 0, %s129
      %s146 = sphi 0, %s130
    $region4: #{tpu_custom_call.1} parent=1 // loop_header_branch
      %16 = sbr.rel (%p14) target = $region8
    $region5: #{tpu_custom_call.1} parent=1 // loop_body
      %s18 = ssub.s32 %s13, 1
      %s19 = ssub.s32 %s13, 2
      %s26 = sadd.s32 1, %s21
      %p27 = scmp.ge.s32.totalorder %s26, 2
      %s28 = scalar_select %p27, 0, %s26
      %s29 = sadd.s32 1, %s20
      %s30 = scalar_select %p27, %s29, %s20
      %p31 = scmp.ge.s32.totalorder %s30, 2
      %s32 = scalar_select %p31, 0, %s30
      %s33 = ssub.s32 %s20, %s32
      %s34 = ssub.s32 %s21, %s28
      %s35 = sor.u32 %s33, %s34
      %p36 = scmp.eq.s32.totalorder %s35, 0
      %s38 = sadd.s32 %s37, 1
      %s39 = scalar_select %p36, %s37, %s38
      %p42 = pneg %p36
      %p43 = scmp.eq.s32.totalorder %s13, 3
      %p44 = por %p42, %p43
      %p45 = scmp.ne.s32.totalorder %s37, %s40
      %p46 = scmp.eq.s32.totalorder %s13, 0
      %p47 = por %p45, %p46
      %p48 = scmp.ne.s32.totalorder %s37, %s40
      %p49 = scmp.eq.s32.totalorder %s18, 3
      %p50 = por %p48, %p49
      %p51 = scmp.ne.s32.totalorder %s40, %s41
      %p52 = scmp.eq.s32.totalorder %s18, 0
      %p53 = por %p51, %p52
      %p54 = scmp.ne.s32.totalorder %s40, %s41
      %p55 = scmp.eq.s32.totalorder %s19, 3
      %p56 = por %p54, %p55
      %p58 = scmp.ne.s32.totalorder %s41, %s57
      %p59 = scmp.eq.s32.totalorder %s19, 0
      %p60 = por %p58, %p59
      %s62 = sadd.s32 %s61, 1
      %p65 = scmp.eq.s32.totalorder %s13, 3
      %p66 = scmp.ne.s32.totalorder %s61, %s63
      %p67 = scmp.eq.s32.totalorder %s13, 0
      %p68 = por %p66, %p67
      %p69 = scmp.ne.s32.totalorder %s61, %s63
      %p70 = scmp.eq.s32.totalorder %s18, 3
      %p71 = por %p69, %p70
      %p72 = scmp.ne.s32.totalorder %s63, %s64
      %p73 = scmp.eq.s32.totalorder %s18, 0
      %p74 = por %p72, %p73
      %p75 = scmp.ne.s32.totalorder %s63, %s64
      %p76 = scmp.eq.s32.totalorder %s19, 3
      %p77 = por %p75, %p76
      %p79 = scmp.ne.s32.totalorder %s64, %s78
      %p80 = scmp.eq.s32.totalorder %s19, 0
      %p81 = por %p79, %p80
      %s83 = sadd.s32 %s82, 1
      %p86 = scmp.eq.s32.totalorder %s13, 3
      %p87 = scmp.ne.s32.totalorder %s82, %s84
      %p88 = scmp.eq.s32.totalorder %s13, 0
      %p89 = por %p87, %p88
      %p90 = scmp.ne.s32.totalorder %s82, %s84
      %p91 = scmp.eq.s32.totalorder %s18, 3
      %p92 = por %p90, %p91
      %p93 = scmp.ne.s32.totalorder %s84, %s85
      %p94 = scmp.eq.s32.totalorder %s18, 0
      %p95 = por %p93, %p94
      %p96 = scmp.ne.s32.totalorder %s84, %s85
      %p97 = scmp.eq.s32.totalorder %s19, 3
      %p98 = por %p96, %p97
      %p100 = scmp.ne.s32.totalorder %s85, %s99
      %p101 = scmp.eq.s32.totalorder %s19, 0
      %p102 = por %p100, %p101
      %s104 = sadd.s32 %s103, 1
      %p107 = scmp.eq.s32.totalorder %s13, 3
      %p108 = scmp.ne.s32.totalorder %s103, %s105
      %p109 = scmp.eq.s32.totalorder %s13, 0
      %p110 = por %p108, %p109
      %p111 = scmp.ne.s32.totalorder %s103, %s105
      %p112 = scmp.eq.s32.totalorder %s18, 3
      %p113 = por %p111, %p112
      %p114 = scmp.ne.s32.totalorder %s105, %s106
      %p115 = scmp.eq.s32.totalorder %s18, 0
      %p116 = por %p114, %p115
      %p117 = scmp.ne.s32.totalorder %s105, %s106
      %p118 = scmp.eq.s32.totalorder %s19, 3
      %p119 = por %p117, %p118
      %p121 = scmp.ne.s32.totalorder %s106, %s120
      %p122 = scmp.eq.s32.totalorder %s19, 0
      %p123 = por %p121, %p122
      %s124 = ssub.s32 %s20, %s32
      %p125 = scmp.eq.s32.totalorder %s124, 0
      %s127 = sadd.s32 %s126, 1
      %s128 = scalar_select %p125, %s126, %s127
      %p131 = pneg %p125
      %p132 = scmp.eq.s32.totalorder %s13, 3
      %p133 = por %p131, %p132
      %p134 = scmp.ne.s32.totalorder %s126, %s129
      %p135 = scmp.eq.s32.totalorder %s13, 0
      %p136 = por %p134, %p135
      %p137 = scmp.ne.s32.totalorder %s126, %s129
      %p138 = scmp.eq.s32.totalorder %s18, 3
      %p139 = por %p137, %p138
      %p140 = scmp.ne.s32.totalorder %s129, %s130
      %p141 = scmp.eq.s32.totalorder %s18, 0
      %p142 = por %p140, %p141
      %p143 = scmp.ne.s32.totalorder %s129, %s130
      %p144 = scmp.eq.s32.totalorder %s19, 3
      %p145 = por %p143, %p144
      %p147 = scmp.ne.s32.totalorder %s130, %s146
      %p148 = scmp.eq.s32.totalorder %s19, 0
      %p149 = por %p147, %p148
      %p150 = scmp.le.s32.totalorder 1, %s13
      %p151 = scmp.lt.s32.totalorder %s13, 5
      %p152 = pnand %p150, %p151
      %p153 = pneg %p152
      // Predicated region
      $region9: #{tpu_custom_call.1} parent=5 // pred_check
        _
      $region10: #{tpu_custom_call.1} parent=5 // pred_check_branch
        %155 = sbr.rel (%p152) target = $region12
      $region11: #{tpu_custom_call.1} parent=5 // pred_region
        %s156 = ssub.s32 %s13, 1
        // Predicated region
        $region13: #{tpu_custom_call.1} parent=11 // pred_check
          %p157 = pneg %p74
        $region14: #{tpu_custom_call.1} parent=11 // pred_check_branch
          %159 = sbr.rel (%p157) target = $region16
        $region15: #{tpu_custom_call.1} parent=11 // pred_region
          _
        $region16: #{tpu_custom_call.1} parent=11 // pred_fallthru
          _
        // Predicated region
        $region17: #{tpu_custom_call.1} parent=11 // pred_check
          %p160 = pneg %p95
        $region18: #{tpu_custom_call.1} parent=11 // pred_check_branch
          %162 = sbr.rel (%p160) target = $region20
        $region19: #{tpu_custom_call.1} parent=11 // pred_region
          _
        $region20: #{tpu_custom_call.1} parent=11 // pred_fallthru
          _
        // Predicated region
        $region21: #{tpu_custom_call.1} parent=11 // pred_check
          %p163 = pneg %p116
        $region22: #{tpu_custom_call.1} parent=11 // pred_check_branch
          %165 = sbr.rel (%p163) target = $region24
        $region23: #{tpu_custom_call.1} parent=11 // pred_region
          _
        $region24: #{tpu_custom_call.1} parent=11 // pred_fallthru
          _
      $region12: #{tpu_custom_call.1} parent=5 // pred_fallthru
        _
      %p166 = scmp.lt.s32.totalorder %s13, 4
      // Predicated region
      $region25: #{tpu_custom_call.1} parent=5 // pred_check
        %p167 = pneg %p166
      $region26: #{tpu_custom_call.1} parent=5 // pred_check_branch
        %169 = sbr.rel (%p167) target = $region28
      $region27: #{tpu_custom_call.1} parent=5 // pred_region
        // Predicated region
        $region29: #{tpu_custom_call.1} parent=27 // pred_check
          %p170 = pneg %p47
        $region30: #{tpu_custom_call.1} parent=27 // pred_check_branch
          %172 = sbr.rel (%p170) target = $region32
        $region31: #{tpu_custom_call.1} parent=27 // pred_region
          %p173 = scmp.lt.s32.totalorder %s20, 1
          %s174 = scalar_select %p173, %s20, 1
          %p175 = scmp.lt.s32.totalorder %s21, 1
          %s176 = scalar_select %p175, %s21, 1
          %s177 = smul.addr %s176, 30
          %s178 = smul.addr %s174, 60
          %s179 = sadd.s32 %s177, %s178
          %s180 = smul.addr %s179, 4
          %s181 = scalar_lea.vmem %s0, %s180
        $region32: #{tpu_custom_call.1} parent=27 // pred_fallthru
          _
      $region28: #{tpu_custom_call.1} parent=5 // pred_fallthru
        _
      %p182 = scmp.le.s32.totalorder 1, %s13
      %p183 = scmp.lt.s32.totalorder %s13, 5
      %p184 = pnand %p182, %p183
      %p185 = pneg %p184
      // Predicated region
      $region33: #{tpu_custom_call.1} parent=5 // pred_check
        _
      $region34: #{tpu_custom_call.1} parent=5 // pred_check_branch
        %187 = sbr.rel (%p184) target = $region36
      $region35: #{tpu_custom_call.1} parent=5 // pred_region
        %s188 = ssub.s32 %s13, 1
        %p189 = scmp.lt.s32.totalorder %s22, 1
        %s190 = scalar_select %p189, %s22, 1
        %p191 = scmp.lt.s32.totalorder %s23, 1
        %s192 = scalar_select %p191, %s23, 1
        %s193 = smul.addr %s192, 30
        %s194 = smul.addr %s190, 60
        %s195 = sadd.s32 %s193, %s194
        %s196 = smul.addr %s195, 4
        %s197 = scalar_lea.vmem %s0, %s196
        %p198 = pneg %p53
        %p199 = pneg %p50
        %p200 = pneg %p74
        %p201 = pneg %p71
        %p202 = pneg %p95
        %p203 = pneg %p92
        %p204 = pneg %p116
        %p205 = pneg %p113
        %p206 = pneg %p142
        %p207 = pneg %p139
        %s208 = sand.u32 %s129, 1
        %s209 = scalar_lea.sflag [#allocation5], %s208
        %s210 = sand.u32 %s129, 1
        %s211 = smul.addr %s210, 16
        %s212 = scalar_lea.vmem [#allocation4], %s211
        %p213 = scmp.lt.s32.totalorder %s22, 1
        %s214 = scalar_select %p213, %s22, 1
        %p215 = scmp.lt.s32.totalorder %s23, 1
        %s216 = scalar_select %p215, %s23, 1
        %s217 = smul.addr %s216, 30
        %s218 = smul.addr %s214, 60
        %s219 = sadd.s32 %s217, %s218
        %s220 = smul.addr %s219, 4
        %s221 = scalar_lea.vmem %s0, %s220
        %p222 = scmp.eq.s32.totalorder %s23, 0
        // Predicated region
        $region37: #{tpu_custom_call.1} parent=35 // pred_check
          %p223 = pneg %p222
        $region38: #{tpu_custom_call.1} parent=35 // pred_check_branch
          %225 = sbr.rel (%p223) target = $region40
        $region39: #{tpu_custom_call.1} parent=35 // pred_region
          %226 = vst [vmem:[#allocation3] sm:$0x1] 0.0
        $region40: #{tpu_custom_call.1} parent=35 // pred_fallthru
          _
        %v227 = vld [vmem:[%s221] sm:$0xf]
        %v228 = vld [vmem:[%s221 + $0x4] sm:$0xf]
        %v229 = vld [vmem:[%s221 + $0xc] sm:$0xf]
        %v230 = vld [vmem:[%s221 + $0x10] sm:$0xf]
        %v231 = vld [vmem:[%s221 + $0x18] sm:$0xf]
        %v232 = vld [vmem:[%s221 + $0x1c] sm:$0xf]
        %v233 = vld [vmem:[%s221 + $0x24] sm:$0xf]
        %v234 = vld [vmem:[%s221 + $0x28] sm:$0xf]
        %v235 = vld [vmem:[%s221 + $0x30] sm:$0xf]
        %v236 = vld [vmem:[%s221 + $0x34] sm:$0xf]
        %v237 = vld [vmem:[%s221 + $0x3c] sm:$0xf]
        %v238 = vld [vmem:[%s221 + $0x40] sm:$0xf]
        %v239 = vld [vmem:[%s221 + $0x48] sm:$0xf]
        %v240 = vld [vmem:[%s221 + $0x4c] sm:$0xf]
        %v241 = vld [vmem:[%s221 + $0x54] sm:$0xf]
        %v242 = vld [vmem:[%s221 + $0x58] sm:$0xf]
        %v243 = vld [vmem:[%s221 + $0x8] sm:$0x1]
        %v244 = vld [vmem:[%s221 + $0x14] sm:$0x1]
        %v245 = vld [vmem:[%s221 + $0x20] sm:$0x1]
        %v246 = vld [vmem:[%s221 + $0x2c] sm:$0x1]
        %v247 = vld [vmem:[%s221 + $0x38] sm:$0x1]
        %v248 = vld [vmem:[%s221 + $0x44] sm:$0x1]
        %v249 = vld [vmem:[%s221 + $0x50] sm:$0x1]
        %v250 = vld [vmem:[%s221 + $0x5c] sm:$0x1]
        %vm251 = vsmask.f32 3328
        %vm252 = vsmask.f32 7440
        %vm253 = vmor %vm251, %vm252
        %v255 = vshrl.u32 %v227, 16
        %v257 = vrot.slane %v255, 4
        %v258 = vshll.u32 %v227, 16
        %v260 = vrot.slane %v258, 5
        %v261 = vor.u32 %v257, %v260
        %v262 = vrot.slane %v261, 4
        %v264 = vshll.u32 %v228, 16
        %v266 = vrot.slane %v264, 5
        %v267 = vsel %vm253, %v262, %v266
        %v268 = vshrl.u32 %v228, 16
        %v270 = vrot.slane %v268, 4
        %v271 = vor.u32 %v270, %v266
        %v272 = vrot.slane %v271, 4
        %v274 = vshll.u32 %v243, 16
        %v276 = vrot.slane %v274, 5
        %v277 = vsel %vm253, %v272, %v276
        %v279 = vshrl.u32 %v229, 16
        %v281 = vrot.slane %v279, 4
        %v282 = vshll.u32 %v229, 16
        %v284 = vrot.slane %v282, 5
        %v285 = vor.u32 %v281, %v284
        %v286 = vrot.slane %v285, 4
        %v288 = vshll.u32 %v230, 16
        %v290 = vrot.slane %v288, 5
        %v291 = vsel %vm253, %v286, %v290
        %v292 = vshrl.u32 %v230, 16
        %v294 = vrot.slane %v292, 4
        %v295 = vor.u32 %v294, %v290
        %v296 = vrot.slane %v295, 4
        %v298 = vshll.u32 %v244, 16
        %v300 = vrot.slane %v298, 5
        %v301 = vsel %vm253, %v296, %v300
        %v303 = vshrl.u32 %v231, 16
        %v305 = vrot.slane %v303, 4
        %v306 = vshll.u32 %v231, 16
        %v308 = vrot.slane %v306, 5
        %v309 = vor.u32 %v305, %v308
        %v310 = vrot.slane %v309, 4
        %v312 = vshll.u32 %v232, 16
        %v314 = vrot.slane %v312, 5
        %v315 = vsel %vm253, %v310, %v314
        %v316 = vshrl.u32 %v232, 16
        %v318 = vrot.slane %v316, 4
        %v319 = vor.u32 %v318, %v314
        %v320 = vrot.slane %v319, 4
        %v322 = vshll.u32 %v245, 16
        %v324 = vrot.slane %v322, 5
        %v325 = vsel %vm253, %v320, %v324
        %v327 = vshrl.u32 %v233, 16
        %v329 = vrot.slane %v327, 4
        %v330 = vshll.u32 %v233, 16
        %v332 = vrot.slane %v330, 5
        %v333 = vor.u32 %v329, %v332
        %v334 = vrot.slane %v333, 4
        %v336 = vshll.u32 %v234, 16
        %v338 = vrot.slane %v336, 5
        %v339 = vsel %vm253, %v334, %v338
        %v340 = vshrl.u32 %v234, 16
        %v342 = vrot.slane %v340, 4
        %v343 = vor.u32 %v342, %v338
        %v344 = vrot.slane %v343, 4
        %v346 = vshll.u32 %v246, 16
        %v348 = vrot.slane %v346, 5
        %v349 = vsel %vm253, %v344, %v348
        %v351 = vshrl.u32 %v235, 16
        %v353 = vrot.slane %v351, 4
        %v354 = vshll.u32 %v235, 16
        %v356 = vrot.slane %v354, 5
        %v357 = vor.u32 %v353, %v356
        %v358 = vrot.slane %v357, 4
        %v360 = vshll.u32 %v236, 16
        %v362 = vrot.slane %v360, 5
        %v363 = vsel %vm253, %v358, %v362
        %v364 = vshrl.u32 %v236, 16
        %v366 = vrot.slane %v364, 4
        %v367 = vor.u32 %v366, %v362
        %v368 = vrot.slane %v367, 4
        %v370 = vshll.u32 %v247, 16
        %v372 = vrot.slane %v370, 5
        %v373 = vsel %vm253, %v368, %v372
        %v375 = vshrl.u32 %v237, 16
        %v377 = vrot.slane %v375, 4
        %v378 = vshll.u32 %v237, 16
        %v380 = vrot.slane %v378, 5
        %v381 = vor.u32 %v377, %v380
        %v382 = vrot.slane %v381, 4
        %v384 = vshll.u32 %v238, 16
        %v386 = vrot.slane %v384, 5
        %v387 = vsel %vm253, %v382, %v386
        %v388 = vshrl.u32 %v238, 16
        %v390 = vrot.slane %v388, 4
        %v391 = vor.u32 %v390, %v386
        %v392 = vrot.slane %v391, 4
        %v394 = vshll.u32 %v248, 16
        %v396 = vrot.slane %v394, 5
        %v397 = vsel %vm253, %v392, %v396
        %v399 = vshrl.u32 %v239, 16
        %v401 = vrot.slane %v399, 4
        %v402 = vshll.u32 %v239, 16
        %v404 = vrot.slane %v402, 5
        %v405 = vor.u32 %v401, %v404
        %v406 = vrot.slane %v405, 4
        %v408 = vshll.u32 %v240, 16
        %v410 = vrot.slane %v408, 5
        %v411 = vsel %vm253, %v406, %v410
        %v412 = vshrl.u32 %v240, 16
        %v414 = vrot.slane %v412, 4
        %v415 = vor.u32 %v414, %v410
        %v416 = vrot.slane %v415, 4
        %v418 = vshll.u32 %v249, 16
        %v420 = vrot.slane %v418, 5
        %v421 = vsel %vm253, %v416, %v420
        %v423 = vshrl.u32 %v241, 16
        %v425 = vrot.slane %v423, 4
        %v426 = vshll.u32 %v241, 16
        %v428 = vrot.slane %v426, 5
        %v429 = vor.u32 %v425, %v428
        %v430 = vrot.slane %v429, 4
        %v432 = vshll.u32 %v242, 16
        %v434 = vrot.slane %v432, 5
        %v435 = vsel %vm253, %v430, %v434
        %v436 = vshrl.u32 %v242, 16
        %v438 = vrot.slane %v436, 4
        %v439 = vor.u32 %v438, %v434
        %v440 = vrot.slane %v439, 4
        %v442 = vshll.u32 %v250, 16
        %v444 = vrot.slane %v442, 5
        %v445 = vsel %vm253, %v440, %v444
        %v446 = vld [vmem:[%s221] sm:$0xe]
        %v447 = vld [vmem:[%s221 + $0xc] sm:$0xe]
        %v448 = vld [vmem:[%s221 + $0x18] sm:$0xe]
        %v449 = vld [vmem:[%s221 + $0x24] sm:$0xe]
        %v450 = vld [vmem:[%s221 + $0x30] sm:$0xe]
        %v451 = vld [vmem:[%s221 + $0x3c] sm:$0xe]
        %v452 = vld [vmem:[%s221 + $0x48] sm:$0xe]
        %v453 = vld [vmem:[%s221 + $0x54] sm:$0xe]
        %vm478 = vcmask 1042432
        %vm479 = vcmask 1046532
        %vm480 = vmor %vm478, %vm479
        %v481 = vrot.slane %v446, 5
        %v482 = vrot.slane %v481, 4
        %v483 = vrot.slane %v228, 5
        %v484 = vsel %vm480, %v482, %v483
        %v485 = vrot.slane %v483, 4
        %v486 = vrot.slane %v243, 5
        %v487 = vsel %vm480, %v485, %v486
        %v488 = vrot.slane %v447, 5
        %v489 = vrot.slane %v488, 4
        %v490 = vrot.slane %v230, 5
        %v491 = vsel %vm480, %v489, %v490
        %v492 = vrot.slane %v490, 4
        %v493 = vrot.slane %v244, 5
        %v494 = vsel %vm480, %v492, %v493
        %v495 = vrot.slane %v448, 5
        %v496 = vrot.slane %v495, 4
        %v497 = vrot.slane %v232, 5
        %v498 = vsel %vm480, %v496, %v497
        %v499 = vrot.slane %v497, 4
        %v500 = vrot.slane %v245, 5
        %v501 = vsel %vm480, %v499, %v500
        %v502 = vrot.slane %v449, 5
        %v503 = vrot.slane %v502, 4
        %v504 = vrot.slane %v234, 5
        %v505 = vsel %vm480, %v503, %v504
        %v506 = vrot.slane %v504, 4
        %v507 = vrot.slane %v246, 5
        %v508 = vsel %vm480, %v506, %v507
        %v509 = vrot.slane %v450, 5
        %v510 = vrot.slane %v509, 4
        %v511 = vrot.slane %v236, 5
        %v512 = vsel %vm480, %v510, %v511
        %v513 = vrot.slane %v511, 4
        %v514 = vrot.slane %v247, 5
        %v515 = vsel %vm480, %v513, %v514
        %v516 = vrot.slane %v451, 5
        %v517 = vrot.slane %v516, 4
        %v518 = vrot.slane %v238, 5
        %v519 = vsel %vm480, %v517, %v518
        %v520 = vrot.slane %v518, 4
        %v521 = vrot.slane %v248, 5
        %v522 = vsel %vm480, %v520, %v521
        %v523 = vrot.slane %v452, 5
        %v524 = vrot.slane %v523, 4
        %v525 = vrot.slane %v240, 5
        %v526 = vsel %vm480, %v524, %v525
        %v527 = vrot.slane %v525, 4
        %v528 = vrot.slane %v249, 5
        %v529 = vsel %vm480, %v527, %v528
        %v530 = vrot.slane %v453, 5
        %v531 = vrot.slane %v530, 4
        %v532 = vrot.slane %v242, 5
        %v533 = vsel %vm480, %v531, %v532
        %v534 = vrot.slane %v532, 4
        %v535 = vrot.slane %v250, 5
        %v536 = vsel %vm480, %v534, %v535
        %s537 = scalar_lea.vmem %s221, 12
        %v538 = vld [vmem:[%s537] sm:$0xf]
        %v539 = vld [vmem:[%s537 + $0x4] sm:$0xf]
        %v540 = vld [vmem:[%s537 + $0xc] sm:$0xf]
        %v541 = vld [vmem:[%s537 + $0x10] sm:$0xf]
        %v542 = vld [vmem:[%s537 + $0x18] sm:$0xf]
        %v543 = vld [vmem:[%s537 + $0x1c] sm:$0xf]
        %v544 = vld [vmem:[%s537 + $0x24] sm:$0xf]
        %v545 = vld [vmem:[%s537 + $0x28] sm:$0xf]
        %v546 = vld [vmem:[%s537 + $0x30] sm:$0xf]
        %v547 = vld [vmem:[%s537 + $0x34] sm:$0xf]
        %v548 = vld [vmem:[%s537 + $0x3c] sm:$0xf]
        %v549 = vld [vmem:[%s537 + $0x40] sm:$0xf]
        %v550 = vld [vmem:[%s537 + $0x48] sm:$0xf]
        %v551 = vld [vmem:[%s537 + $0x4c] sm:$0xf]
        %v552 = vld [vmem:[%s537 + $0x54] sm:$0xf]
        %v553 = vld [vmem:[%s537 + $0x58] sm:$0xf]
        %v554 = vld [vmem:[%s537 + $0x8] sm:$0x1]
        %v555 = vld [vmem:[%s537 + $0x14] sm:$0x1]
        %v556 = vld [vmem:[%s537 + $0x20] sm:$0x1]
        %v557 = vld [vmem:[%s537 + $0x2c] sm:$0x1]
        %v558 = vld [vmem:[%s537 + $0x38] sm:$0x1]
        %v559 = vld [vmem:[%s537 + $0x44] sm:$0x1]
        %v560 = vld [vmem:[%s537 + $0x50] sm:$0x1]
        %v561 = vld [vmem:[%s537 + $0x5c] sm:$0x1]
        %v563 = vshrl.u32 %v538, 16
        %v565 = vrot.slane %v563, 4
        %v566 = vshll.u32 %v538, 16
        %v568 = vrot.slane %v566, 5
        %v569 = vor.u32 %v565, %v568
        %v570 = vrot.slane %v569, 4
        %v572 = vshll.u32 %v539, 16
        %v574 = vrot.slane %v572, 5
        %v575 = vsel %vm253, %v570, %v574
        %v576 = vshrl.u32 %v539, 16
        %v578 = vrot.slane %v576, 4
        %v579 = vor.u32 %v578, %v574
        %v580 = vrot.slane %v579, 4
        %v582 = vshll.u32 %v554, 16
        %v584 = vrot.slane %v582, 5
        %v585 = vsel %vm253, %v580, %v584
        %v587 = vshrl.u32 %v540, 16
        %v589 = vrot.slane %v587, 4
        %v590 = vshll.u32 %v540, 16
        %v592 = vrot.slane %v590, 5
        %v593 = vor.u32 %v589, %v592
        %v594 = vrot.slane %v593, 4
        %v596 = vshll.u32 %v541, 16
        %v598 = vrot.slane %v596, 5
        %v599 = vsel %vm253, %v594, %v598
        %v600 = vshrl.u32 %v541, 16
        %v602 = vrot.slane %v600, 4
        %v603 = vor.u32 %v602, %v598
        %v604 = vrot.slane %v603, 4
        %v606 = vshll.u32 %v555, 16
        %v608 = vrot.slane %v606, 5
        %v609 = vsel %vm253, %v604, %v608
        %v611 = vshrl.u32 %v542, 16
        %v613 = vrot.slane %v611, 4
        %v614 = vshll.u32 %v542, 16
        %v616 = vrot.slane %v614, 5
        %v617 = vor.u32 %v613, %v616
        %v618 = vrot.slane %v617, 4
        %v620 = vshll.u32 %v543, 16
        %v622 = vrot.slane %v620, 5
        %v623 = vsel %vm253, %v618, %v622
        %v624 = vshrl.u32 %v543, 16
        %v626 = vrot.slane %v624, 4
        %v627 = vor.u32 %v626, %v622
        %v628 = vrot.slane %v627, 4
        %v630 = vshll.u32 %v556, 16
        %v632 = vrot.slane %v630, 5
        %v633 = vsel %vm253, %v628, %v632
        %v635 = vshrl.u32 %v544, 16
        %v637 = vrot.slane %v635, 4
        %v638 = vshll.u32 %v544, 16
        %v640 = vrot.slane %v638, 5
        %v641 = vor.u32 %v637, %v640
        %v642 = vrot.slane %v641, 4
        %v644 = vshll.u32 %v545, 16
        %v646 = vrot.slane %v644, 5
        %v647 = vsel %vm253, %v642, %v646
        %v648 = vshrl.u32 %v545, 16
        %v650 = vrot.slane %v648, 4
        %v651 = vor.u32 %v650, %v646
        %v652 = vrot.slane %v651, 4
        %v654 = vshll.u32 %v557, 16
        %v656 = vrot.slane %v654, 5
        %v657 = vsel %vm253, %v652, %v656
        %v659 = vshrl.u32 %v546, 16
        %v661 = vrot.slane %v659, 4
        %v662 = vshll.u32 %v546, 16
        %v664 = vrot.slane %v662, 5
        %v665 = vor.u32 %v661, %v664
        %v666 = vrot.slane %v665, 4
        %v668 = vshll.u32 %v547, 16
        %v670 = vrot.slane %v668, 5
        %v671 = vsel %vm253, %v666, %v670
        %v672 = vshrl.u32 %v547, 16
        %v674 = vrot.slane %v672, 4
        %v675 = vor.u32 %v674, %v670
        %v676 = vrot.slane %v675, 4
        %v678 = vshll.u32 %v558, 16
        %v680 = vrot.slane %v678, 5
        %v681 = vsel %vm253, %v676, %v680
        %v683 = vshrl.u32 %v548, 16
        %v685 = vrot.slane %v683, 4
        %v686 = vshll.u32 %v548, 16
        %v688 = vrot.slane %v686, 5
        %v689 = vor.u32 %v685, %v688
        %v690 = vrot.slane %v689, 4
        %v692 = vshll.u32 %v549, 16
        %v694 = vrot.slane %v692, 5
        %v695 = vsel %vm253, %v690, %v694
        %v696 = vshrl.u32 %v549, 16
        %v698 = vrot.slane %v696, 4
        %v699 = vor.u32 %v698, %v694
        %v700 = vrot.slane %v699, 4
        %v702 = vshll.u32 %v559, 16
        %v704 = vrot.slane %v702, 5
        %v705 = vsel %vm253, %v700, %v704
        %v707 = vshrl.u32 %v550, 16
        %v709 = vrot.slane %v707, 4
        %v710 = vshll.u32 %v550, 16
        %v712 = vrot.slane %v710, 5
        %v713 = vor.u32 %v709, %v712
        %v714 = vrot.slane %v713, 4
        %v716 = vshll.u32 %v551, 16
        %v718 = vrot.slane %v716, 5
        %v719 = vsel %vm253, %v714, %v718
        %v720 = vshrl.u32 %v551, 16
        %v722 = vrot.slane %v720, 4
        %v723 = vor.u32 %v722, %v718
        %v724 = vrot.slane %v723, 4
        %v726 = vshll.u32 %v560, 16
        %v728 = vrot.slane %v726, 5
        %v729 = vsel %vm253, %v724, %v728
        %v731 = vshrl.u32 %v552, 16
        %v733 = vrot.slane %v731, 4
        %v734 = vshll.u32 %v552, 16
        %v736 = vrot.slane %v734, 5
        %v737 = vor.u32 %v733, %v736
        %v738 = vrot.slane %v737, 4
        %v740 = vshll.u32 %v553, 16
        %v742 = vrot.slane %v740, 5
        %v743 = vsel %vm253, %v738, %v742
        %v744 = vshrl.u32 %v553, 16
        %v746 = vrot.slane %v744, 4
        %v747 = vor.u32 %v746, %v742
        %v748 = vrot.slane %v747, 4
        %v750 = vshll.u32 %v561, 16
        %v752 = vrot.slane %v750, 5
        %v753 = vsel %vm253, %v748, %v752
        %v754 = vld [vmem:[%s537] sm:$0xe]
        %v755 = vld [vmem:[%s537 + $0xc] sm:$0xe]
        %v756 = vld [vmem:[%s537 + $0x18] sm:$0xe]
        %v757 = vld [vmem:[%s537 + $0x24] sm:$0xe]
        %v758 = vld [vmem:[%s537 + $0x30] sm:$0xe]
        %v759 = vld [vmem:[%s537 + $0x3c] sm:$0xe]
        %v760 = vld [vmem:[%s537 + $0x48] sm:$0xe]
        %v761 = vld [vmem:[%s537 + $0x54] sm:$0xe]
        %v786 = vrot.slane %v754, 5
        %v787 = vrot.slane %v786, 4
        %v788 = vrot.slane %v539, 5
        %v789 = vsel %vm480, %v787, %v788
        %v790 = vrot.slane %v788, 4
        %v791 = vrot.slane %v554, 5
        %v792 = vsel %vm480, %v790, %v791
        %v793 = vrot.slane %v755, 5
        %v794 = vrot.slane %v793, 4
        %v795 = vrot.slane %v541, 5
        %v796 = vsel %vm480, %v794, %v795
        %v797 = vrot.slane %v795, 4
        %v798 = vrot.slane %v555, 5
        %v799 = vsel %vm480, %v797, %v798
        %v800 = vrot.slane %v756, 5
        %v801 = vrot.slane %v800, 4
        %v802 = vrot.slane %v543, 5
        %v803 = vsel %vm480, %v801, %v802
        %v804 = vrot.slane %v802, 4
        %v805 = vrot.slane %v556, 5
        %v806 = vsel %vm480, %v804, %v805
        %v807 = vrot.slane %v757, 5
        %v808 = vrot.slane %v807, 4
        %v809 = vrot.slane %v545, 5
        %v810 = vsel %vm480, %v808, %v809
        %v811 = vrot.slane %v809, 4
        %v812 = vrot.slane %v557, 5
        %v813 = vsel %vm480, %v811, %v812
        %v814 = vrot.slane %v758, 5
        %v815 = vrot.slane %v814, 4
        %v816 = vrot.slane %v547, 5
        %v817 = vsel %vm480, %v815, %v816
        %v818 = vrot.slane %v816, 4
        %v819 = vrot.slane %v558, 5
        %v820 = vsel %vm480, %v818, %v819
        %v821 = vrot.slane %v759, 5
        %v822 = vrot.slane %v821, 4
        %v823 = vrot.slane %v549, 5
        %v824 = vsel %vm480, %v822, %v823
        %v825 = vrot.slane %v823, 4
        %v826 = vrot.slane %v559, 5
        %v827 = vsel %vm480, %v825, %v826
        %v828 = vrot.slane %v760, 5
        %v829 = vrot.slane %v828, 4
        %v830 = vrot.slane %v551, 5
        %v831 = vsel %vm480, %v829, %v830
        %v832 = vrot.slane %v830, 4
        %v833 = vrot.slane %v560, 5
        %v834 = vsel %vm480, %v832, %v833
        %v835 = vrot.slane %v761, 5
        %v836 = vrot.slane %v835, 4
        %v837 = vrot.slane %v553, 5
        %v838 = vsel %vm480, %v836, %v837
        %v839 = vrot.slane %v837, 4
        %v840 = vrot.slane %v561, 5
        %v841 = vsel %vm480, %v839, %v840
        %s842 = scalar_lea.vmem %s221, 24
        %v843 = vld [vmem:[%s842] sm:$0xf]
        %v844 = vld [vmem:[%s842 + $0x4] sm:$0xf]
        %v845 = vld [vmem:[%s842 + $0xc] sm:$0xf]
        %v846 = vld [vmem:[%s842 + $0x10] sm:$0xf]
        %v847 = vld [vmem:[%s842 + $0x18] sm:$0xf]
        %v848 = vld [vmem:[%s842 + $0x1c] sm:$0xf]
        %v849 = vld [vmem:[%s842 + $0x24] sm:$0xf]
        %v850 = vld [vmem:[%s842 + $0x28] sm:$0xf]
        %v851 = vld [vmem:[%s842 + $0x30] sm:$0xf]
        %v852 = vld [vmem:[%s842 + $0x34] sm:$0xf]
        %v853 = vld [vmem:[%s842 + $0x3c] sm:$0xf]
        %v854 = vld [vmem:[%s842 + $0x40] sm:$0xf]
        %v855 = vld [vmem:[%s842 + $0x48] sm:$0xf]
        %v856 = vld [vmem:[%s842 + $0x4c] sm:$0xf]
        %v857 = vld [vmem:[%s842 + $0x54] sm:$0xf]
        %v858 = vld [vmem:[%s842 + $0x58] sm:$0xf]
        %v859 = vld [vmem:[%s842 + $0x8] sm:$0x1]
        %v860 = vld [vmem:[%s842 + $0x14] sm:$0x1]
        %v861 = vld [vmem:[%s842 + $0x20] sm:$0x1]
        %v862 = vld [vmem:[%s842 + $0x2c] sm:$0x1]
        %v863 = vld [vmem:[%s842 + $0x38] sm:$0x1]
        %v864 = vld [vmem:[%s842 + $0x44] sm:$0x1]
        %v865 = vld [vmem:[%s842 + $0x50] sm:$0x1]
        %v866 = vld [vmem:[%s842 + $0x5c] sm:$0x1]
        %v868 = vshrl.u32 %v843, 16
        %v870 = vrot.slane %v868, 4
        %v871 = vshll.u32 %v843, 16
        %v873 = vrot.slane %v871, 5
        %v874 = vor.u32 %v870, %v873
        %v875 = vrot.slane %v874, 4
        %v877 = vshll.u32 %v844, 16
        %v879 = vrot.slane %v877, 5
        %v880 = vsel %vm253, %v875, %v879
        %v881 = vshrl.u32 %v844, 16
        %v883 = vrot.slane %v881, 4
        %v884 = vor.u32 %v883, %v879
        %v885 = vrot.slane %v884, 4
        %v887 = vshll.u32 %v859, 16
        %v889 = vrot.slane %v887, 5
        %v890 = vsel %vm253, %v885, %v889
        %v892 = vshrl.u32 %v845, 16
        %v894 = vrot.slane %v892, 4
        %v895 = vshll.u32 %v845, 16
        %v897 = vrot.slane %v895, 5
        %v898 = vor.u32 %v894, %v897
        %v899 = vrot.slane %v898, 4
        %v901 = vshll.u32 %v846, 16
        %v903 = vrot.slane %v901, 5
        %v904 = vsel %vm253, %v899, %v903
        %v905 = vshrl.u32 %v846, 16
        %v907 = vrot.slane %v905, 4
        %v908 = vor.u32 %v907, %v903
        %v909 = vrot.slane %v908, 4
        %v911 = vshll.u32 %v860, 16
        %v913 = vrot.slane %v911, 5
        %v914 = vsel %vm253, %v909, %v913
        %v916 = vshrl.u32 %v847, 16
        %v918 = vrot.slane %v916, 4
        %v919 = vshll.u32 %v847, 16
        %v921 = vrot.slane %v919, 5
        %v922 = vor.u32 %v918, %v921
        %v923 = vrot.slane %v922, 4
        %v925 = vshll.u32 %v848, 16
        %v927 = vrot.slane %v925, 5
        %v928 = vsel %vm253, %v923, %v927
        %v929 = vshrl.u32 %v848, 16
        %v931 = vrot.slane %v929, 4
        %v932 = vor.u32 %v931, %v927
        %v933 = vrot.slane %v932, 4
        %v935 = vshll.u32 %v861, 16
        %v937 = vrot.slane %v935, 5
        %v938 = vsel %vm253, %v933, %v937
        %v940 = vshrl.u32 %v849, 16
        %v942 = vrot.slane %v940, 4
        %v943 = vshll.u32 %v849, 16
        %v945 = vrot.slane %v943, 5
        %v946 = vor.u32 %v942, %v945
        %v947 = vrot.slane %v946, 4
        %v949 = vshll.u32 %v850, 16
        %v951 = vrot.slane %v949, 5
        %v952 = vsel %vm253, %v947, %v951
        %v953 = vshrl.u32 %v850, 16
        %v955 = vrot.slane %v953, 4
        %v956 = vor.u32 %v955, %v951
        %v957 = vrot.slane %v956, 4
        %v959 = vshll.u32 %v862, 16
        %v961 = vrot.slane %v959, 5
        %v962 = vsel %vm253, %v957, %v961
        %v964 = vshrl.u32 %v851, 16
        %v966 = vrot.slane %v964, 4
        %v967 = vshll.u32 %v851, 16
        %v969 = vrot.slane %v967, 5
        %v970 = vor.u32 %v966, %v969
        %v971 = vrot.slane %v970, 4
        %v973 = vshll.u32 %v852, 16
        %v975 = vrot.slane %v973, 5
        %v976 = vsel %vm253, %v971, %v975
        %v977 = vshrl.u32 %v852, 16
        %v979 = vrot.slane %v977, 4
        %v980 = vor.u32 %v979, %v975
        %v981 = vrot.slane %v980, 4
        %v983 = vshll.u32 %v863, 16
        %v985 = vrot.slane %v983, 5
        %v986 = vsel %vm253, %v981, %v985
        %v988 = vshrl.u32 %v853, 16
        %v990 = vrot.slane %v988, 4
        %v991 = vshll.u32 %v853, 16
        %v993 = vrot.slane %v991, 5
        %v994 = vor.u32 %v990, %v993
        %v995 = vrot.slane %v994, 4
        %v997 = vshll.u32 %v854, 16
        %v999 = vrot.slane %v997, 5
        %v1000 = vsel %vm253, %v995, %v999
        %v1001 = vshrl.u32 %v854, 16
        %v1003 = vrot.slane %v1001, 4
        %v1004 = vor.u32 %v1003, %v999
        %v1005 = vrot.slane %v1004, 4
        %v1007 = vshll.u32 %v864, 16
        %v1009 = vrot.slane %v1007, 5
        %v1010 = vsel %vm253, %v1005, %v1009
        %v1012 = vshrl.u32 %v855, 16
        %v1014 = vrot.slane %v1012, 4
        %v1015 = vshll.u32 %v855, 16
        %v1017 = vrot.slane %v1015, 5
        %v1018 = vor.u32 %v1014, %v1017
        %v1019 = vrot.slane %v1018, 4
        %v1021 = vshll.u32 %v856, 16
        %v1023 = vrot.slane %v1021, 5
        %v1024 = vsel %vm253, %v1019, %v1023
        %v1025 = vshrl.u32 %v856, 16
        %v1027 = vrot.slane %v1025, 4
        %v1028 = vor.u32 %v1027, %v1023
        %v1029 = vrot.slane %v1028, 4
        %v1031 = vshll.u32 %v865, 16
        %v1033 = vrot.slane %v1031, 5
        %v1034 = vsel %vm253, %v1029, %v1033
        %v1036 = vshrl.u32 %v857, 16
        %v1038 = vrot.slane %v1036, 4
        %v1039 = vshll.u32 %v857, 16
        %v1041 = vrot.slane %v1039, 5
        %v1042 = vor.u32 %v1038, %v1041
        %v1043 = vrot.slane %v1042, 4
        %v1045 = vshll.u32 %v858, 16
        %v1047 = vrot.slane %v1045, 5
        %v1048 = vsel %vm253, %v1043, %v1047
        %v1049 = vshrl.u32 %v858, 16
        %v1051 = vrot.slane %v1049, 4
        %v1052 = vor.u32 %v1051, %v1047
        %v1053 = vrot.slane %v1052, 4
        %v1055 = vshll.u32 %v866, 16
        %v1057 = vrot.slane %v1055, 5
        %v1058 = vsel %vm253, %v1053, %v1057
        %v1059 = vld [vmem:[%s842] sm:$0xe]
        %v1060 = vld [vmem:[%s842 + $0xc] sm:$0xe]
        %v1061 = vld [vmem:[%s842 + $0x18] sm:$0xe]
        %v1062 = vld [vmem:[%s842 + $0x24] sm:$0xe]
        %v1063 = vld [vmem:[%s842 + $0x30] sm:$0xe]
        %v1064 = vld [vmem:[%s842 + $0x3c] sm:$0xe]
        %v1065 = vld [vmem:[%s842 + $0x48] sm:$0xe]
        %v1066 = vld [vmem:[%s842 + $0x54] sm:$0xe]
        %v1091 = vrot.slane %v1059, 5
        %v1092 = vrot.slane %v1091, 4
        %v1093 = vrot.slane %v844, 5
        %v1094 = vsel %vm480, %v1092, %v1093
        %v1095 = vrot.slane %v1093, 4
        %v1096 = vrot.slane %v859, 5
        %v1097 = vsel %vm480, %v1095, %v1096
        %v1098 = vrot.slane %v1060, 5
        %v1099 = vrot.slane %v1098, 4
        %v1100 = vrot.slane %v846, 5
        %v1101 = vsel %vm480, %v1099, %v1100
        %v1102 = vrot.slane %v1100, 4
        %v1103 = vrot.slane %v860, 5
        %v1104 = vsel %vm480, %v1102, %v1103
        %v1105 = vrot.slane %v1061, 5
        %v1106 = vrot.slane %v1105, 4
        %v1107 = vrot.slane %v848, 5
        %v1108 = vsel %vm480, %v1106, %v1107
        %v1109 = vrot.slane %v1107, 4
        %v1110 = vrot.slane %v861, 5
        %v1111 = vsel %vm480, %v1109, %v1110
        %v1112 = vrot.slane %v1062, 5
        %v1113 = vrot.slane %v1112, 4
        %v1114 = vrot.slane %v850, 5
        %v1115 = vsel %vm480, %v1113, %v1114
        %v1116 = vrot.slane %v1114, 4
        %v1117 = vrot.slane %v862, 5
        %v1118 = vsel %vm480, %v1116, %v1117
        %v1119 = vrot.slane %v1063, 5
        %v1120 = vrot.slane %v1119, 4
        %v1121 = vrot.slane %v852, 5
        %v1122 = vsel %vm480, %v1120, %v1121
        %v1123 = vrot.slane %v1121, 4
        %v1124 = vrot.slane %v863, 5
        %v1125 = vsel %vm480, %v1123, %v1124
        %v1126 = vrot.slane %v1064, 5
        %v1127 = vrot.slane %v1126, 4
        %v1128 = vrot.slane %v854, 5
        %v1129 = vsel %vm480, %v1127, %v1128
        %v1130 = vrot.slane %v1128, 4
        %v1131 = vrot.slane %v864, 5
        %v1132 = vsel %vm480, %v1130, %v1131
        %v1133 = vrot.slane %v1065, 5
        %v1134 = vrot.slane %v1133, 4
        %v1135 = vrot.slane %v856, 5
        %v1136 = vsel %vm480, %v1134, %v1135
        %v1137 = vrot.slane %v1135, 4
        %v1138 = vrot.slane %v865, 5
        %v1139 = vsel %vm480, %v1137, %v1138
        %v1140 = vrot.slane %v1066, 5
        %v1141 = vrot.slane %v1140, 4
        %v1142 = vrot.slane %v858, 5
        %v1143 = vsel %vm480, %v1141, %v1142
        %v1144 = vrot.slane %v1142, 4
        %v1145 = vrot.slane %v866, 5
        %v1146 = vsel %vm480, %v1144, %v1145
        %v1155 = vunpack.c.l.b16 %v227
        %v1156 = vunpack.c.l.b16 %v228
        %v1157 = vunpack.c.l.b16 %v229
        %v1158 = vunpack.c.l.b16 %v230
        %v1159 = vunpack.c.l.b16 %v231
        %v1160 = vunpack.c.l.b16 %v232
        %v1161 = vunpack.c.l.b16 %v233
        %v1162 = vunpack.c.l.b16 %v234
        %v1163 = vunpack.c.l.b16 %v235
        %v1164 = vunpack.c.l.b16 %v236
        %v1165 = vunpack.c.l.b16 %v237
        %v1166 = vunpack.c.l.b16 %v238
        %v1167 = vunpack.c.l.b16 %v239
        %v1168 = vunpack.c.l.b16 %v240
        %v1169 = vunpack.c.l.b16 %v241
        %v1170 = vunpack.c.l.b16 %v242
        %v1171 = vpack.c.b16 %v1156, %v1155
        %v1172 = vpack.c.b16 %v1158, %v1157
        %v1173 = vpack.c.b16 %v1160, %v1159
        %v1174 = vpack.c.b16 %v1162, %v1161
        %v1175 = vpack.c.b16 %v1164, %v1163
        %v1176 = vpack.c.b16 %v1166, %v1165
        %v1177 = vpack.c.b16 %v1168, %v1167
        %v1178 = vpack.c.b16 %v1170, %v1169
        %v1187 = vunpack.c.l.b16 %v267
        %v1188 = vunpack.c.l.b16 %v277
        %v1189 = vunpack.c.l.b16 %v291
        %v1190 = vunpack.c.l.b16 %v301
        %v1191 = vunpack.c.l.b16 %v315
        %v1192 = vunpack.c.l.b16 %v325
        %v1193 = vunpack.c.l.b16 %v339
        %v1194 = vunpack.c.l.b16 %v349
        %v1195 = vunpack.c.l.b16 %v363
        %v1196 = vunpack.c.l.b16 %v373
        %v1197 = vunpack.c.l.b16 %v387
        %v1198 = vunpack.c.l.b16 %v397
        %v1199 = vunpack.c.l.b16 %v411
        %v1200 = vunpack.c.l.b16 %v421
        %v1201 = vunpack.c.l.b16 %v435
        %v1202 = vunpack.c.l.b16 %v445
        %v1203 = vpack.c.b16 %v1188, %v1187
        %v1204 = vpack.c.b16 %v1190, %v1189
        %v1205 = vpack.c.b16 %v1192, %v1191
        %v1206 = vpack.c.b16 %v1194, %v1193
        %v1207 = vpack.c.b16 %v1196, %v1195
        %v1208 = vpack.c.b16 %v1198, %v1197
        %v1209 = vpack.c.b16 %v1200, %v1199
        %v1210 = vpack.c.b16 %v1202, %v1201
        %v1219 = vunpack.c.l.b16 %v484
        %v1220 = vunpack.c.l.b16 %v487
        %v1221 = vunpack.c.l.b16 %v491
        %v1222 = vunpack.c.l.b16 %v494
        %v1223 = vunpack.c.l.b16 %v498
        %v1224 = vunpack.c.l.b16 %v501
        %v1225 = vunpack.c.l.b16 %v505
        %v1226 = vunpack.c.l.b16 %v508
        %v1227 = vunpack.c.l.b16 %v512
        %v1228 = vunpack.c.l.b16 %v515
        %v1229 = vunpack.c.l.b16 %v519
        %v1230 = vunpack.c.l.b16 %v522
        %v1231 = vunpack.c.l.b16 %v526
        %v1232 = vunpack.c.l.b16 %v529
        %v1233 = vunpack.c.l.b16 %v533
        %v1234 = vunpack.c.l.b16 %v536
        %v1235 = vpack.c.b16 %v1220, %v1219
        %v1236 = vpack.c.b16 %v1222, %v1221
        %v1237 = vpack.c.b16 %v1224, %v1223
        %v1238 = vpack.c.b16 %v1226, %v1225
        %v1239 = vpack.c.b16 %v1228, %v1227
        %v1240 = vpack.c.b16 %v1230, %v1229
        %v1241 = vpack.c.b16 %v1232, %v1231
        %v1242 = vpack.c.b16 %v1234, %v1233
        %v1259 = vunpack.c.l.b16 %v538
        %v1260 = vunpack.c.l.b16 %v539
        %v1261 = vunpack.c.l.b16 %v540
        %v1262 = vunpack.c.l.b16 %v541
        %v1263 = vunpack.c.l.b16 %v542
        %v1264 = vunpack.c.l.b16 %v543
        %v1265 = vunpack.c.l.b16 %v544
        %v1266 = vunpack.c.l.b16 %v545
        %v1267 = vunpack.c.l.b16 %v546
        %v1268 = vunpack.c.l.b16 %v547
        %v1269 = vunpack.c.l.b16 %v548
        %v1270 = vunpack.c.l.b16 %v549
        %v1271 = vunpack.c.l.b16 %v550
        %v1272 = vunpack.c.l.b16 %v551
        %v1273 = vunpack.c.l.b16 %v552
        %v1274 = vunpack.c.l.b16 %v553
        %v1275 = vpack.c.b16 %v1260, %v1259
        %v1276 = vpack.c.b16 %v1262, %v1261
        %v1277 = vpack.c.b16 %v1264, %v1263
        %v1278 = vpack.c.b16 %v1266, %v1265
        %v1279 = vpack.c.b16 %v1268, %v1267
        %v1280 = vpack.c.b16 %v1270, %v1269
        %v1281 = vpack.c.b16 %v1272, %v1271
        %v1282 = vpack.c.b16 %v1274, %v1273
        %v1291 = vunpack.c.l.b16 %v575
        %v1292 = vunpack.c.l.b16 %v585
        %v1293 = vunpack.c.l.b16 %v599
        %v1294 = vunpack.c.l.b16 %v609
        %v1295 = vunpack.c.l.b16 %v623
        %v1296 = vunpack.c.l.b16 %v633
        %v1297 = vunpack.c.l.b16 %v647
        %v1298 = vunpack.c.l.b16 %v657
        %v1299 = vunpack.c.l.b16 %v671
        %v1300 = vunpack.c.l.b16 %v681
        %v1301 = vunpack.c.l.b16 %v695
        %v1302 = vunpack.c.l.b16 %v705
        %v1303 = vunpack.c.l.b16 %v719
        %v1304 = vunpack.c.l.b16 %v729
        %v1305 = vunpack.c.l.b16 %v743
        %v1306 = vunpack.c.l.b16 %v753
        %v1307 = vpack.c.b16 %v1292, %v1291
        %v1308 = vpack.c.b16 %v1294, %v1293
        %v1309 = vpack.c.b16 %v1296, %v1295
        %v1310 = vpack.c.b16 %v1298, %v1297
        %v1311 = vpack.c.b16 %v1300, %v1299
        %v1312 = vpack.c.b16 %v1302, %v1301
        %v1313 = vpack.c.b16 %v1304, %v1303
        %v1314 = vpack.c.b16 %v1306, %v1305
        %v1323 = vunpack.c.l.b16 %v789
        %v1324 = vunpack.c.l.b16 %v792
        %v1325 = vunpack.c.l.b16 %v796
        %v1326 = vunpack.c.l.b16 %v799
        %v1327 = vunpack.c.l.b16 %v803
        %v1328 = vunpack.c.l.b16 %v806
        %v1329 = vunpack.c.l.b16 %v810
        %v1330 = vunpack.c.l.b16 %v813
        %v1331 = vunpack.c.l.b16 %v817
        %v1332 = vunpack.c.l.b16 %v820
        %v1333 = vunpack.c.l.b16 %v824
        %v1334 = vunpack.c.l.b16 %v827
        %v1335 = vunpack.c.l.b16 %v831
        %v1336 = vunpack.c.l.b16 %v834
        %v1337 = vunpack.c.l.b16 %v838
        %v1338 = vunpack.c.l.b16 %v841
        %v1339 = vpack.c.b16 %v1324, %v1323
        %v1340 = vpack.c.b16 %v1326, %v1325
        %v1341 = vpack.c.b16 %v1328, %v1327
        %v1342 = vpack.c.b16 %v1330, %v1329
        %v1343 = vpack.c.b16 %v1332, %v1331
        %v1344 = vpack.c.b16 %v1334, %v1333
        %v1345 = vpack.c.b16 %v1336, %v1335
        %v1346 = vpack.c.b16 %v1338, %v1337
        %v1363 = vunpack.c.l.b16 %v843
        %v1364 = vunpack.c.l.b16 %v844
        %v1365 = vunpack.c.l.b16 %v845
        %v1366 = vunpack.c.l.b16 %v846
        %v1367 = vunpack.c.l.b16 %v847
        %v1368 = vunpack.c.l.b16 %v848
        %v1369 = vunpack.c.l.b16 %v849
        %v1370 = vunpack.c.l.b16 %v850
        %v1371 = vunpack.c.l.b16 %v851
        %v1372 = vunpack.c.l.b16 %v852
        %v1373 = vunpack.c.l.b16 %v853
        %v1374 = vunpack.c.l.b16 %v854
        %v1375 = vunpack.c.l.b16 %v855
        %v1376 = vunpack.c.l.b16 %v856
        %v1377 = vunpack.c.l.b16 %v857
        %v1378 = vunpack.c.l.b16 %v858
        %v1379 = vpack.c.b16 %v1364, %v1363
        %v1380 = vpack.c.b16 %v1366, %v1365
        %v1381 = vpack.c.b16 %v1368, %v1367
        %v1382 = vpack.c.b16 %v1370, %v1369
        %v1383 = vpack.c.b16 %v1372, %v1371
        %v1384 = vpack.c.b16 %v1374, %v1373
        %v1385 = vpack.c.b16 %v1376, %v1375
        %v1386 = vpack.c.b16 %v1378, %v1377
        %v1395 = vunpack.c.l.b16 %v880
        %v1396 = vunpack.c.l.b16 %v890
        %v1397 = vunpack.c.l.b16 %v904
        %v1398 = vunpack.c.l.b16 %v914
        %v1399 = vunpack.c.l.b16 %v928
        %v1400 = vunpack.c.l.b16 %v938
        %v1401 = vunpack.c.l.b16 %v952
        %v1402 = vunpack.c.l.b16 %v962
        %v1403 = vunpack.c.l.b16 %v976
        %v1404 = vunpack.c.l.b16 %v986
        %v1405 = vunpack.c.l.b16 %v1000
        %v1406 = vunpack.c.l.b16 %v1010
        %v1407 = vunpack.c.l.b16 %v1024
        %v1408 = vunpack.c.l.b16 %v1034
        %v1409 = vunpack.c.l.b16 %v1048
        %v1410 = vunpack.c.l.b16 %v1058
        %v1411 = vpack.c.b16 %v1396, %v1395
        %v1412 = vpack.c.b16 %v1398, %v1397
        %v1413 = vpack.c.b16 %v1400, %v1399
        %v1414 = vpack.c.b16 %v1402, %v1401
        %v1415 = vpack.c.b16 %v1404, %v1403
        %v1416 = vpack.c.b16 %v1406, %v1405
        %v1417 = vpack.c.b16 %v1408, %v1407
        %v1418 = vpack.c.b16 %v1410, %v1409
        %v1427 = vunpack.c.l.b16 %v1094
        %v1428 = vunpack.c.l.b16 %v1097
        %v1429 = vunpack.c.l.b16 %v1101
        %v1430 = vunpack.c.l.b16 %v1104
        %v1431 = vunpack.c.l.b16 %v1108
        %v1432 = vunpack.c.l.b16 %v1111
        %v1433 = vunpack.c.l.b16 %v1115
        %v1434 = vunpack.c.l.b16 %v1118
        %v1435 = vunpack.c.l.b16 %v1122
        %v1436 = vunpack.c.l.b16 %v1125
        %v1437 = vunpack.c.l.b16 %v1129
        %v1438 = vunpack.c.l.b16 %v1132
        %v1439 = vunpack.c.l.b16 %v1136
        %v1440 = vunpack.c.l.b16 %v1139
        %v1441 = vunpack.c.l.b16 %v1143
        %v1442 = vunpack.c.l.b16 %v1146
        %v1443 = vpack.c.b16 %v1428, %v1427
        %v1444 = vpack.c.b16 %v1430, %v1429
        %v1445 = vpack.c.b16 %v1432, %v1431
        %v1446 = vpack.c.b16 %v1434, %v1433
        %v1447 = vpack.c.b16 %v1436, %v1435
        %v1448 = vpack.c.b16 %v1438, %v1437
        %v1449 = vpack.c.b16 %v1440, %v1439
        %v1450 = vpack.c.b16 %v1442, %v1441
        %v1459 = vld [vmem:[%s1] sm:$0xf]
        %v1460 = vld [vmem:[%s1 + $0x4] sm:$0xf]
        %v1461 = vld [vmem:[%s1 + $0x8] sm:$0xf]
        %v1462 = vld [vmem:[%s1 + $0xc] sm:$0xf]
        %v1463 = vld [vmem:[%s1 + $0x10] sm:$0xf]
        %v1464 = vld [vmem:[%s1 + $0x14] sm:$0xf]
        %v1465 = vld [vmem:[%s1 + $0x18] sm:$0xf]
        %v1466 = vld [vmem:[%s1 + $0x1c] sm:$0xf]
        %v1467 = vld [vmem:[%s1 + $0x20] sm:$0xf]
        %v1468 = vld [vmem:[%s1 + $0x24] sm:$0xf]
        %v1469 = vld [vmem:[%s1 + $0x28] sm:$0xf]
        %v1470 = vld [vmem:[%s1 + $0x2c] sm:$0xf]
        %v1471 = vld [vmem:[%s1 + $0x30] sm:$0xf]
        %v1472 = vld [vmem:[%s1 + $0x34] sm:$0xf]
        %v1473 = vld [vmem:[%s1 + $0x38] sm:$0xf]
        %v1474 = vld [vmem:[%s1 + $0x3c] sm:$0xf]
        %v1475 = vld [vmem:[%s1 + $0x40] sm:$0xf]
        %v1476 = vld [vmem:[%s1 + $0x44] sm:$0xf]
        %v1477 = vld [vmem:[%s1 + $0x48] sm:$0xf]
        %v1478 = vld [vmem:[%s1 + $0x4c] sm:$0xf]
        %v1479 = vld [vmem:[%s1 + $0x50] sm:$0xf]
        %v1480 = vld [vmem:[%s1 + $0x54] sm:$0xf]
        %v1481 = vld [vmem:[%s1 + $0x58] sm:$0xf]
        %v1482 = vld [vmem:[%s1 + $0x5c] sm:$0xf]
        %v1483 = vld [vmem:[%s1 + $0x60] sm:$0xf]
        %v1484 = vld [vmem:[%s1 + $0x64] sm:$0xf]
        %v1485 = vld [vmem:[%s1 + $0x68] sm:$0xf]
        %v1486 = vld [vmem:[%s1 + $0x6c] sm:$0xf]
        %v1487 = vld [vmem:[%s1 + $0x70] sm:$0xf]
        %v1488 = vld [vmem:[%s1 + $0x74] sm:$0xf]
        %v1489 = vld [vmem:[%s1 + $0x78] sm:$0xf]
        %v1490 = vld [vmem:[%s1 + $0x7c] sm:$0xf]
        %v1491 = vld [vmem:[%s1 + $0x80] sm:$0xf]
        %v1492 = vld [vmem:[%s1 + $0x84] sm:$0xf]
        %v1493 = vld [vmem:[%s1 + $0x88] sm:$0xf]
        %v1494 = vld [vmem:[%s1 + $0x8c] sm:$0xf]
        %v1495 = vld [vmem:[%s1 + $0x90] sm:$0xf]
        %v1496 = vld [vmem:[%s1 + $0x94] sm:$0xf]
        %v1497 = vld [vmem:[%s1 + $0x98] sm:$0xf]
        %v1498 = vld [vmem:[%s1 + $0x9c] sm:$0xf]
        %v1499 = vld [vmem:[%s1 + $0xa0] sm:$0xf]
        %v1500 = vld [vmem:[%s1 + $0xa4] sm:$0xf]
        %v1501 = vld [vmem:[%s1 + $0xa8] sm:$0xf]
        %v1502 = vld [vmem:[%s1 + $0xac] sm:$0xf]
        %v1503 = vld [vmem:[%s1 + $0xb0] sm:$0xf]
        %v1504 = vld [vmem:[%s1 + $0xb4] sm:$0xf]
        %v1505 = vld [vmem:[%s1 + $0xb8] sm:$0xf]
        %v1506 = vld [vmem:[%s1 + $0xbc] sm:$0xf]
        %v1507 = vld [vmem:[%s1 + $0xc0] sm:$0xf]
        %v1508 = vld [vmem:[%s1 + $0xc4] sm:$0xf]
        %v1509 = vld [vmem:[%s1 + $0xc8] sm:$0xf]
        %v1510 = vld [vmem:[%s1 + $0xcc] sm:$0xf]
        %v1511 = vld [vmem:[%s1 + $0xd0] sm:$0xf]
        %v1512 = vld [vmem:[%s1 + $0xd4] sm:$0xf]
        %v1513 = vld [vmem:[%s1 + $0xd8] sm:$0xf]
        %v1514 = vld [vmem:[%s1 + $0xdc] sm:$0xf]
        %v1515 = vld [vmem:[%s1 + $0xe0] sm:$0xf]
        %v1516 = vld [vmem:[%s1 + $0xe4] sm:$0xf]
        %v1517 = vld [vmem:[%s1 + $0xe8] sm:$0xf]
        %v1518 = vld [vmem:[%s1 + $0xec] sm:$0xf]
        %v1519 = vld [vmem:[%s1 + $0xf0] sm:$0xf]
        %v1520 = vld [vmem:[%s1 + $0xf4] sm:$0xf]
        %v1521 = vld [vmem:[%s1 + $0xf8] sm:$0xf]
        %v1522 = vld [vmem:[%s1 + $0xfc] sm:$0xf]
        %v1523 = vld [vmem:[%s1 + $0x100] sm:$0xf]
        %v1524 = vld [vmem:[%s1 + $0x104] sm:$0xf]
        %v1525 = vld [vmem:[%s1 + $0x108] sm:$0xf]
        %v1526 = vld [vmem:[%s1 + $0x10c] sm:$0xf]
        %v1527 = vld [vmem:[%s1 + $0x110] sm:$0xf]
        %v1528 = vld [vmem:[%s1 + $0x114] sm:$0xf]
        %v1529 = vld [vmem:[%s1 + $0x118] sm:$0xf]
        %v1530 = vld [vmem:[%s1 + $0x11c] sm:$0xf]
        %v1531 = vld [vmem:[%s1 + $0x120] sm:$0xf]
        %v1532 = vld [vmem:[%s1 + $0x124] sm:$0xf]
        %v1533 = vld [vmem:[%s1 + $0x128] sm:$0xf]
        %v1534 = vld [vmem:[%s1 + $0x12c] sm:$0xf]
        %v1535 = vld [vmem:[%s1 + $0x130] sm:$0xf]
        %v1536 = vld [vmem:[%s1 + $0x134] sm:$0xf]
        %v1537 = vld [vmem:[%s1 + $0x138] sm:$0xf]
        %v1538 = vld [vmem:[%s1 + $0x13c] sm:$0xf]
        %v1539 = vld [vmem:[%s1 + $0x140] sm:$0xf]
        %v1540 = vld [vmem:[%s1 + $0x144] sm:$0xf]
        %v1541 = vld [vmem:[%s1 + $0x148] sm:$0xf]
        %v1542 = vld [vmem:[%s1 + $0x14c] sm:$0xf]
        %v1543 = vld [vmem:[%s1 + $0x150] sm:$0xf]
        %v1544 = vld [vmem:[%s1 + $0x154] sm:$0xf]
        %v1545 = vld [vmem:[%s1 + $0x158] sm:$0xf]
        %v1546 = vld [vmem:[%s1 + $0x15c] sm:$0xf]
        %v1547 = vld [vmem:[%s1 + $0x160] sm:$0xf]
        %v1548 = vld [vmem:[%s1 + $0x164] sm:$0xf]
        %v1549 = vld [vmem:[%s1 + $0x168] sm:$0xf]
        %v1550 = vld [vmem:[%s1 + $0x16c] sm:$0xf]
        %v1551 = vld [vmem:[%s1 + $0x170] sm:$0xf]
        %v1552 = vld [vmem:[%s1 + $0x174] sm:$0xf]
        %v1553 = vld [vmem:[%s1 + $0x178] sm:$0xf]
        %v1554 = vld [vmem:[%s1 + $0x17c] sm:$0xf]
        %v1555 = vld [vmem:[%s1 + $0x180] sm:$0xf]
        %v1556 = vld [vmem:[%s1 + $0x184] sm:$0xf]
        %v1557 = vld [vmem:[%s1 + $0x188] sm:$0xf]
        %v1558 = vld [vmem:[%s1 + $0x18c] sm:$0xf]
        %v1559 = vld [vmem:[%s1 + $0x190] sm:$0xf]
        %v1560 = vld [vmem:[%s1 + $0x194] sm:$0xf]
        %v1561 = vld [vmem:[%s1 + $0x198] sm:$0xf]
        %v1562 = vld [vmem:[%s1 + $0x19c] sm:$0xf]
        %v1563 = vld [vmem:[%s1 + $0x1a0] sm:$0xf]
        %v1564 = vld [vmem:[%s1 + $0x1a4] sm:$0xf]
        %v1565 = vld [vmem:[%s1 + $0x1a8] sm:$0xf]
        %v1566 = vld [vmem:[%s1 + $0x1ac] sm:$0xf]
        %v1567 = vld [vmem:[%s1 + $0x1b0] sm:$0xf]
        %v1568 = vld [vmem:[%s1 + $0x1b4] sm:$0xf]
        %v1569 = vld [vmem:[%s1 + $0x1b8] sm:$0xf]
        %v1570 = vld [vmem:[%s1 + $0x1bc] sm:$0xf]
        %v1571 = vld [vmem:[%s1 + $0x1c0] sm:$0xf]
        %v1572 = vld [vmem:[%s1 + $0x1c4] sm:$0xf]
        %v1573 = vld [vmem:[%s1 + $0x1c8] sm:$0xf]
        %v1574 = vld [vmem:[%s1 + $0x1cc] sm:$0xf]
        %v1575 = vld [vmem:[%s1 + $0x1d0] sm:$0xf]
        %v1576 = vld [vmem:[%s1 + $0x1d4] sm:$0xf]
        %v1577 = vld [vmem:[%s1 + $0x1d8] sm:$0xf]
        %v1578 = vld [vmem:[%s1 + $0x1dc] sm:$0xf]
        %v1579 = vld [vmem:[%s1 + $0x1e0] sm:$0xf]
        %v1580 = vld [vmem:[%s1 + $0x1e4] sm:$0xf]
        %v1581 = vld [vmem:[%s1 + $0x1e8] sm:$0xf]
        %v1582 = vld [vmem:[%s1 + $0x1ec] sm:$0xf]
        %v1583 = vld [vmem:[%s1 + $0x1f0] sm:$0xf]
        %v1584 = vld [vmem:[%s1 + $0x1f4] sm:$0xf]
        %v1585 = vld [vmem:[%s1 + $0x1f8] sm:$0xf]
        %v1586 = vld [vmem:[%s1 + $0x1fc] sm:$0xf]
        %v1587 = vld [vmem:[%s1 + $0x200] sm:$0xf]
        %v1588 = vld [vmem:[%s1 + $0x204] sm:$0xf]
        %v1589 = vld [vmem:[%s1 + $0x208] sm:$0xf]
        %v1590 = vld [vmem:[%s1 + $0x20c] sm:$0xf]
        %v1591 = vld [vmem:[%s1 + $0x210] sm:$0xf]
        %v1592 = vld [vmem:[%s1 + $0x214] sm:$0xf]
        %v1593 = vld [vmem:[%s1 + $0x218] sm:$0xf]
        %v1594 = vld [vmem:[%s1 + $0x21c] sm:$0xf]
        %v1595 = vld [vmem:[%s1 + $0x220] sm:$0xf]
        %v1596 = vld [vmem:[%s1 + $0x224] sm:$0xf]
        %v1597 = vld [vmem:[%s1 + $0x228] sm:$0xf]
        %v1598 = vld [vmem:[%s1 + $0x22c] sm:$0xf]
        %v1599 = vld [vmem:[%s1 + $0x230] sm:$0xf]
        %v1600 = vld [vmem:[%s1 + $0x234] sm:$0xf]
        %v1601 = vld [vmem:[%s1 + $0x238] sm:$0xf]
        %v1602 = vld [vmem:[%s1 + $0x23c] sm:$0xf]
        %v1603 = vld [vmem:[%s3] sm:$0x1]
        %v1604 = vperm.slane %v1603, 0
        %v1749 = vunpack.c.l.b16 %v1459
        %v1750 = vunpack.c.l.b16 %v1460
        %v1751 = vunpack.c.l.b16 %v1461
        %v1752 = vunpack.c.l.b16 %v1462
        %v1753 = vunpack.c.l.b16 %v1463
        %v1754 = vunpack.c.l.b16 %v1464
        %v1755 = vunpack.c.l.b16 %v1465
        %v1756 = vunpack.c.l.b16 %v1466
        %v1757 = vunpack.c.l.b16 %v1467
        %v1758 = vunpack.c.l.b16 %v1468
        %v1759 = vunpack.c.l.b16 %v1469
        %v1760 = vunpack.c.l.b16 %v1470
        %v1761 = vunpack.c.l.b16 %v1471
        %v1762 = vunpack.c.l.b16 %v1472
        %v1763 = vunpack.c.l.b16 %v1473
        %v1764 = vunpack.c.l.b16 %v1474
        %v1765 = vunpack.c.l.b16 %v1475
        %v1766 = vunpack.c.l.b16 %v1476
        %v1767 = vunpack.c.l.b16 %v1477
        %v1768 = vunpack.c.l.b16 %v1478
        %v1769 = vunpack.c.l.b16 %v1479
        %v1770 = vunpack.c.l.b16 %v1480
        %v1771 = vunpack.c.l.b16 %v1481
        %v1772 = vunpack.c.l.b16 %v1482
        %v1773 = vunpack.c.l.b16 %v1483
        %v1774 = vunpack.c.l.b16 %v1484
        %v1775 = vunpack.c.l.b16 %v1485
        %v1776 = vunpack.c.l.b16 %v1486
        %v1777 = vunpack.c.l.b16 %v1487
        %v1778 = vunpack.c.l.b16 %v1488
        %v1779 = vunpack.c.l.b16 %v1489
        %v1780 = vunpack.c.l.b16 %v1490
        %v1781 = vunpack.c.l.b16 %v1491
        %v1782 = vunpack.c.l.b16 %v1492
        %v1783 = vunpack.c.l.b16 %v1493
        %v1784 = vunpack.c.l.b16 %v1494
        %v1785 = vunpack.c.l.b16 %v1495
        %v1786 = vunpack.c.l.b16 %v1496
        %v1787 = vunpack.c.l.b16 %v1497
        %v1788 = vunpack.c.l.b16 %v1498
        %v1789 = vunpack.c.l.b16 %v1499
        %v1790 = vunpack.c.l.b16 %v1500
        %v1791 = vunpack.c.l.b16 %v1501
        %v1792 = vunpack.c.l.b16 %v1502
        %v1793 = vunpack.c.l.b16 %v1503
        %v1794 = vunpack.c.l.b16 %v1504
        %v1795 = vunpack.c.l.b16 %v1505
        %v1796 = vunpack.c.l.b16 %v1506
        %v1797 = vunpack.c.l.b16 %v1507
        %v1798 = vunpack.c.l.b16 %v1508
        %v1799 = vunpack.c.l.b16 %v1509
        %v1800 = vunpack.c.l.b16 %v1510
        %v1801 = vunpack.c.l.b16 %v1511
        %v1802 = vunpack.c.l.b16 %v1512
        %v1803 = vunpack.c.l.b16 %v1513
        %v1804 = vunpack.c.l.b16 %v1514
        %v1805 = vunpack.c.l.b16 %v1515
        %v1806 = vunpack.c.l.b16 %v1516
        %v1807 = vunpack.c.l.b16 %v1517
        %v1808 = vunpack.c.l.b16 %v1518
        %v1809 = vunpack.c.l.b16 %v1519
        %v1810 = vunpack.c.l.b16 %v1520
        %v1811 = vunpack.c.l.b16 %v1521
        %v1812 = vunpack.c.l.b16 %v1522
        %v1813 = vunpack.c.l.b16 %v1523
        %v1814 = vunpack.c.l.b16 %v1524
        %v1815 = vunpack.c.l.b16 %v1525
        %v1816 = vunpack.c.l.b16 %v1526
        %v1817 = vunpack.c.l.b16 %v1527
        %v1818 = vunpack.c.l.b16 %v1528
        %v1819 = vunpack.c.l.b16 %v1529
        %v1820 = vunpack.c.l.b16 %v1530
        %v1821 = vunpack.c.l.b16 %v1531
        %v1822 = vunpack.c.l.b16 %v1532
        %v1823 = vunpack.c.l.b16 %v1533
        %v1824 = vunpack.c.l.b16 %v1534
        %v1825 = vunpack.c.l.b16 %v1535
        %v1826 = vunpack.c.l.b16 %v1536
        %v1827 = vunpack.c.l.b16 %v1537
        %v1828 = vunpack.c.l.b16 %v1538
        %v1829 = vunpack.c.l.b16 %v1539
        %v1830 = vunpack.c.l.b16 %v1540
        %v1831 = vunpack.c.l.b16 %v1541
        %v1832 = vunpack.c.l.b16 %v1542
        %v1833 = vunpack.c.l.b16 %v1543
        %v1834 = vunpack.c.l.b16 %v1544
        %v1835 = vunpack.c.l.b16 %v1545
        %v1836 = vunpack.c.l.b16 %v1546
        %v1837 = vunpack.c.l.b16 %v1547
        %v1838 = vunpack.c.l.b16 %v1548
        %v1839 = vunpack.c.l.b16 %v1549
        %v1840 = vunpack.c.l.b16 %v1550
        %v1841 = vunpack.c.l.b16 %v1551
        %v1842 = vunpack.c.l.b16 %v1552
        %v1843 = vunpack.c.l.b16 %v1553
        %v1844 = vunpack.c.l.b16 %v1554
        %v1845 = vunpack.c.l.b16 %v1555
        %v1846 = vunpack.c.l.b16 %v1556
        %v1847 = vunpack.c.l.b16 %v1557
        %v1848 = vunpack.c.l.b16 %v1558
        %v1849 = vunpack.c.l.b16 %v1559
        %v1850 = vunpack.c.l.b16 %v1560
        %v1851 = vunpack.c.l.b16 %v1561
        %v1852 = vunpack.c.l.b16 %v1562
        %v1853 = vunpack.c.l.b16 %v1563
        %v1854 = vunpack.c.l.b16 %v1564
        %v1855 = vunpack.c.l.b16 %v1565
        %v1856 = vunpack.c.l.b16 %v1566
        %v1857 = vunpack.c.l.b16 %v1567
        %v1858 = vunpack.c.l.b16 %v1568
        %v1859 = vunpack.c.l.b16 %v1569
        %v1860 = vunpack.c.l.b16 %v1570
        %v1861 = vunpack.c.l.b16 %v1571
        %v1862 = vunpack.c.l.b16 %v1572
        %v1863 = vunpack.c.l.b16 %v1573
        %v1864 = vunpack.c.l.b16 %v1574
        %v1865 = vunpack.c.l.b16 %v1575
        %v1866 = vunpack.c.l.b16 %v1576
        %v1867 = vunpack.c.l.b16 %v1577
        %v1868 = vunpack.c.l.b16 %v1578
        %v1869 = vunpack.c.l.b16 %v1579
        %v1870 = vunpack.c.l.b16 %v1580
        %v1871 = vunpack.c.l.b16 %v1581
        %v1872 = vunpack.c.l.b16 %v1582
        %v1873 = vunpack.c.l.b16 %v1583
        %v1874 = vunpack.c.l.b16 %v1584
        %v1875 = vunpack.c.l.b16 %v1585
        %v1876 = vunpack.c.l.b16 %v1586
        %v1877 = vunpack.c.l.b16 %v1587
        %v1878 = vunpack.c.l.b16 %v1588
        %v1879 = vunpack.c.l.b16 %v1589
        %v1880 = vunpack.c.l.b16 %v1590
        %v1881 = vunpack.c.l.b16 %v1591
        %v1882 = vunpack.c.l.b16 %v1592
        %v1883 = vunpack.c.l.b16 %v1593
        %v1884 = vunpack.c.l.b16 %v1594
        %v1885 = vunpack.c.l.b16 %v1595
        %v1886 = vunpack.c.l.b16 %v1596
        %v1887 = vunpack.c.l.b16 %v1597
        %v1888 = vunpack.c.l.b16 %v1598
        %v1889 = vunpack.c.l.b16 %v1599
        %v1890 = vunpack.c.l.b16 %v1600
        %v1891 = vunpack.c.l.b16 %v1601
        %v1892 = vunpack.c.l.b16 %v1602
        %v1893 = vpack.c.b16 %v1750, %v1749
        %v1894 = vpack.c.b16 %v1752, %v1751
        %v1895 = vpack.c.b16 %v1754, %v1753
        %v1896 = vpack.c.b16 %v1756, %v1755
        %v1897 = vpack.c.b16 %v1758, %v1757
        %v1898 = vpack.c.b16 %v1760, %v1759
        %v1899 = vpack.c.b16 %v1762, %v1761
        %v1900 = vpack.c.b16 %v1764, %v1763
        %v1901 = vpack.c.b16 %v1766, %v1765
        %v1902 = vpack.c.b16 %v1768, %v1767
        %v1903 = vpack.c.b16 %v1770, %v1769
        %v1904 = vpack.c.b16 %v1772, %v1771
        %v1905 = vpack.c.b16 %v1774, %v1773
        %v1906 = vpack.c.b16 %v1776, %v1775
        %v1907 = vpack.c.b16 %v1778, %v1777
        %v1908 = vpack.c.b16 %v1780, %v1779
        %v1909 = vpack.c.b16 %v1782, %v1781
        %v1910 = vpack.c.b16 %v1784, %v1783
        %v1911 = vpack.c.b16 %v1786, %v1785
        %v1912 = vpack.c.b16 %v1788, %v1787
        %v1913 = vpack.c.b16 %v1790, %v1789
        %v1914 = vpack.c.b16 %v1792, %v1791
        %v1915 = vpack.c.b16 %v1794, %v1793
        %v1916 = vpack.c.b16 %v1796, %v1795
        %v1917 = vpack.c.b16 %v1798, %v1797
        %v1918 = vpack.c.b16 %v1800, %v1799
        %v1919 = vpack.c.b16 %v1802, %v1801
        %v1920 = vpack.c.b16 %v1804, %v1803
        %v1921 = vpack.c.b16 %v1806, %v1805
        %v1922 = vpack.c.b16 %v1808, %v1807
        %v1923 = vpack.c.b16 %v1810, %v1809
        %v1924 = vpack.c.b16 %v1812, %v1811
        %v1925 = vpack.c.b16 %v1814, %v1813
        %v1926 = vpack.c.b16 %v1816, %v1815
        %v1927 = vpack.c.b16 %v1818, %v1817
        %v1928 = vpack.c.b16 %v1820, %v1819
        %v1929 = vpack.c.b16 %v1822, %v1821
        %v1930 = vpack.c.b16 %v1824, %v1823
        %v1931 = vpack.c.b16 %v1826, %v1825
        %v1932 = vpack.c.b16 %v1828, %v1827
        %v1933 = vpack.c.b16 %v1830, %v1829
        %v1934 = vpack.c.b16 %v1832, %v1831
        %v1935 = vpack.c.b16 %v1834, %v1833
        %v1936 = vpack.c.b16 %v1836, %v1835
        %v1937 = vpack.c.b16 %v1838, %v1837
        %v1938 = vpack.c.b16 %v1840, %v1839
        %v1939 = vpack.c.b16 %v1842, %v1841
        %v1940 = vpack.c.b16 %v1844, %v1843
        %v1941 = vpack.c.b16 %v1846, %v1845
        %v1942 = vpack.c.b16 %v1848, %v1847
        %v1943 = vpack.c.b16 %v1850, %v1849
        %v1944 = vpack.c.b16 %v1852, %v1851
        %v1945 = vpack.c.b16 %v1854, %v1853
        %v1946 = vpack.c.b16 %v1856, %v1855
        %v1947 = vpack.c.b16 %v1858, %v1857
        %v1948 = vpack.c.b16 %v1860, %v1859
        %v1949 = vpack.c.b16 %v1862, %v1861
        %v1950 = vpack.c.b16 %v1864, %v1863
        %v1951 = vpack.c.b16 %v1866, %v1865
        %v1952 = vpack.c.b16 %v1868, %v1867
        %v1953 = vpack.c.b16 %v1870, %v1869
        %v1954 = vpack.c.b16 %v1872, %v1871
        %v1955 = vpack.c.b16 %v1874, %v1873
        %v1956 = vpack.c.b16 %v1876, %v1875
        %v1957 = vpack.c.b16 %v1878, %v1877
        %v1958 = vpack.c.b16 %v1880, %v1879
        %v1959 = vpack.c.b16 %v1882, %v1881
        %v1960 = vpack.c.b16 %v1884, %v1883
        %v1961 = vpack.c.b16 %v1886, %v1885
        %v1962 = vpack.c.b16 %v1888, %v1887
        %v1963 = vpack.c.b16 %v1890, %v1889
        %v1964 = vpack.c.b16 %v1892, %v1891
        %2037 = vmatpush.bf16.msra.mxu0 %v1900
        %2038 = vmatpush.bf16.msra.mxu0 %v1899
        %2039 = vmatpush.bf16.msra.mxu0 %v1898
        %2040 = vmatpush.bf16.msra.mxu0 %v1897
        %2041 = vmatpush.bf16.msra.mxu0 %v1896
        %2042 = vmatpush.bf16.msra.mxu0 %v1895
        %2043 = vmatpush.bf16.msra.mxu0 %v1894
        %2044 = vmatpush.bf16.msra.mxu0 %v1893
        %2045 = vmatmul.bf16.gmra.mxu0 %v1171
        %v2046 = vpop.f32.mrf.mxu0
        %v2047 = vadd.f32 %v1604, %v2046
        %v2048 = vpop.f32.mrf.mxu0
        %v2049 = vadd.f32 %v1604, %v2048
        %2050 = vmatmul.bf16.gmra.mxu0 %v1172
        %v2051 = vpop.f32.mrf.mxu0
        %v2052 = vadd.f32 %v1604, %v2051
        %v2053 = vpop.f32.mrf.mxu0
        %v2054 = vadd.f32 %v1604, %v2053
        %2055 = vmatmul.bf16.gmra.mxu0 %v1173
        %v2056 = vpop.f32.mrf.mxu0
        %v2057 = vadd.f32 %v1604, %v2056
        %v2058 = vpop.f32.mrf.mxu0
        %v2059 = vadd.f32 %v1604, %v2058
        %2060 = vmatmul.bf16.gmra.mxu0 %v1174
        %v2061 = vpop.f32.mrf.mxu0
        %v2062 = vadd.f32 %v1604, %v2061
        %v2063 = vpop.f32.mrf.mxu0
        %v2064 = vadd.f32 %v1604, %v2063
        %2065 = vmatmul.bf16.gmra.mxu0 %v1175
        %v2066 = vpop.f32.mrf.mxu0
        %v2067 = vadd.f32 %v1604, %v2066
        %v2068 = vpop.f32.mrf.mxu0
        %v2069 = vadd.f32 %v1604, %v2068
        %2070 = vmatmul.bf16.gmra.mxu0 %v1176
        %v2071 = vpop.f32.mrf.mxu0
        %v2072 = vadd.f32 %v1604, %v2071
        %v2073 = vpop.f32.mrf.mxu0
        %v2074 = vadd.f32 %v1604, %v2073
        %2075 = vmatmul.bf16.gmra.mxu0 %v1177
        %v2076 = vpop.f32.mrf.mxu0
        %v2077 = vadd.f32 %v1604, %v2076
        %v2078 = vpop.f32.mrf.mxu0
        %v2079 = vadd.f32 %v1604, %v2078
        %2080 = vmatmul.bf16.gmra.mxu0 %v1178
        %v2081 = vpop.f32.mrf.mxu0
        %v2082 = vadd.f32 %v1604, %v2081
        %v2083 = vpop.f32.mrf.mxu0
        %v2084 = vadd.f32 %v1604, %v2083
        %2085 = vdwg.mxu0
        %2086 = vmatpush.bf16.msra.mxu0 %v1908
        %2087 = vmatpush.bf16.msra.mxu0 %v1907
        %2088 = vmatpush.bf16.msra.mxu0 %v1906
        %2089 = vmatpush.bf16.msra.mxu0 %v1905
        %2090 = vmatpush.bf16.msra.mxu0 %v1904
        %2091 = vmatpush.bf16.msra.mxu0 %v1903
        %2092 = vmatpush.bf16.msra.mxu0 %v1902
        %2093 = vmatpush.bf16.msra.mxu0 %v1901
        %2094 = vmatmul.bf16.gmra.mxu0 %v1203
        %v2095 = vpop.f32.mrf.mxu0
        %v2096 = vadd.f32 %v2047, %v2095
        %v2097 = vpop.f32.mrf.mxu0
        %v2098 = vadd.f32 %v2049, %v2097
        %2099 = vmatmul.bf16.gmra.mxu0 %v1204
        %v2100 = vpop.f32.mrf.mxu0
        %v2101 = vadd.f32 %v2052, %v2100
        %v2102 = vpop.f32.mrf.mxu0
        %v2103 = vadd.f32 %v2054, %v2102
        %2104 = vmatmul.bf16.gmra.mxu0 %v1205
        %v2105 = vpop.f32.mrf.mxu0
        %v2106 = vadd.f32 %v2057, %v2105
        %v2107 = vpop.f32.mrf.mxu0
        %v2108 = vadd.f32 %v2059, %v2107
        %2109 = vmatmul.bf16.gmra.mxu0 %v1206
        %v2110 = vpop.f32.mrf.mxu0
        %v2111 = vadd.f32 %v2062, %v2110
        %v2112 = vpop.f32.mrf.mxu0
        %v2113 = vadd.f32 %v2064, %v2112
        %2114 = vmatmul.bf16.gmra.mxu0 %v1207
        %v2115 = vpop.f32.mrf.mxu0
        %v2116 = vadd.f32 %v2067, %v2115
        %v2117 = vpop.f32.mrf.mxu0
        %v2118 = vadd.f32 %v2069, %v2117
        %2119 = vmatmul.bf16.gmra.mxu0 %v1208
        %v2120 = vpop.f32.mrf.mxu0
        %v2121 = vadd.f32 %v2072, %v2120
        %v2122 = vpop.f32.mrf.mxu0
        %v2123 = vadd.f32 %v2074, %v2122
        %2124 = vmatmul.bf16.gmra.mxu0 %v1209
        %v2125 = vpop.f32.mrf.mxu0
        %v2126 = vadd.f32 %v2077, %v2125
        %v2127 = vpop.f32.mrf.mxu0
        %v2128 = vadd.f32 %v2079, %v2127
        %2129 = vmatmul.bf16.gmra.mxu0 %v1210
        %v2130 = vpop.f32.mrf.mxu0
        %v2131 = vadd.f32 %v2082, %v2130
        %v2132 = vpop.f32.mrf.mxu0
        %v2133 = vadd.f32 %v2084, %v2132
        %2134 = vdwg.mxu0
        %2135 = vmatpush.bf16.msra.mxu0 %v1916
        %2136 = vmatpush.bf16.msra.mxu0 %v1915
        %2137 = vmatpush.bf16.msra.mxu0 %v1914
        %2138 = vmatpush.bf16.msra.mxu0 %v1913
        %2139 = vmatpush.bf16.msra.mxu0 %v1912
        %2140 = vmatpush.bf16.msra.mxu0 %v1911
        %2141 = vmatpush.bf16.msra.mxu0 %v1910
        %2142 = vmatpush.bf16.msra.mxu0 %v1909
        %2143 = vmatmul.bf16.gmra.mxu0 %v1235
        %v2144 = vpop.f32.mrf.mxu0
        %v2145 = vadd.f32 %v2096, %v2144
        %v2146 = vpop.f32.mrf.mxu0
        %v2147 = vadd.f32 %v2098, %v2146
        %2148 = vmatmul.bf16.gmra.mxu0 %v1236
        %v2149 = vpop.f32.mrf.mxu0
        %v2150 = vadd.f32 %v2101, %v2149
        %v2151 = vpop.f32.mrf.mxu0
        %v2152 = vadd.f32 %v2103, %v2151
        %2153 = vmatmul.bf16.gmra.mxu0 %v1237
        %v2154 = vpop.f32.mrf.mxu0
        %v2155 = vadd.f32 %v2106, %v2154
        %v2156 = vpop.f32.mrf.mxu0
        %v2157 = vadd.f32 %v2108, %v2156
        %2158 = vmatmul.bf16.gmra.mxu0 %v1238
        %v2159 = vpop.f32.mrf.mxu0
        %v2160 = vadd.f32 %v2111, %v2159
        %v2161 = vpop.f32.mrf.mxu0
        %v2162 = vadd.f32 %v2113, %v2161
        %2163 = vmatmul.bf16.gmra.mxu0 %v1239
        %v2164 = vpop.f32.mrf.mxu0
        %v2165 = vadd.f32 %v2116, %v2164
        %v2166 = vpop.f32.mrf.mxu0
        %v2167 = vadd.f32 %v2118, %v2166
        %2168 = vmatmul.bf16.gmra.mxu0 %v1240
        %v2169 = vpop.f32.mrf.mxu0
        %v2170 = vadd.f32 %v2121, %v2169
        %v2171 = vpop.f32.mrf.mxu0
        %v2172 = vadd.f32 %v2123, %v2171
        %2173 = vmatmul.bf16.gmra.mxu0 %v1241
        %v2174 = vpop.f32.mrf.mxu0
        %v2175 = vadd.f32 %v2126, %v2174
        %v2176 = vpop.f32.mrf.mxu0
        %v2177 = vadd.f32 %v2128, %v2176
        %2178 = vmatmul.bf16.gmra.mxu0 %v1242
        %v2179 = vpop.f32.mrf.mxu0
        %v2180 = vadd.f32 %v2131, %v2179
        %v2181 = vpop.f32.mrf.mxu0
        %v2182 = vadd.f32 %v2133, %v2181
        %2183 = vdwg.mxu0
        %2184 = vmatpush.bf16.msra.mxu0 %v1924
        %2185 = vmatpush.bf16.msra.mxu0 %v1923
        %2186 = vmatpush.bf16.msra.mxu0 %v1922
        %2187 = vmatpush.bf16.msra.mxu0 %v1921
        %2188 = vmatpush.bf16.msra.mxu0 %v1920
        %2189 = vmatpush.bf16.msra.mxu0 %v1919
        %2190 = vmatpush.bf16.msra.mxu0 %v1918
        %2191 = vmatpush.bf16.msra.mxu0 %v1917
        %2192 = vmatmul.bf16.gmra.mxu0 %v1275
        %v2193 = vpop.f32.mrf.mxu0
        %v2194 = vadd.f32 %v2145, %v2193
        %v2195 = vpop.f32.mrf.mxu0
        %v2196 = vadd.f32 %v2147, %v2195
        %2197 = vmatmul.bf16.gmra.mxu0 %v1276
        %v2198 = vpop.f32.mrf.mxu0
        %v2199 = vadd.f32 %v2150, %v2198
        %v2200 = vpop.f32.mrf.mxu0
        %v2201 = vadd.f32 %v2152, %v2200
        %2202 = vmatmul.bf16.gmra.mxu0 %v1277
        %v2203 = vpop.f32.mrf.mxu0
        %v2204 = vadd.f32 %v2155, %v2203
        %v2205 = vpop.f32.mrf.mxu0
        %v2206 = vadd.f32 %v2157, %v2205
        %2207 = vmatmul.bf16.gmra.mxu0 %v1278
        %v2208 = vpop.f32.mrf.mxu0
        %v2209 = vadd.f32 %v2160, %v2208
        %v2210 = vpop.f32.mrf.mxu0
        %v2211 = vadd.f32 %v2162, %v2210
        %2212 = vmatmul.bf16.gmra.mxu0 %v1279
        %v2213 = vpop.f32.mrf.mxu0
        %v2214 = vadd.f32 %v2165, %v2213
        %v2215 = vpop.f32.mrf.mxu0
        %v2216 = vadd.f32 %v2167, %v2215
        %2217 = vmatmul.bf16.gmra.mxu0 %v1280
        %v2218 = vpop.f32.mrf.mxu0
        %v2219 = vadd.f32 %v2170, %v2218
        %v2220 = vpop.f32.mrf.mxu0
        %v2221 = vadd.f32 %v2172, %v2220
        %2222 = vmatmul.bf16.gmra.mxu0 %v1281
        %v2223 = vpop.f32.mrf.mxu0
        %v2224 = vadd.f32 %v2175, %v2223
        %v2225 = vpop.f32.mrf.mxu0
        %v2226 = vadd.f32 %v2177, %v2225
        %2227 = vmatmul.bf16.gmra.mxu0 %v1282
        %v2228 = vpop.f32.mrf.mxu0
        %v2229 = vadd.f32 %v2180, %v2228
        %v2230 = vpop.f32.mrf.mxu0
        %v2231 = vadd.f32 %v2182, %v2230
        %2232 = vdwg.mxu0
        %2233 = vmatpush.bf16.msra.mxu0 %v1932
        %2234 = vmatpush.bf16.msra.mxu0 %v1931
        %2235 = vmatpush.bf16.msra.mxu0 %v1930
        %2236 = vmatpush.bf16.msra.mxu0 %v1929
        %2237 = vmatpush.bf16.msra.mxu0 %v1928
        %2238 = vmatpush.bf16.msra.mxu0 %v1927
        %2239 = vmatpush.bf16.msra.mxu0 %v1926
        %2240 = vmatpush.bf16.msra.mxu0 %v1925
        %2241 = vmatmul.bf16.gmra.mxu0 %v1307
        %v2242 = vpop.f32.mrf.mxu0
        %v2243 = vadd.f32 %v2194, %v2242
        %v2244 = vpop.f32.mrf.mxu0
        %v2245 = vadd.f32 %v2196, %v2244
        %2246 = vmatmul.bf16.gmra.mxu0 %v1308
        %v2247 = vpop.f32.mrf.mxu0
        %v2248 = vadd.f32 %v2199, %v2247
        %v2249 = vpop.f32.mrf.mxu0
        %v2250 = vadd.f32 %v2201, %v2249
        %2251 = vmatmul.bf16.gmra.mxu0 %v1309
        %v2252 = vpop.f32.mrf.mxu0
        %v2253 = vadd.f32 %v2204, %v2252
        %v2254 = vpop.f32.mrf.mxu0
        %v2255 = vadd.f32 %v2206, %v2254
        %2256 = vmatmul.bf16.gmra.mxu0 %v1310
        %v2257 = vpop.f32.mrf.mxu0
        %v2258 = vadd.f32 %v2209, %v2257
        %v2259 = vpop.f32.mrf.mxu0
        %v2260 = vadd.f32 %v2211, %v2259
        %2261 = vmatmul.bf16.gmra.mxu0 %v1311
        %v2262 = vpop.f32.mrf.mxu0
        %v2263 = vadd.f32 %v2214, %v2262
        %v2264 = vpop.f32.mrf.mxu0
        %v2265 = vadd.f32 %v2216, %v2264
        %2266 = vmatmul.bf16.gmra.mxu0 %v1312
        %v2267 = vpop.f32.mrf.mxu0
        %v2268 = vadd.f32 %v2219, %v2267
        %v2269 = vpop.f32.mrf.mxu0
        %v2270 = vadd.f32 %v2221, %v2269
        %2271 = vmatmul.bf16.gmra.mxu0 %v1313
        %v2272 = vpop.f32.mrf.mxu0
        %v2273 = vadd.f32 %v2224, %v2272
        %v2274 = vpop.f32.mrf.mxu0
        %v2275 = vadd.f32 %v2226, %v2274
        %2276 = vmatmul.bf16.gmra.mxu0 %v1314
        %v2277 = vpop.f32.mrf.mxu0
        %v2278 = vadd.f32 %v2229, %v2277
        %v2279 = vpop.f32.mrf.mxu0
        %v2280 = vadd.f32 %v2231, %v2279
        %2281 = vdwg.mxu0
        %2282 = vmatpush.bf16.msra.mxu0 %v1940
        %2283 = vmatpush.bf16.msra.mxu0 %v1939
        %2284 = vmatpush.bf16.msra.mxu0 %v1938
        %2285 = vmatpush.bf16.msra.mxu0 %v1937
        %2286 = vmatpush.bf16.msra.mxu0 %v1936
        %2287 = vmatpush.bf16.msra.mxu0 %v1935
        %2288 = vmatpush.bf16.msra.mxu0 %v1934
        %2289 = vmatpush.bf16.msra.mxu0 %v1933
        %2290 = vmatmul.bf16.gmra.mxu0 %v1339
        %v2291 = vpop.f32.mrf.mxu0
        %v2292 = vadd.f32 %v2243, %v2291
        %v2293 = vpop.f32.mrf.mxu0
        %v2294 = vadd.f32 %v2245, %v2293
        %2295 = vmatmul.bf16.gmra.mxu0 %v1340
        %v2296 = vpop.f32.mrf.mxu0
        %v2297 = vadd.f32 %v2248, %v2296
        %v2298 = vpop.f32.mrf.mxu0
        %v2299 = vadd.f32 %v2250, %v2298
        %2300 = vmatmul.bf16.gmra.mxu0 %v1341
        %v2301 = vpop.f32.mrf.mxu0
        %v2302 = vadd.f32 %v2253, %v2301
        %v2303 = vpop.f32.mrf.mxu0
        %v2304 = vadd.f32 %v2255, %v2303
        %2305 = vmatmul.bf16.gmra.mxu0 %v1342
        %v2306 = vpop.f32.mrf.mxu0
        %v2307 = vadd.f32 %v2258, %v2306
        %v2308 = vpop.f32.mrf.mxu0
        %v2309 = vadd.f32 %v2260, %v2308
        %2310 = vmatmul.bf16.gmra.mxu0 %v1343
        %v2311 = vpop.f32.mrf.mxu0
        %v2312 = vadd.f32 %v2263, %v2311
        %v2313 = vpop.f32.mrf.mxu0
        %v2314 = vadd.f32 %v2265, %v2313
        %2315 = vmatmul.bf16.gmra.mxu0 %v1344
        %v2316 = vpop.f32.mrf.mxu0
        %v2317 = vadd.f32 %v2268, %v2316
        %v2318 = vpop.f32.mrf.mxu0
        %v2319 = vadd.f32 %v2270, %v2318
        %2320 = vmatmul.bf16.gmra.mxu0 %v1345
        %v2321 = vpop.f32.mrf.mxu0
        %v2322 = vadd.f32 %v2273, %v2321
        %v2323 = vpop.f32.mrf.mxu0
        %v2324 = vadd.f32 %v2275, %v2323
        %2325 = vmatmul.bf16.gmra.mxu0 %v1346
        %v2326 = vpop.f32.mrf.mxu0
        %v2327 = vadd.f32 %v2278, %v2326
        %v2328 = vpop.f32.mrf.mxu0
        %v2329 = vadd.f32 %v2280, %v2328
        %2330 = vdwg.mxu0
        %2331 = vmatpush.bf16.msra.mxu0 %v1948
        %2332 = vmatpush.bf16.msra.mxu0 %v1947
        %2333 = vmatpush.bf16.msra.mxu0 %v1946
        %2334 = vmatpush.bf16.msra.mxu0 %v1945
        %2335 = vmatpush.bf16.msra.mxu0 %v1944
        %2336 = vmatpush.bf16.msra.mxu0 %v1943
        %2337 = vmatpush.bf16.msra.mxu0 %v1942
        %2338 = vmatpush.bf16.msra.mxu0 %v1941
        %2339 = vmatmul.bf16.gmra.mxu0 %v1379
        %v2340 = vpop.f32.mrf.mxu0
        %v2341 = vadd.f32 %v2292, %v2340
        %v2342 = vpop.f32.mrf.mxu0
        %v2343 = vadd.f32 %v2294, %v2342
        %2344 = vmatmul.bf16.gmra.mxu0 %v1380
        %v2345 = vpop.f32.mrf.mxu0
        %v2346 = vadd.f32 %v2297, %v2345
        %v2347 = vpop.f32.mrf.mxu0
        %v2348 = vadd.f32 %v2299, %v2347
        %2349 = vmatmul.bf16.gmra.mxu0 %v1381
        %v2350 = vpop.f32.mrf.mxu0
        %v2351 = vadd.f32 %v2302, %v2350
        %v2352 = vpop.f32.mrf.mxu0
        %v2353 = vadd.f32 %v2304, %v2352
        %2354 = vmatmul.bf16.gmra.mxu0 %v1382
        %v2355 = vpop.f32.mrf.mxu0
        %v2356 = vadd.f32 %v2307, %v2355
        %v2357 = vpop.f32.mrf.mxu0
        %v2358 = vadd.f32 %v2309, %v2357
        %2359 = vmatmul.bf16.gmra.mxu0 %v1383
        %v2360 = vpop.f32.mrf.mxu0
        %v2361 = vadd.f32 %v2312, %v2360
        %v2362 = vpop.f32.mrf.mxu0
        %v2363 = vadd.f32 %v2314, %v2362
        %2364 = vmatmul.bf16.gmra.mxu0 %v1384
        %v2365 = vpop.f32.mrf.mxu0
        %v2366 = vadd.f32 %v2317, %v2365
        %v2367 = vpop.f32.mrf.mxu0
        %v2368 = vadd.f32 %v2319, %v2367
        %2369 = vmatmul.bf16.gmra.mxu0 %v1385
        %v2370 = vpop.f32.mrf.mxu0
        %v2371 = vadd.f32 %v2322, %v2370
        %v2372 = vpop.f32.mrf.mxu0
        %v2373 = vadd.f32 %v2324, %v2372
        %2374 = vmatmul.bf16.gmra.mxu0 %v1386
        %v2375 = vpop.f32.mrf.mxu0
        %v2376 = vadd.f32 %v2327, %v2375
        %v2377 = vpop.f32.mrf.mxu0
        %v2378 = vadd.f32 %v2329, %v2377
        %2379 = vdwg.mxu0
        %2380 = vmatpush.bf16.msra.mxu0 %v1956
        %2381 = vmatpush.bf16.msra.mxu0 %v1955
        %2382 = vmatpush.bf16.msra.mxu0 %v1954
        %2383 = vmatpush.bf16.msra.mxu0 %v1953
        %2384 = vmatpush.bf16.msra.mxu0 %v1952
        %2385 = vmatpush.bf16.msra.mxu0 %v1951
        %2386 = vmatpush.bf16.msra.mxu0 %v1950
        %2387 = vmatpush.bf16.msra.mxu0 %v1949
        %2388 = vmatmul.bf16.gmra.mxu0 %v1411
        %v2389 = vpop.f32.mrf.mxu0
        %v2390 = vadd.f32 %v2341, %v2389
        %v2391 = vpop.f32.mrf.mxu0
        %v2392 = vadd.f32 %v2343, %v2391
        %2393 = vmatmul.bf16.gmra.mxu0 %v1412
        %v2394 = vpop.f32.mrf.mxu0
        %v2395 = vadd.f32 %v2346, %v2394
        %v2396 = vpop.f32.mrf.mxu0
        %v2397 = vadd.f32 %v2348, %v2396
        %2398 = vmatmul.bf16.gmra.mxu0 %v1413
        %v2399 = vpop.f32.mrf.mxu0
        %v2400 = vadd.f32 %v2351, %v2399
        %v2401 = vpop.f32.mrf.mxu0
        %v2402 = vadd.f32 %v2353, %v2401
        %2403 = vmatmul.bf16.gmra.mxu0 %v1414
        %v2404 = vpop.f32.mrf.mxu0
        %v2405 = vadd.f32 %v2356, %v2404
        %v2406 = vpop.f32.mrf.mxu0
        %v2407 = vadd.f32 %v2358, %v2406
        %2408 = vmatmul.bf16.gmra.mxu0 %v1415
        %v2409 = vpop.f32.mrf.mxu0
        %v2410 = vadd.f32 %v2361, %v2409
        %v2411 = vpop.f32.mrf.mxu0
        %v2412 = vadd.f32 %v2363, %v2411
        %2413 = vmatmul.bf16.gmra.mxu0 %v1416
        %v2414 = vpop.f32.mrf.mxu0
        %v2415 = vadd.f32 %v2366, %v2414
        %v2416 = vpop.f32.mrf.mxu0
        %v2417 = vadd.f32 %v2368, %v2416
        %2418 = vmatmul.bf16.gmra.mxu0 %v1417
        %v2419 = vpop.f32.mrf.mxu0
        %v2420 = vadd.f32 %v2371, %v2419
        %v2421 = vpop.f32.mrf.mxu0
        %v2422 = vadd.f32 %v2373, %v2421
        %2423 = vmatmul.bf16.gmra.mxu0 %v1418
        %v2424 = vpop.f32.mrf.mxu0
        %v2425 = vadd.f32 %v2376, %v2424
        %v2426 = vpop.f32.mrf.mxu0
        %v2427 = vadd.f32 %v2378, %v2426
        %2428 = vdwg.mxu0
        %2429 = vmatpush.bf16.msra.mxu0 %v1964
        %2430 = vmatpush.bf16.msra.mxu0 %v1963
        %2431 = vmatpush.bf16.msra.mxu0 %v1962
        %2432 = vmatpush.bf16.msra.mxu0 %v1961
        %2433 = vmatpush.bf16.msra.mxu0 %v1960
        %2434 = vmatpush.bf16.msra.mxu0 %v1959
        %2435 = vmatpush.bf16.msra.mxu0 %v1958
        %2436 = vmatpush.bf16.msra.mxu0 %v1957
        %2437 = vmatmul.bf16.gmra.mxu0 %v1443
        %v2438 = vpop.f32.mrf.mxu0
        %v2439 = vadd.f32 %v2390, %v2438
        %v2440 = vpop.f32.mrf.mxu0
        %v2441 = vadd.f32 %v2392, %v2440
        %2442 = vmatmul.bf16.gmra.mxu0 %v1444
        %v2443 = vpop.f32.mrf.mxu0
        %v2444 = vadd.f32 %v2395, %v2443
        %v2445 = vpop.f32.mrf.mxu0
        %v2446 = vadd.f32 %v2397, %v2445
        %2447 = vmatmul.bf16.gmra.mxu0 %v1445
        %v2448 = vpop.f32.mrf.mxu0
        %v2449 = vadd.f32 %v2400, %v2448
        %v2450 = vpop.f32.mrf.mxu0
        %v2451 = vadd.f32 %v2402, %v2450
        %2452 = vmatmul.bf16.gmra.mxu0 %v1446
        %v2453 = vpop.f32.mrf.mxu0
        %v2454 = vadd.f32 %v2405, %v2453
        %v2455 = vpop.f32.mrf.mxu0
        %v2456 = vadd.f32 %v2407, %v2455
        %2457 = vmatmul.bf16.gmra.mxu0 %v1447
        %v2458 = vpop.f32.mrf.mxu0
        %v2459 = vadd.f32 %v2410, %v2458
        %v2460 = vpop.f32.mrf.mxu0
        %v2461 = vadd.f32 %v2412, %v2460
        %2462 = vmatmul.bf16.gmra.mxu0 %v1448
        %v2463 = vpop.f32.mrf.mxu0
        %v2464 = vadd.f32 %v2415, %v2463
        %v2465 = vpop.f32.mrf.mxu0
        %v2466 = vadd.f32 %v2417, %v2465
        %2467 = vmatmul.bf16.gmra.mxu0 %v1449
        %v2468 = vpop.f32.mrf.mxu0
        %v2469 = vadd.f32 %v2420, %v2468
        %v2470 = vpop.f32.mrf.mxu0
        %v2471 = vadd.f32 %v2422, %v2470
        %2472 = vmatmul.bf16.gmra.mxu0 %v1450
        %v2473 = vpop.f32.mrf.mxu0
        %v2474 = vadd.f32 %v2425, %v2473
        %v2475 = vpop.f32.mrf.mxu0
        %v2476 = vadd.f32 %v2427, %v2475
        %2477 = vdwg.mxu0
        %v2478 = vmax.f32 %v2439, 0.0
        %v2479 = vmax.f32 %v2441, 0.0
        %v2480 = vmax.f32 %v2444, 0.0
        %v2481 = vmax.f32 %v2446, 0.0
        %v2482 = vmax.f32 %v2449, 0.0
        %v2483 = vmax.f32 %v2451, 0.0
        %v2484 = vmax.f32 %v2454, 0.0
        %v2485 = vmax.f32 %v2456, 0.0
        %v2486 = vmax.f32 %v2459, 0.0
        %v2487 = vmax.f32 %v2461, 0.0
        %v2488 = vmax.f32 %v2464, 0.0
        %v2489 = vmax.f32 %v2466, 0.0
        %v2490 = vmax.f32 %v2469, 0.0
        %v2491 = vmax.f32 %v2471, 0.0
        %v2492 = vmax.f32 %v2474, 0.0
        %v2493 = vmax.f32 %v2476, 0.0
        %v2494 = vld [vmem:[#allocation3] sm:$0x1]
        %v2495 = vadd.f32 %v2478, %v2479
        %v2496 = vadd.f32 %v2495, %v2480
        %v2497 = vadd.f32 %v2496, %v2481
        %v2498 = vadd.f32 %v2497, %v2482
        %v2499 = vadd.f32 %v2498, %v2483
        %v2500 = vadd.f32 %v2499, %v2484
        %v2501 = vadd.f32 %v2500, %v2485
        %v2502 = vadd.f32 %v2501, %v2486
        %v2503 = vadd.f32 %v2502, %v2487
        %v2504 = vadd.f32 %v2503, %v2488
        %v2505 = vadd.f32 %v2504, %v2489
        %v2506 = vadd.f32 %v2505, %v2490
        %v2507 = vadd.f32 %v2506, %v2491
        %v2508 = vadd.f32 %v2507, %v2492
        %v2509 = vadd.f32 %v2508, %v2493
        %v2510 = vrot.slane %v2509, 4
        %v2511 = vadd.f32 %v2509, %v2510
        %v2512 = vrot.slane %v2511, 2
        %v2513 = vadd.f32 %v2511, %v2512
        %v2514 = vrot.slane %v2513, 1
        %v2515 = vadd.f32 %v2513, %v2514
        %v2516 = vadd.f32 %v2494, %v2515
        %2517 = vst [vmem:[#allocation3] sm:$0x1] %v2516
        %s2518 = smul.u32 %s23, 128
        %s2519 = scalar_lea.vmem [#allocation2], %s2518
        %2520 = vst [vmem:[%s2519] sm:$0xff] %v2478
        %2521 = vst [vmem:[%s2519 + $0x8] sm:$0xff] %v2479
        %2522 = vst [vmem:[%s2519 + $0x10] sm:$0xff] %v2480
        %2523 = vst [vmem:[%s2519 + $0x18] sm:$0xff] %v2481
        %2524 = vst [vmem:[%s2519 + $0x20] sm:$0xff] %v2482
        %2525 = vst [vmem:[%s2519 + $0x28] sm:$0xff] %v2483
        %2526 = vst [vmem:[%s2519 + $0x30] sm:$0xff] %v2484
        %2527 = vst [vmem:[%s2519 + $0x38] sm:$0xff] %v2485
        %2528 = vst [vmem:[%s2519 + $0x40] sm:$0xff] %v2486
        %2529 = vst [vmem:[%s2519 + $0x48] sm:$0xff] %v2487
        %2530 = vst [vmem:[%s2519 + $0x50] sm:$0xff] %v2488
        %2531 = vst [vmem:[%s2519 + $0x58] sm:$0xff] %v2489
        %2532 = vst [vmem:[%s2519 + $0x60] sm:$0xff] %v2490
        %2533 = vst [vmem:[%s2519 + $0x68] sm:$0xff] %v2491
        %2534 = vst [vmem:[%s2519 + $0x70] sm:$0xff] %v2492
        %2535 = vst [vmem:[%s2519 + $0x78] sm:$0xff] %v2493
        %p2536 = scmp.eq.s32.totalorder %s23, 1
        // Predicated region
        $region41: #{tpu_custom_call.1} parent=35 // pred_check
          %p2537 = pneg %p2536
        $region42: #{tpu_custom_call.1} parent=35 // pred_check_branch
          %2539 = sbr.rel (%p2537) target = $region44
        $region43: #{tpu_custom_call.1} parent=35 // pred_region
          %v2540 = vld [vmem:[#allocation3] sm:$0x1]
          %v2541 = vld [vmem:[%s2] sm:$0xff]
          %v2542 = vld [vmem:[%s2 + $0x8] sm:$0xff]
          %v2543 = vld [vmem:[%s2 + $0x10] sm:$0xff]
          %v2544 = vld [vmem:[%s2 + $0x18] sm:$0xff]
          %v2545 = vld [vmem:[%s2 + $0x20] sm:$0xff]
          %v2546 = vld [vmem:[%s2 + $0x28] sm:$0xff]
          %v2547 = vld [vmem:[%s2 + $0x30] sm:$0xff]
          %v2548 = vld [vmem:[%s2 + $0x38] sm:$0xff]
          %v2549 = vld [vmem:[%s2 + $0x40] sm:$0xff]
          %v2550 = vld [vmem:[%s2 + $0x48] sm:$0xff]
          %v2551 = vld [vmem:[%s2 + $0x50] sm:$0xff]
          %v2552 = vld [vmem:[%s2 + $0x58] sm:$0xff]
          %v2553 = vld [vmem:[%s2 + $0x60] sm:$0xff]
          %v2554 = vld [vmem:[%s2 + $0x68] sm:$0xff]
          %v2555 = vld [vmem:[%s2 + $0x70] sm:$0xff]
          %v2556 = vld [vmem:[%s2 + $0x78] sm:$0xff]
          %v2557 = vld [vmem:[%s3 + $0x1] sm:$0x1]
          %2558 = vmatpush.msra.mxu0 %v2556
          %2559 = vmatpush.msra.mxu0 %v2555
          %2560 = vmatpush.msra.mxu0 %v2554
          %2561 = vmatpush.msra.mxu0 %v2553
          %2562 = vmatpush.msra.mxu0 %v2552
          %2563 = vmatpush.msra.mxu0 %v2551
          %2564 = vmatpush.msra.mxu0 %v2550
          %2565 = vmatpush.msra.mxu0 %v2549
          %2566 = vmatpush.msra.mxu0 %v2548
          %2567 = vmatpush.msra.mxu0 %v2547
          %2568 = vmatpush.msra.mxu0 %v2546
          %2569 = vmatpush.msra.mxu0 %v2545
          %2570 = vmatpush.msra.mxu0 %v2544
          %2571 = vmatpush.msra.mxu0 %v2543
          %2572 = vmatpush.msra.mxu0 %v2542
          %2573 = vmatpush.msra.mxu0 %v2541
          %2574 = vmatmul.f32.gmra.mxu0 %v2540
          %v2575 = vpop.f32.mrf.mxu0
          %v2576 = vadd.f32 %v2557, %v2575
          %2577 = vdwg.mxu0
          %v2578 = vxor.u32 %v2576, 2147483648
          %v2579 = vmul.f32 %v2578, 1.442695
          %v2580 = vpow.pop %v2579
          %v2581 = vadd.f32 %v2580, 1.0
          %v2582 = vrcp.pop %v2581
          %v2583 = vmul.f32 %v2581, %v2582
          %v2584 = vsub.f32 1.0, %v2583
          %v2585 = vmul.f32 %v2582, %v2584
          %v2586 = vadd.f32 %v2582, %v2585
          %vm2587 = vweird.f32 %v2581
          %vm2588 = vweird.f32 %v2582
          %vm2589 = vmor %vm2587, %vm2588
          %v2590 = vsel %vm2589, %v2582, %v2586
          %v2591 = vand.u32 2147483647, %v2581
          %vm2592 = vcmp.eq.f32.partialorder %v2591, 8.507059e+37
          %v2593 = vand.u32 %v2581, 2147483648
          %v2594 = vor.u32 1.1754944e-38, %v2593
          %v2595 = vsel %vm2592, %v2594, %v2590
          %v2596 = vmul.f32 1.0, %v2595
          %v2597 = vld [vmem:[#allocation2] sm:$0xff]
          %v2598 = vld [vmem:[#allocation2 + $0x8] sm:$0xff]
          %v2599 = vld [vmem:[#allocation2 + $0x10] sm:$0xff]
          %v2600 = vld [vmem:[#allocation2 + $0x18] sm:$0xff]
          %v2601 = vld [vmem:[#allocation2 + $0x20] sm:$0xff]
          %v2602 = vld [vmem:[#allocation2 + $0x28] sm:$0xff]
          %v2603 = vld [vmem:[#allocation2 + $0x30] sm:$0xff]
          %v2604 = vld [vmem:[#allocation2 + $0x38] sm:$0xff]
          %v2605 = vld [vmem:[#allocation2 + $0x40] sm:$0xff]
          %v2606 = vld [vmem:[#allocation2 + $0x48] sm:$0xff]
          %v2607 = vld [vmem:[#allocation2 + $0x50] sm:$0xff]
          %v2608 = vld [vmem:[#allocation2 + $0x58] sm:$0xff]
          %v2609 = vld [vmem:[#allocation2 + $0x60] sm:$0xff]
          %v2610 = vld [vmem:[#allocation2 + $0x68] sm:$0xff]
          %v2611 = vld [vmem:[#allocation2 + $0x70] sm:$0xff]
          %v2612 = vld [vmem:[#allocation2 + $0x78] sm:$0xff]
          %v2613 = vld [vmem:[#allocation2 + $0x80] sm:$0xff]
          %v2614 = vld [vmem:[#allocation2 + $0x88] sm:$0xff]
          %v2615 = vld [vmem:[#allocation2 + $0x90] sm:$0xff]
          %v2616 = vld [vmem:[#allocation2 + $0x98] sm:$0xff]
          %v2617 = vld [vmem:[#allocation2 + $0xa0] sm:$0xff]
          %v2618 = vld [vmem:[#allocation2 + $0xa8] sm:$0xff]
          %v2619 = vld [vmem:[#allocation2 + $0xb0] sm:$0xff]
          %v2620 = vld [vmem:[#allocation2 + $0xb8] sm:$0xff]
          %v2621 = vld [vmem:[#allocation2 + $0xc0] sm:$0xff]
          %v2622 = vld [vmem:[#allocation2 + $0xc8] sm:$0xff]
          %v2623 = vld [vmem:[#allocation2 + $0xd0] sm:$0xff]
          %v2624 = vld [vmem:[#allocation2 + $0xd8] sm:$0xff]
          %v2625 = vld [vmem:[#allocation2 + $0xe0] sm:$0xff]
          %v2626 = vld [vmem:[#allocation2 + $0xe8] sm:$0xff]
          %v2627 = vld [vmem:[#allocation2 + $0xf0] sm:$0xff]
          %v2628 = vld [vmem:[#allocation2 + $0xf8] sm:$0xff]
          %v2629 = vperm.slane %v2596, 0
          %v2630 = vmul.f32 %v2597, %v2629
          %v2631 = vmul.f32 %v2598, %v2629
          %v2632 = vmul.f32 %v2599, %v2629
          %v2633 = vmul.f32 %v2600, %v2629
          %v2634 = vmul.f32 %v2601, %v2629
          %v2635 = vmul.f32 %v2602, %v2629
          %v2636 = vmul.f32 %v2603, %v2629
          %v2637 = vmul.f32 %v2604, %v2629
          %v2638 = vmul.f32 %v2605, %v2629
          %v2639 = vmul.f32 %v2606, %v2629
          %v2640 = vmul.f32 %v2607, %v2629
          %v2641 = vmul.f32 %v2608, %v2629
          %v2642 = vmul.f32 %v2609, %v2629
          %v2643 = vmul.f32 %v2610, %v2629
          %v2644 = vmul.f32 %v2611, %v2629
          %v2645 = vmul.f32 %v2612, %v2629
          %v2646 = vmul.f32 %v2613, %v2629
          %v2647 = vmul.f32 %v2614, %v2629
          %v2648 = vmul.f32 %v2615, %v2629
          %v2649 = vmul.f32 %v2616, %v2629
          %v2650 = vmul.f32 %v2617, %v2629
          %v2651 = vmul.f32 %v2618, %v2629
          %v2652 = vmul.f32 %v2619, %v2629
          %v2653 = vmul.f32 %v2620, %v2629
          %v2654 = vmul.f32 %v2621, %v2629
          %v2655 = vmul.f32 %v2622, %v2629
          %v2656 = vmul.f32 %v2623, %v2629
          %v2657 = vmul.f32 %v2624, %v2629
          %v2658 = vmul.f32 %v2625, %v2629
          %v2659 = vmul.f32 %v2626, %v2629
          %v2660 = vmul.f32 %v2627, %v2629
          %v2661 = vmul.f32 %v2628, %v2629
          %2662 = vxpose.xlu0.b32.start [1/16] %v2630, 128
          %2663 = vxpose.xlu0.b32.cont [2/16] %v2631, 128
          %2664 = vxpose.xlu0.b32.cont [3/16] %v2632, 128
          %2665 = vxpose.xlu0.b32.cont [4/16] %v2633, 128
          %2666 = vxpose.xlu0.b32.cont [5/16] %v2634, 128
          %2667 = vxpose.xlu0.b32.cont [6/16] %v2635, 128
          %2668 = vxpose.xlu0.b32.cont [7/16] %v2636, 128
          %2669 = vxpose.xlu0.b32.cont [8/16] %v2637, 128
          %2670 = vxpose.xlu0.b32.cont [9/16] %v2638, 128
          %2671 = vxpose.xlu0.b32.cont [10/16] %v2639, 128
          %2672 = vxpose.xlu0.b32.cont [11/16] %v2640, 128
          %2673 = vxpose.xlu0.b32.cont [12/16] %v2641, 128
          %2674 = vxpose.xlu0.b32.cont [13/16] %v2642, 128
          %2675 = vxpose.xlu0.b32.cont [14/16] %v2643, 128
          %2676 = vxpose.xlu0.b32.cont [15/16] %v2644, 128
          %2677 = vxpose.xlu0.b32.end [16/16] %v2645, 128
          %v2678 = vpop.trf.xlu0
          %v2679 = vpop.trf.xlu0
          %v2680 = vpop.trf.xlu0
          %v2681 = vpop.trf.xlu0
          %v2682 = vpop.trf.xlu0
          %v2683 = vpop.trf.xlu0
          %v2684 = vpop.trf.xlu0
          %v2685 = vpop.trf.xlu0
          %v2686 = vpop.trf.xlu0
          %v2687 = vpop.trf.xlu0
          %v2688 = vpop.trf.xlu0
          %v2689 = vpop.trf.xlu0
          %v2690 = vpop.trf.xlu0
          %v2691 = vpop.trf.xlu0
          %v2692 = vpop.trf.xlu0
          %v2693 = vpop.trf.xlu0
          %2694 = vxpose.xlu0.b32.start [1/16] %v2646, 128
          %2695 = vxpose.xlu0.b32.cont [2/16] %v2647, 128
          %2696 = vxpose.xlu0.b32.cont [3/16] %v2648, 128
          %2697 = vxpose.xlu0.b32.cont [4/16] %v2649, 128
          %2698 = vxpose.xlu0.b32.cont [5/16] %v2650, 128
          %2699 = vxpose.xlu0.b32.cont [6/16] %v2651, 128
          %2700 = vxpose.xlu0.b32.cont [7/16] %v2652, 128
          %2701 = vxpose.xlu0.b32.cont [8/16] %v2653, 128
          %2702 = vxpose.xlu0.b32.cont [9/16] %v2654, 128
          %2703 = vxpose.xlu0.b32.cont [10/16] %v2655, 128
          %2704 = vxpose.xlu0.b32.cont [11/16] %v2656, 128
          %2705 = vxpose.xlu0.b32.cont [12/16] %v2657, 128
          %2706 = vxpose.xlu0.b32.cont [13/16] %v2658, 128
          %2707 = vxpose.xlu0.b32.cont [14/16] %v2659, 128
          %2708 = vxpose.xlu0.b32.cont [15/16] %v2660, 128
          %2709 = vxpose.xlu0.b32.end [16/16] %v2661, 128
          %v2710 = vpop.trf.xlu0
          %v2711 = vpop.trf.xlu0
          %v2712 = vpop.trf.xlu0
          %v2713 = vpop.trf.xlu0
          %v2714 = vpop.trf.xlu0
          %v2715 = vpop.trf.xlu0
          %v2716 = vpop.trf.xlu0
          %v2717 = vpop.trf.xlu0
          %v2718 = vpop.trf.xlu0
          %v2719 = vpop.trf.xlu0
          %v2720 = vpop.trf.xlu0
          %v2721 = vpop.trf.xlu0
          %v2722 = vpop.trf.xlu0
          %v2723 = vpop.trf.xlu0
          %v2724 = vpop.trf.xlu0
          %v2725 = vpop.trf.xlu0
          %2726 = vst [vmem:[%s212] sm:$0xff] %v2678
          %2727 = vst [vmem:[%s212 + $0x8] sm:$0xff] %v2710
        $region44: #{tpu_custom_call.1} parent=35 // pred_fallthru
          _
        %s2728 = sand.u32 %s129, 1
        %s2729 = scalar_lea.sflag [#allocation5], %s2728
        %s2730 = sand.u32 %s129, 1
        %s2731 = smul.addr %s2730, 16
        %s2732 = scalar_lea.vmem [#allocation4], %s2731
        // Predicated region
        $region45: #{tpu_custom_call.1} parent=35 // pred_check
          %p2733 = pneg %p139
        $region46: #{tpu_custom_call.1} parent=35 // pred_check_branch
          %2735 = sbr.rel (%p2733) target = $region48
        $region47: #{tpu_custom_call.1} parent=35 // pred_region
          %2737 = vsyncadd %s2729, 0
          %s2738 = smul.addr %s22, 2
          %s2739 = smul.addr %s2738, 8
          %s2740 = scalar_lea.hbm %s4, %s2739
          %s2742 = sshll.u32 %s2732, 4
          %s2743 = int_to_ptr.vmem [resolvable:$true] %s2742
          %s2744 = sshll.u32 %s2740, 4
          %s2745 = int_to_ptr.hbm [resolvable:$true] %s2744
          %2747 = dma.vmem_to_hbm [thread:$0]  %s2743, 256, %s2745, %s2729
        $region48: #{tpu_custom_call.1} parent=35 // pred_fallthru
          _
      $region36: #{tpu_custom_call.1} parent=5 // pred_fallthru
        _
      %p2748 = scmp.le.s32.totalorder 2, %s13
      // Predicated region
      $region49: #{tpu_custom_call.1} parent=5 // pred_check
        %p2749 = pneg %p2748
      $region50: #{tpu_custom_call.1} parent=5 // pred_check_branch
        %2751 = sbr.rel (%p2749) target = $region52
      $region51: #{tpu_custom_call.1} parent=5 // pred_region
        %s2752 = ssub.s32 %s13, 2
        // Predicated region
        $region53: #{tpu_custom_call.1} parent=51 // pred_check
          %p2753 = pneg %p145
        $region54: #{tpu_custom_call.1} parent=51 // pred_check_branch
          %2755 = sbr.rel (%p2753) target = $region56
        $region55: #{tpu_custom_call.1} parent=51 // pred_region
          %s2756 = sand.u32 %s130, 1
          %s2757 = scalar_lea.sflag [#allocation5], %s2756
          %s2758 = sand.u32 %s130, 1
          %s2759 = smul.addr %s2758, 16
          %s2760 = scalar_lea.vmem [#allocation4], %s2759
          %2762 = dma.done %s2757, 256
        $region56: #{tpu_custom_call.1} parent=51 // pred_fallthru
          _
      $region52: #{tpu_custom_call.1} parent=5 // pred_fallthru
        _
    $region6: #{tpu_custom_call.1} parent=1 // loop_footer
      %s17 = sadd.s32 1, %s13
    $region7: #{tpu_custom_call.1} parent=1 // loop_footer_branch
      %12 = sbr.rel target = $region3
    $region8: #{tpu_custom_call.1} parent=1 // loop_exit
      _
    %2763 = vsyncpa [#allocation5], 1
    %s2764 = scalar_lea.sflag [#allocation5], 1
    %2765 = vsyncpa %s2764, 1

// kernel: tpu_custom_call.1
$region0: #{tpu_custom_call.1}
  #allocation0 [shape = 'u32[]', space=smem, size = 0x4, offset = 0x4, fixed_abs, tag = 'smem constant byte address 0x4 - core index']
  #allocation1 [shape = 'u32[72,128]{1,0:T(1,128)}', space=vmem, size = 0x9000, scoped, tag = 'internal scratch']
  #allocation2 [shape = 'f32[256,128]{1,0:T(8,128)}', space=vmem, size = 0x20000, scoped, tag = 'scratch operand']
  #allocation3 [shape = 'f32[1,128]{1,0:T(1,128)}', space=vmem, size = 0x200, scoped, tag = 'scratch operand']
  %s0 = inlined_call_operand.vmem [shape: bf16[2,2,10,18,128], index: 0, kind: input, shape index: {}]
  %s1 = inlined_call_operand.vmem [shape: bf16[1152,128], index: 1, kind: input, shape index: {}]
  %s2 = inlined_call_operand.vmem [shape: f32[128,128], index: 2, kind: input, shape index: {}]
  %s3 = inlined_call_operand.vmem [shape: f32[2,128], index: 3, kind: input, shape index: {}]
  %s4 = inlined_call_operand.hbm [shape: f32[2,8,256], index: 4, kind: output, shape index: {}]
  %s5 = sld [smem:[#allocation0]]
  $region57: #{tpu_custom_call.1} parent=0
    _
  %s7 = ssub.s32 1, %s5
  %s8 = scalar_select 0, %s7, %s5
  $region1: #{tpu_custom_call.1} parent=0
    #allocation4 [shape = 'u8[16384]{0}', space=vmem, size = 0x4000, scoped, tag = 'output window, operand 0']
    #allocation5 [shape = 's32[2]{0}', space=sflag, size = 0x8, scoped, tag = 'scoped memory for tpu_custom_call.1']
    %9 = vsyncpa [#allocation5], 0
    %s10 = scalar_lea.sflag [#allocation5], 1
    %11 = vsyncpa %s10, 0
    loop: start=0, step=1, limit=6
    $region2: #{tpu_custom_call.1} parent=1 // loop_pre_header
      _
    $region3: #{tpu_custom_call.1} parent=1 // loop_header
      %s13 = sphi 0, %s17
      %p14 = scmp.ge.s32.totalorder %s13, 6
      %s20 = sphi 0, %s32
      %s21 = sphi 0, %s28
      %s22 = sphi 0, %s20
      %s23 = sphi 0, %s21
      %s24 = sphi 0, %s22
      %s25 = sphi 0, %s23
      %s37 = sphi 0, %s39
      %s40 = sphi 0, %s37
      %s41 = sphi 0, %s40
      %s57 = sphi 0, %s41
      %s61 = sphi 0, %s61
      %s63 = sphi 0, %s61
      %s64 = sphi 0, %s63
      %s78 = sphi 0, %s64
      %s82 = sphi 0, %s82
      %s84 = sphi 0, %s82
      %s85 = sphi 0, %s84
      %s99 = sphi 0, %s85
      %s103 = sphi 0, %s103
      %s105 = sphi 0, %s103
      %s106 = sphi 0, %s105
      %s120 = sphi 0, %s106
      %s126 = sphi 0, %s128
      %s129 = sphi 0, %s126
      %s130 = sphi 0, %s129
      %s146 = sphi 0, %s130
    $region4: #{tpu_custom_call.1} parent=1 // loop_header_branch
      %16 = sbr.rel (%p14) target = $region8
    $region5: #{tpu_custom_call.1} parent=1 // loop_body
      %s18 = ssub.s32 %s13, 1
      %s19 = ssub.s32 %s13, 2
      %s26 = sadd.s32 1, %s21
      %p27 = scmp.ge.s32.totalorder %s26, 2
      %s28 = scalar_select %p27, 0, %s26
      %s29 = sadd.s32 1, %s20
      %s30 = scalar_select %p27, %s29, %s20
      %p31 = scmp.ge.s32.totalorder %s30, 2
      %s32 = scalar_select %p31, 0, %s30
      %s33 = ssub.s32 %s20, %s32
      %s34 = ssub.s32 %s21, %s28
      %s35 = sor.u32 %s33, %s34
      %p36 = scmp.eq.s32.totalorder %s35, 0
      %s38 = sadd.s32 %s37, 1
      %s39 = scalar_select %p36, %s37, %s38
      %p42 = pneg %p36
      %p43 = scmp.eq.s32.totalorder %s13, 3
      %p44 = por %p42, %p43
      %p45 = scmp.ne.s32.totalorder %s37, %s40
      %p46 = scmp.eq.s32.totalorder %s13, 0
      %p47 = por %p45, %p46
      %p48 = scmp.ne.s32.totalorder %s37, %s40
      %p49 = scmp.eq.s32.totalorder %s18, 3
      %p50 = por %p48, %p49
      %p51 = scmp.ne.s32.totalorder %s40, %s41
      %p52 = scmp.eq.s32.totalorder %s18, 0
      %p53 = por %p51, %p52
      %p54 = scmp.ne.s32.totalorder %s40, %s41
      %p55 = scmp.eq.s32.totalorder %s19, 3
      %p56 = por %p54, %p55
      %p58 = scmp.ne.s32.totalorder %s41, %s57
      %p59 = scmp.eq.s32.totalorder %s19, 0
      %p60 = por %p58, %p59
      %s62 = sadd.s32 %s61, 1
      %p65 = scmp.eq.s32.totalorder %s13, 3
      %p66 = scmp.ne.s32.totalorder %s61, %s63
      %p67 = scmp.eq.s32.totalorder %s13, 0
      %p68 = por %p66, %p67
      %p69 = scmp.ne.s32.totalorder %s61, %s63
      %p70 = scmp.eq.s32.totalorder %s18, 3
      %p71 = por %p69, %p70
      %p72 = scmp.ne.s32.totalorder %s63, %s64
      %p73 = scmp.eq.s32.totalorder %s18, 0
      %p74 = por %p72, %p73
      %p75 = scmp.ne.s32.totalorder %s63, %s64
      %p76 = scmp.eq.s32.totalorder %s19, 3
      %p77 = por %p75, %p76
      %p79 = scmp.ne.s32.totalorder %s64, %s78
      %p80 = scmp.eq.s32.totalorder %s19, 0
      %p81 = por %p79, %p80
      %s83 = sadd.s32 %s82, 1
      %p86 = scmp.eq.s32.totalorder %s13, 3
      %p87 = scmp.ne.s32.totalorder %s82, %s84
      %p88 = scmp.eq.s32.totalorder %s13, 0
      %p89 = por %p87, %p88
      %p90 = scmp.ne.s32.totalorder %s82, %s84
      %p91 = scmp.eq.s32.totalorder %s18, 3
      %p92 = por %p90, %p91
      %p93 = scmp.ne.s32.totalorder %s84, %s85
      %p94 = scmp.eq.s32.totalorder %s18, 0
      %p95 = por %p93, %p94
      %p96 = scmp.ne.s32.totalorder %s84, %s85
      %p97 = scmp.eq.s32.totalorder %s19, 3
      %p98 = por %p96, %p97
      %p100 = scmp.ne.s32.totalorder %s85, %s99
      %p101 = scmp.eq.s32.totalorder %s19, 0
      %p102 = por %p100, %p101
      %s104 = sadd.s32 %s103, 1
      %p107 = scmp.eq.s32.totalorder %s13, 3
      %p108 = scmp.ne.s32.totalorder %s103, %s105
      %p109 = scmp.eq.s32.totalorder %s13, 0
      %p110 = por %p108, %p109
      %p111 = scmp.ne.s32.totalorder %s103, %s105
      %p112 = scmp.eq.s32.totalorder %s18, 3
      %p113 = por %p111, %p112
      %p114 = scmp.ne.s32.totalorder %s105, %s106
      %p115 = scmp.eq.s32.totalorder %s18, 0
      %p116 = por %p114, %p115
      %p117 = scmp.ne.s32.totalorder %s105, %s106
      %p118 = scmp.eq.s32.totalorder %s19, 3
      %p119 = por %p117, %p118
      %p121 = scmp.ne.s32.totalorder %s106, %s120
      %p122 = scmp.eq.s32.totalorder %s19, 0
      %p123 = por %p121, %p122
      %s124 = ssub.s32 %s20, %s32
      %p125 = scmp.eq.s32.totalorder %s124, 0
      %s127 = sadd.s32 %s126, 1
      %s128 = scalar_select %p125, %s126, %s127
      %p131 = pneg %p125
      %p132 = scmp.eq.s32.totalorder %s13, 3
      %p133 = por %p131, %p132
      %p134 = scmp.ne.s32.totalorder %s126, %s129
      %p135 = scmp.eq.s32.totalorder %s13, 0
      %p136 = por %p134, %p135
      %p137 = scmp.ne.s32.totalorder %s126, %s129
      %p138 = scmp.eq.s32.totalorder %s18, 3
      %p139 = por %p137, %p138
      %p140 = scmp.ne.s32.totalorder %s129, %s130
      %p141 = scmp.eq.s32.totalorder %s18, 0
      %p142 = por %p140, %p141
      %p143 = scmp.ne.s32.totalorder %s129, %s130
      %p144 = scmp.eq.s32.totalorder %s19, 3
      %p145 = por %p143, %p144
      %p147 = scmp.ne.s32.totalorder %s130, %s146
      %p148 = scmp.eq.s32.totalorder %s19, 0
      %p149 = por %p147, %p148
      %p150 = scmp.le.s32.totalorder 1, %s13
      %p151 = scmp.lt.s32.totalorder %s13, 5
      %p152 = pnand %p150, %p151
      %p153 = pneg %p152
      // Predicated region
      $region9: #{tpu_custom_call.1} parent=5 // pred_check
        _
      $region10: #{tpu_custom_call.1} parent=5 // pred_check_branch
        %155 = sbr.rel (%p152) target = $region12
      $region11: #{tpu_custom_call.1} parent=5 // pred_region
        %s156 = ssub.s32 %s13, 1
        // Predicated region
        $region13: #{tpu_custom_call.1} parent=11 // pred_check
          %p157 = pneg %p74
        $region14: #{tpu_custom_call.1} parent=11 // pred_check_branch
          %159 = sbr.rel (%p157) target = $region16
        $region15: #{tpu_custom_call.1} parent=11 // pred_region
          _
        $region16: #{tpu_custom_call.1} parent=11 // pred_fallthru
          _
        // Predicated region
        $region17: #{tpu_custom_call.1} parent=11 // pred_check
          %p160 = pneg %p95
        $region18: #{tpu_custom_call.1} parent=11 // pred_check_branch
          %162 = sbr.rel (%p160) target = $region20
        $region19: #{tpu_custom_call.1} parent=11 // pred_region
          _
        $region20: #{tpu_custom_call.1} parent=11 // pred_fallthru
          _
        // Predicated region
        $region21: #{tpu_custom_call.1} parent=11 // pred_check
          %p163 = pneg %p116
        $region22: #{tpu_custom_call.1} parent=11 // pred_check_branch
          %165 = sbr.rel (%p163) target = $region24
        $region23: #{tpu_custom_call.1} parent=11 // pred_region
          _
        $region24: #{tpu_custom_call.1} parent=11 // pred_fallthru
          _
      $region12: #{tpu_custom_call.1} parent=5 // pred_fallthru
        _
      %p166 = scmp.lt.s32.totalorder %s13, 4
      // Predicated region
      $region25: #{tpu_custom_call.1} parent=5 // pred_check
        %p167 = pneg %p166
      $region26: #{tpu_custom_call.1} parent=5 // pred_check_branch
        %169 = sbr.rel (%p167) target = $region28
      $region27: #{tpu_custom_call.1} parent=5 // pred_region
        // Predicated region
        $region29: #{tpu_custom_call.1} parent=27 // pred_check
          %p170 = pneg %p47
        $region30: #{tpu_custom_call.1} parent=27 // pred_check_branch
          %172 = sbr.rel (%p170) target = $region32
        $region31: #{tpu_custom_call.1} parent=27 // pred_region
          %p173 = scmp.lt.s32.totalorder %s20, 1
          %s174 = scalar_select %p173, %s20, 1
          %p175 = scmp.lt.s32.totalorder %s21, 1
          %s176 = scalar_select %p175, %s21, 1
          %s177 = smul.addr %s176, 30
          %s178 = smul.addr %s174, 60
          %s179 = sadd.s32 %s177, %s178
          %s180 = smul.addr %s179, 4
          %s181 = scalar_lea.vmem %s0, %s180
        $region32: #{tpu_custom_call.1} parent=27 // pred_fallthru
          _
      $region28: #{tpu_custom_call.1} parent=5 // pred_fallthru
        _
      %p182 = scmp.le.s32.totalorder 1, %s13
      %p183 = scmp.lt.s32.totalorder %s13, 5
      %p184 = pnand %p182, %p183
      %p185 = pneg %p184
      // Predicated region
      $region33: #{tpu_custom_call.1} parent=5 // pred_check
        _
      $region34: #{tpu_custom_call.1} parent=5 // pred_check_branch
        %187 = sbr.rel (%p184) target = $region36
      $region35: #{tpu_custom_call.1} parent=5 // pred_region
        %s188 = ssub.s32 %s13, 1
        %p189 = scmp.lt.s32.totalorder %s22, 1
        %s190 = scalar_select %p189, %s22, 1
        %p191 = scmp.lt.s32.totalorder %s23, 1
        %s192 = scalar_select %p191, %s23, 1
        %s193 = smul.addr %s192, 30
        %s194 = smul.addr %s190, 60
        %s195 = sadd.s32 %s193, %s194
        %s196 = smul.addr %s195, 4
        %s197 = scalar_lea.vmem %s0, %s196
        %p198 = pneg %p53
        %p199 = pneg %p50
        %p200 = pneg %p74
        %p201 = pneg %p71
        %p202 = pneg %p95
        %p203 = pneg %p92
        %p204 = pneg %p116
        %p205 = pneg %p113
        %p206 = pneg %p142
        %p207 = pneg %p139
        %s208 = sand.u32 %s129, 1
        %s209 = scalar_lea.sflag [#allocation5], %s208
        %s210 = sand.u32 %s129, 1
        %s211 = smul.addr %s210, 16
        %s212 = scalar_lea.vmem [#allocation4], %s211
        %p213 = scmp.lt.s32.totalorder %s22, 1
        %s214 = scalar_select %p213, %s22, 1
        %p215 = scmp.lt.s32.totalorder %s23, 1
        %s216 = scalar_select %p215, %s23, 1
        %s217 = smul.addr %s216, 30
        %s218 = smul.addr %s214, 60
        %s219 = sadd.s32 %s217, %s218
        %s220 = smul.addr %s219, 4
        %s221 = scalar_lea.vmem %s0, %s220
        %p222 = scmp.eq.s32.totalorder %s23, 0
        // Predicated region
        $region37: #{tpu_custom_call.1} parent=35 // pred_check
          %p223 = pneg %p222
        $region38: #{tpu_custom_call.1} parent=35 // pred_check_branch
          %225 = sbr.rel (%p223) target = $region40
        $region39: #{tpu_custom_call.1} parent=35 // pred_region
          %226 = vst [vmem:[#allocation3] sm:$0x1] 0.0
        $region40: #{tpu_custom_call.1} parent=35 // pred_fallthru
          _
        %v227 = vld [vmem:[%s221] sm:$0xf]
        %v228 = vld [vmem:[%s221 + $0x4] sm:$0xf]
        %v229 = vld [vmem:[%s221 + $0xc] sm:$0xf]
        %v230 = vld [vmem:[%s221 + $0x10] sm:$0xf]
        %v231 = vld [vmem:[%s221 + $0x18] sm:$0xf]
        %v232 = vld [vmem:[%s221 + $0x1c] sm:$0xf]
        %v233 = vld [vmem:[%s221 + $0x24] sm:$0xf]
        %v234 = vld [vmem:[%s221 + $0x28] sm:$0xf]
        %v235 = vld [vmem:[%s221 + $0x30] sm:$0xf]
        %v236 = vld [vmem:[%s221 + $0x34] sm:$0xf]
        %v237 = vld [vmem:[%s221 + $0x3c] sm:$0xf]
        %v238 = vld [vmem:[%s221 + $0x40] sm:$0xf]
        %v239 = vld [vmem:[%s221 + $0x48] sm:$0xf]
        %v240 = vld [vmem:[%s221 + $0x4c] sm:$0xf]
        %v241 = vld [vmem:[%s221 + $0x54] sm:$0xf]
        %v242 = vld [vmem:[%s221 + $0x58] sm:$0xf]
        %v243 = vld [vmem:[%s221 + $0x8] sm:$0x1]
        %v244 = vld [vmem:[%s221 + $0x14] sm:$0x1]
        %v245 = vld [vmem:[%s221 + $0x20] sm:$0x1]
        %v246 = vld [vmem:[%s221 + $0x2c] sm:$0x1]
        %v247 = vld [vmem:[%s221 + $0x38] sm:$0x1]
        %v248 = vld [vmem:[%s221 + $0x44] sm:$0x1]
        %v249 = vld [vmem:[%s221 + $0x50] sm:$0x1]
        %v250 = vld [vmem:[%s221 + $0x5c] sm:$0x1]
        %vm251 = vsmask.f32 3328
        %vm252 = vsmask.f32 7440
        %vm253 = vmor %vm251, %vm252
        %v255 = vshrl.u32 %v227, 16
        %v257 = vrot.slane %v255, 4
        %v258 = vshll.u32 %v227, 16
        %v260 = vrot.slane %v258, 5
        %v261 = vor.u32 %v257, %v260
        %v262 = vrot.slane %v261, 4
        %v264 = vshll.u32 %v228, 16
        %v266 = vrot.slane %v264, 5
        %v267 = vsel %vm253, %v262, %v266
        %v268 = vshrl.u32 %v228, 16
        %v270 = vrot.slane %v268, 4
        %v271 = vor.u32 %v270, %v266
        %v272 = vrot.slane %v271, 4
        %v274 = vshll.u32 %v243, 16
        %v276 = vrot.slane %v274, 5
        %v277 = vsel %vm253, %v272, %v276
        %v279 = vshrl.u32 %v229, 16
        %v281 = vrot.slane %v279, 4
        %v282 = vshll.u32 %v229, 16
        %v284 = vrot.slane %v282, 5
        %v285 = vor.u32 %v281, %v284
        %v286 = vrot.slane %v285, 4
        %v288 = vshll.u32 %v230, 16
        %v290 = vrot.slane %v288, 5
        %v291 = vsel %vm253, %v286, %v290
        %v292 = vshrl.u32 %v230, 16
        %v294 = vrot.slane %v292, 4
        %v295 = vor.u32 %v294, %v290
        %v296 = vrot.slane %v295, 4
        %v298 = vshll.u32 %v244, 16
        %v300 = vrot.slane %v298, 5
        %v301 = vsel %vm253, %v296, %v300
        %v303 = vshrl.u32 %v231, 16
        %v305 = vrot.slane %v303, 4
        %v306 = vshll.u32 %v231, 16
        %v308 = vrot.slane %v306, 5
        %v309 = vor.u32 %v305, %v308
        %v310 = vrot.slane %v309, 4
        %v312 = vshll.u32 %v232, 16
        %v314 = vrot.slane %v312, 5
        %v315 = vsel %vm253, %v310, %v314
        %v316 = vshrl.u32 %v232, 16
        %v318 = vrot.slane %v316, 4
        %v319 = vor.u32 %v318, %v314
        %v320 = vrot.slane %v319, 4
        %v322 = vshll.u32 %v245, 16
        %v324 = vrot.slane %v322, 5
        %v325 = vsel %vm253, %v320, %v324
        %v327 = vshrl.u32 %v233, 16
        %v329 = vrot.slane %v327, 4
        %v330 = vshll.u32 %v233, 16
        %v332 = vrot.slane %v330, 5
        %v333 = vor.u32 %v329, %v332
        %v334 = vrot.slane %v333, 4
        %v336 = vshll.u32 %v234, 16
        %v338 = vrot.slane %v336, 5
        %v339 = vsel %vm253, %v334, %v338
        %v340 = vshrl.u32 %v234, 16
        %v342 = vrot.slane %v340, 4
        %v343 = vor.u32 %v342, %v338
        %v344 = vrot.slane %v343, 4
        %v346 = vshll.u32 %v246, 16
        %v348 = vrot.slane %v346, 5
        %v349 = vsel %vm253, %v344, %v348
        %v351 = vshrl.u32 %v235, 16
        %v353 = vrot.slane %v351, 4
        %v354 = vshll.u32 %v235, 16
        %v356 = vrot.slane %v354, 5
        %v357 = vor.u32 %v353, %v356
        %v358 = vrot.slane %v357, 4
        %v360 = vshll.u32 %v236, 16
        %v362 = vrot.slane %v360, 5
        %v363 = vsel %vm253, %v358, %v362
        %v364 = vshrl.u32 %v236, 16
        %v366 = vrot.slane %v364, 4
        %v367 = vor.u32 %v366, %v362
        %v368 = vrot.slane %v367, 4
        %v370 = vshll.u32 %v247, 16
        %v372 = vrot.slane %v370, 5
        %v373 = vsel %vm253, %v368, %v372
        %v375 = vshrl.u32 %v237, 16
        %v377 = vrot.slane %v375, 4
        %v378 = vshll.u32 %v237, 16
        %v380 = vrot.slane %v378, 5
        %v381 = vor.u32 %v377, %v380
        %v382 = vrot.slane %v381, 4
        %v384 = vshll.u32 %v238, 16
        %v386 = vrot.slane %v384, 5
        %v387 = vsel %vm253, %v382, %v386
        %v388 = vshrl.u32 %v238, 16
        %v390 = vrot.slane %v388, 4
        %v391 = vor.u32 %v390, %v386
        %v392 = vrot.slane %v391, 4
        %v394 = vshll.u32 %v248, 16
        %v396 = vrot.slane %v394, 5
        %v397 = vsel %vm253, %v392, %v396
        %v399 = vshrl.u32 %v239, 16
        %v401 = vrot.slane %v399, 4
        %v402 = vshll.u32 %v239, 16
        %v404 = vrot.slane %v402, 5
        %v405 = vor.u32 %v401, %v404
        %v406 = vrot.slane %v405, 4
        %v408 = vshll.u32 %v240, 16
        %v410 = vrot.slane %v408, 5
        %v411 = vsel %vm253, %v406, %v410
        %v412 = vshrl.u32 %v240, 16
        %v414 = vrot.slane %v412, 4
        %v415 = vor.u32 %v414, %v410
        %v416 = vrot.slane %v415, 4
        %v418 = vshll.u32 %v249, 16
        %v420 = vrot.slane %v418, 5
        %v421 = vsel %vm253, %v416, %v420
        %v423 = vshrl.u32 %v241, 16
        %v425 = vrot.slane %v423, 4
        %v426 = vshll.u32 %v241, 16
        %v428 = vrot.slane %v426, 5
        %v429 = vor.u32 %v425, %v428
        %v430 = vrot.slane %v429, 4
        %v432 = vshll.u32 %v242, 16
        %v434 = vrot.slane %v432, 5
        %v435 = vsel %vm253, %v430, %v434
        %v436 = vshrl.u32 %v242, 16
        %v438 = vrot.slane %v436, 4
        %v439 = vor.u32 %v438, %v434
        %v440 = vrot.slane %v439, 4
        %v442 = vshll.u32 %v250, 16
        %v444 = vrot.slane %v442, 5
        %v445 = vsel %vm253, %v440, %v444
        %v446 = vld [vmem:[%s221] sm:$0xe]
        %v447 = vld [vmem:[%s221 + $0xc] sm:$0xe]
        %v448 = vld [vmem:[%s221 + $0x18] sm:$0xe]
        %v449 = vld [vmem:[%s221 + $0x24] sm:$0xe]
        %v450 = vld [vmem:[%s221 + $0x30] sm:$0xe]
        %v451 = vld [vmem:[%s221 + $0x3c] sm:$0xe]
        %v452 = vld [vmem:[%s221 + $0x48] sm:$0xe]
        %v453 = vld [vmem:[%s221 + $0x54] sm:$0xe]
        %vm478 = vcmask 1042432
        %vm479 = vcmask 1046532
        %vm480 = vmor %vm478, %vm479
        %v481 = vrot.slane %v446, 5
        %v482 = vrot.slane %v481, 4
        %v483 = vrot.slane %v228, 5
        %v484 = vsel %vm480, %v482, %v483
        %v485 = vrot.slane %v483, 4
        %v486 = vrot.slane %v243, 5
        %v487 = vsel %vm480, %v485, %v486
        %v488 = vrot.slane %v447, 5
        %v489 = vrot.slane %v488, 4
        %v490 = vrot.slane %v230, 5
        %v491 = vsel %vm480, %v489, %v490
        %v492 = vrot.slane %v490, 4
        %v493 = vrot.slane %v244, 5
        %v494 = vsel %vm480, %v492, %v493
        %v495 = vrot.slane %v448, 5
        %v496 = vrot.slane %v495, 4
        %v497 = vrot.slane %v232, 5
        %v498 = vsel %vm480, %v496, %v497
        %v499 = vrot.slane %v497, 4
        %v500 = vrot.slane %v245, 5
        %v501 = vsel %vm480, %v499, %v500
        %v502 = vrot.slane %v449, 5
        %v503 = vrot.slane %v502, 4
        %v504 = vrot.slane %v234, 5
        %v505 = vsel %vm480, %v503, %v504
        %v506 = vrot.slane %v504, 4
        %v507 = vrot.slane %v246, 5
        %v508 = vsel %vm480, %v506, %v507
        %v509 = vrot.slane %v450, 5
        %v510 = vrot.slane %v509, 4
        %v511 = vrot.slane %v236, 5
        %v512 = vsel %vm480, %v510, %v511
        %v513 = vrot.slane %v511, 4
        %v514 = vrot.slane %v247, 5
        %v515 = vsel %vm480, %v513, %v514
        %v516 = vrot.slane %v451, 5
        %v517 = vrot.slane %v516, 4
        %v518 = vrot.slane %v238, 5
        %v519 = vsel %vm480, %v517, %v518
        %v520 = vrot.slane %v518, 4
        %v521 = vrot.slane %v248, 5
        %v522 = vsel %vm480, %v520, %v521
        %v523 = vrot.slane %v452, 5
        %v524 = vrot.slane %v523, 4
        %v525 = vrot.slane %v240, 5
        %v526 = vsel %vm480, %v524, %v525
        %v527 = vrot.slane %v525, 4
        %v528 = vrot.slane %v249, 5
        %v529 = vsel %vm480, %v527, %v528
        %v530 = vrot.slane %v453, 5
        %v531 = vrot.slane %v530, 4
        %v532 = vrot.slane %v242, 5
        %v533 = vsel %vm480, %v531, %v532
        %v534 = vrot.slane %v532, 4
        %v535 = vrot.slane %v250, 5
        %v536 = vsel %vm480, %v534, %v535
        %s537 = scalar_lea.vmem %s221, 12
        %v538 = vld [vmem:[%s537] sm:$0xf]
        %v539 = vld [vmem:[%s537 + $0x4] sm:$0xf]
        %v540 = vld [vmem:[%s537 + $0xc] sm:$0xf]
        %v541 = vld [vmem:[%s537 + $0x10] sm:$0xf]
        %v542 = vld [vmem:[%s537 + $0x18] sm:$0xf]
        %v543 = vld [vmem:[%s537 + $0x1c] sm:$0xf]
        %v544 = vld [vmem:[%s537 + $0x24] sm:$0xf]
        %v545 = vld [vmem:[%s537 + $0x28] sm:$0xf]
        %v546 = vld [vmem:[%s537 + $0x30] sm:$0xf]
        %v547 = vld [vmem:[%s537 + $0x34] sm:$0xf]
        %v548 = vld [vmem:[%s537 + $0x3c] sm:$0xf]
        %v549 = vld [vmem:[%s537 + $0x40] sm:$0xf]
        %v550 = vld [vmem:[%s537 + $0x48] sm:$0xf]
        %v551 = vld [vmem:[%s537 + $0x4c] sm:$0xf]
        %v552 = vld [vmem:[%s537 + $0x54] sm:$0xf]
        %v553 = vld [vmem:[%s537 + $0x58] sm:$0xf]
        %v554 = vld [vmem:[%s537 + $0x8] sm:$0x1]
        %v555 = vld [vmem:[%s537 + $0x14] sm:$0x1]
        %v556 = vld [vmem:[%s537 + $0x20] sm:$0x1]
        %v557 = vld [vmem:[%s537 + $0x2c] sm:$0x1]
        %v558 = vld [vmem:[%s537 + $0x38] sm:$0x1]
        %v559 = vld [vmem:[%s537 + $0x44] sm:$0x1]
        %v560 = vld [vmem:[%s537 + $0x50] sm:$0x1]
        %v561 = vld [vmem:[%s537 + $0x5c] sm:$0x1]
        %v563 = vshrl.u32 %v538, 16
        %v565 = vrot.slane %v563, 4
        %v566 = vshll.u32 %v538, 16
        %v568 = vrot.slane %v566, 5
        %v569 = vor.u32 %v565, %v568
        %v570 = vrot.slane %v569, 4
        %v572 = vshll.u32 %v539, 16
        %v574 = vrot.slane %v572, 5
        %v575 = vsel %vm253, %v570, %v574
        %v576 = vshrl.u32 %v539, 16
        %v578 = vrot.slane %v576, 4
        %v579 = vor.u32 %v578, %v574
        %v580 = vrot.slane %v579, 4
        %v582 = vshll.u32 %v554, 16
        %v584 = vrot.slane %v582, 5
        %v585 = vsel %vm253, %v580, %v584
        %v587 = vshrl.u32 %v540, 16
        %v589 = vrot.slane %v587, 4
        %v590 = vshll.u32 %v540, 16
        %v592 = vrot.slane %v590, 5
        %v593 = vor.u32 %v589, %v592
        %v594 = vrot.slane %v593, 4
        %v596 = vshll.u32 %v541, 16
        %v598 = vrot.slane %v596, 5
        %v599 = vsel %vm253, %v594, %v598
        %v600 = vshrl.u32 %v541, 16
        %v602 = vrot.slane %v600, 4
        %v603 = vor.u32 %v602, %v598
        %v604 = vrot.slane %v603, 4
        %v606 = vshll.u32 %v555, 16
        %v608 = vrot.slane %v606, 5
        %v609 = vsel %vm253, %v604, %v608
        %v611 = vshrl.u32 %v542, 16
        %v613 = vrot.slane %v611, 4
        %v614 = vshll.u32 %v542, 16
        %v616 = vrot.slane %v614, 5
        %v617 = vor.u32 %v613, %v616
        %v618 = vrot.slane %v617, 4
        %v620 = vshll.u32 %v543, 16
        %v622 = vrot.slane %v620, 5
        %v623 = vsel %vm253, %v618, %v622
        %v624 = vshrl.u32 %v543, 16
        %v626 = vrot.slane %v624, 4
        %v627 = vor.u32 %v626, %v622
        %v628 = vrot.slane %v627, 4
        %v630 = vshll.u32 %v556, 16
        %v632 = vrot.slane %v630, 5
        %v633 = vsel %vm253, %v628, %v632
        %v635 = vshrl.u32 %v544, 16
        %v637 = vrot.slane %v635, 4
        %v638 = vshll.u32 %v544, 16
        %v640 = vrot.slane %v638, 5
        %v641 = vor.u32 %v637, %v640
        %v642 = vrot.slane %v641, 4
        %v644 = vshll.u32 %v545, 16
        %v646 = vrot.slane %v644, 5
        %v647 = vsel %vm253, %v642, %v646
        %v648 = vshrl.u32 %v545, 16
        %v650 = vrot.slane %v648, 4
        %v651 = vor.u32 %v650, %v646
        %v652 = vrot.slane %v651, 4
        %v654 = vshll.u32 %v557, 16
        %v656 = vrot.slane %v654, 5
        %v657 = vsel %vm253, %v652, %v656
        %v659 = vshrl.u32 %v546, 16
        %v661 = vrot.slane %v659, 4
        %v662 = vshll.u32 %v546, 16
        %v664 = vrot.slane %v662, 5
        %v665 = vor.u32 %v661, %v664
        %v666 = vrot.slane %v665, 4
        %v668 = vshll.u32 %v547, 16
        %v670 = vrot.slane %v668, 5
        %v671 = vsel %vm253, %v666, %v670
        %v672 = vshrl.u32 %v547, 16
        %v674 = vrot.slane %v672, 4
        %v675 = vor.u32 %v674, %v670
        %v676 = vrot.slane %v675, 4
        %v678 = vshll.u32 %v558, 16
        %v680 = vrot.slane %v678, 5
        %v681 = vsel %vm253, %v676, %v680
        %v683 = vshrl.u32 %v548, 16
        %v685 = vrot.slane %v683, 4
        %v686 = vshll.u32 %v548, 16
        %v688 = vrot.slane %v686, 5
        %v689 = vor.u32 %v685, %v688
        %v690 = vrot.slane %v689, 4
        %v692 = vshll.u32 %v549, 16
        %v694 = vrot.slane %v692, 5
        %v695 = vsel %vm253, %v690, %v694
        %v696 = vshrl.u32 %v549, 16
        %v698 = vrot.slane %v696, 4
        %v699 = vor.u32 %v698, %v694
        %v700 = vrot.slane %v699, 4
        %v702 = vshll.u32 %v559, 16
        %v704 = vrot.slane %v702, 5
        %v705 = vsel %vm253, %v700, %v704
        %v707 = vshrl.u32 %v550, 16
        %v709 = vrot.slane %v707, 4
        %v710 = vshll.u32 %v550, 16
        %v712 = vrot.slane %v710, 5
        %v713 = vor.u32 %v709, %v712
        %v714 = vrot.slane %v713, 4
        %v716 = vshll.u32 %v551, 16
        %v718 = vrot.slane %v716, 5
        %v719 = vsel %vm253, %v714, %v718
        %v720 = vshrl.u32 %v551, 16
        %v722 = vrot.slane %v720, 4
        %v723 = vor.u32 %v722, %v718
        %v724 = vrot.slane %v723, 4
        %v726 = vshll.u32 %v560, 16
        %v728 = vrot.slane %v726, 5
        %v729 = vsel %vm253, %v724, %v728
        %v731 = vshrl.u32 %v552, 16
        %v733 = vrot.slane %v731, 4
        %v734 = vshll.u32 %v552, 16
        %v736 = vrot.slane %v734, 5
        %v737 = vor.u32 %v733, %v736
        %v738 = vrot.slane %v737, 4
        %v740 = vshll.u32 %v553, 16
        %v742 = vrot.slane %v740, 5
        %v743 = vsel %vm253, %v738, %v742
        %v744 = vshrl.u32 %v553, 16
        %v746 = vrot.slane %v744, 4
        %v747 = vor.u32 %v746, %v742
        %v748 = vrot.slane %v747, 4
        %v750 = vshll.u32 %v561, 16
        %v752 = vrot.slane %v750, 5
        %v753 = vsel %vm253, %v748, %v752
        %v754 = vld [vmem:[%s537] sm:$0xe]
        %v755 = vld [vmem:[%s537 + $0xc] sm:$0xe]
        %v756 = vld [vmem:[%s537 + $0x18] sm:$0xe]
        %v757 = vld [vmem:[%s537 + $0x24] sm:$0xe]
        %v758 = vld [vmem:[%s537 + $0x30] sm:$0xe]
        %v759 = vld [vmem:[%s537 + $0x3c] sm:$0xe]
        %v760 = vld [vmem:[%s537 + $0x48] sm:$0xe]
        %v761 = vld [vmem:[%s537 + $0x54] sm:$0xe]
        %v786 = vrot.slane %v754, 5
        %v787 = vrot.slane %v786, 4
        %v788 = vrot.slane %v539, 5
        %v789 = vsel %vm480, %v787, %v788
        %v790 = vrot.slane %v788, 4
        %v791 = vrot.slane %v554, 5
        %v792 = vsel %vm480, %v790, %v791
        %v793 = vrot.slane %v755, 5
        %v794 = vrot.slane %v793, 4
        %v795 = vrot.slane %v541, 5
        %v796 = vsel %vm480, %v794, %v795
        %v797 = vrot.slane %v795, 4
        %v798 = vrot.slane %v555, 5
        %v799 = vsel %vm480, %v797, %v798
        %v800 = vrot.slane %v756, 5
        %v801 = vrot.slane %v800, 4
        %v802 = vrot.slane %v543, 5
        %v803 = vsel %vm480, %v801, %v802
        %v804 = vrot.slane %v802, 4
        %v805 = vrot.slane %v556, 5
        %v806 = vsel %vm480, %v804, %v805
        %v807 = vrot.slane %v757, 5
        %v808 = vrot.slane %v807, 4
        %v809 = vrot.slane %v545, 5
        %v810 = vsel %vm480, %v808, %v809
        %v811 = vrot.slane %v809, 4
        %v812 = vrot.slane %v557, 5
        %v813 = vsel %vm480, %v811, %v812
        %v814 = vrot.slane %v758, 5
        %v815 = vrot.slane %v814, 4
        %v816 = vrot.slane %v547, 5
        %v817 = vsel %vm480, %v815, %v816
        %v818 = vrot.slane %v816, 4
        %v819 = vrot.slane %v558, 5
        %v820 = vsel %vm480, %v818, %v819
        %v821 = vrot.slane %v759, 5
        %v822 = vrot.slane %v821, 4
        %v823 = vrot.slane %v549, 5
        %v824 = vsel %vm480, %v822, %v823
        %v825 = vrot.slane %v823, 4
        %v826 = vrot.slane %v559, 5
        %v827 = vsel %vm480, %v825, %v826
        %v828 = vrot.slane %v760, 5
        %v829 = vrot.slane %v828, 4
        %v830 = vrot.slane %v551, 5
        %v831 = vsel %vm480, %v829, %v830
        %v832 = vrot.slane %v830, 4
        %v833 = vrot.slane %v560, 5
        %v834 = vsel %vm480, %v832, %v833
        %v835 = vrot.slane %v761, 5
        %v836 = vrot.slane %v835, 4
        %v837 = vrot.slane %v553, 5
        %v838 = vsel %vm480, %v836, %v837
        %v839 = vrot.slane %v837, 4
        %v840 = vrot.slane %v561, 5
        %v841 = vsel %vm480, %v839, %v840
        %s842 = scalar_lea.vmem %s221, 24
        %v843 = vld [vmem:[%s842] sm:$0xf]
        %v844 = vld [vmem:[%s842 + $0x4] sm:$0xf]
        %v845 = vld [vmem:[%s842 + $0xc] sm:$0xf]
        %v846 = vld [vmem:[%s842 + $0x10] sm:$0xf]
        %v847 = vld [vmem:[%s842 + $0x18] sm:$0xf]
        %v848 = vld [vmem:[%s842 + $0x1c] sm:$0xf]
        %v849 = vld [vmem:[%s842 + $0x24] sm:$0xf]
        %v850 = vld [vmem:[%s842 + $0x28] sm:$0xf]
        %v851 = vld [vmem:[%s842 + $0x30] sm:$0xf]
        %v852 = vld [vmem:[%s842 + $0x34] sm:$0xf]
        %v853 = vld [vmem:[%s842 + $0x3c] sm:$0xf]
        %v854 = vld [vmem:[%s842 + $0x40] sm:$0xf]
        %v855 = vld [vmem:[%s842 + $0x48] sm:$0xf]
        %v856 = vld [vmem:[%s842 + $0x4c] sm:$0xf]
        %v857 = vld [vmem:[%s842 + $0x54] sm:$0xf]
        %v858 = vld [vmem:[%s842 + $0x58] sm:$0xf]
        %v859 = vld [vmem:[%s842 + $0x8] sm:$0x1]
        %v860 = vld [vmem:[%s842 + $0x14] sm:$0x1]
        %v861 = vld [vmem:[%s842 + $0x20] sm:$0x1]
        %v862 = vld [vmem:[%s842 + $0x2c] sm:$0x1]
        %v863 = vld [vmem:[%s842 + $0x38] sm:$0x1]
        %v864 = vld [vmem:[%s842 + $0x44] sm:$0x1]
        %v865 = vld [vmem:[%s842 + $0x50] sm:$0x1]
        %v866 = vld [vmem:[%s842 + $0x5c] sm:$0x1]
        %v868 = vshrl.u32 %v843, 16
        %v870 = vrot.slane %v868, 4
        %v871 = vshll.u32 %v843, 16
        %v873 = vrot.slane %v871, 5
        %v874 = vor.u32 %v870, %v873
        %v875 = vrot.slane %v874, 4
        %v877 = vshll.u32 %v844, 16
        %v879 = vrot.slane %v877, 5
        %v880 = vsel %vm253, %v875, %v879
        %v881 = vshrl.u32 %v844, 16
        %v883 = vrot.slane %v881, 4
        %v884 = vor.u32 %v883, %v879
        %v885 = vrot.slane %v884, 4
        %v887 = vshll.u32 %v859, 16
        %v889 = vrot.slane %v887, 5
        %v890 = vsel %vm253, %v885, %v889
        %v892 = vshrl.u32 %v845, 16
        %v894 = vrot.slane %v892, 4
        %v895 = vshll.u32 %v845, 16
        %v897 = vrot.slane %v895, 5
        %v898 = vor.u32 %v894, %v897
        %v899 = vrot.slane %v898, 4
        %v901 = vshll.u32 %v846, 16
        %v903 = vrot.slane %v901, 5
        %v904 = vsel %vm253, %v899, %v903
        %v905 = vshrl.u32 %v846, 16
        %v907 = vrot.slane %v905, 4
        %v908 = vor.u32 %v907, %v903
        %v909 = vrot.slane %v908, 4
        %v911 = vshll.u32 %v860, 16
        %v913 = vrot.slane %v911, 5
        %v914 = vsel %vm253, %v909, %v913
        %v916 = vshrl.u32 %v847, 16
        %v918 = vrot.slane %v916, 4
        %v919 = vshll.u32 %v847, 16
        %v921 = vrot.slane %v919, 5
        %v922 = vor.u32 %v918, %v921
        %v923 = vrot.slane %v922, 4
        %v925 = vshll.u32 %v848, 16
        %v927 = vrot.slane %v925, 5
        %v928 = vsel %vm253, %v923, %v927
        %v929 = vshrl.u32 %v848, 16
        %v931 = vrot.slane %v929, 4
        %v932 = vor.u32 %v931, %v927
        %v933 = vrot.slane %v932, 4
        %v935 = vshll.u32 %v861, 16
        %v937 = vrot.slane %v935, 5
        %v938 = vsel %vm253, %v933, %v937
        %v940 = vshrl.u32 %v849, 16
        %v942 = vrot.slane %v940, 4
        %v943 = vshll.u32 %v849, 16
        %v945 = vrot.slane %v943, 5
        %v946 = vor.u32 %v942, %v945
        %v947 = vrot.slane %v946, 4
        %v949 = vshll.u32 %v850, 16
        %v951 = vrot.slane %v949, 5
        %v952 = vsel %vm253, %v947, %v951
        %v953 = vshrl.u32 %v850, 16
        %v955 = vrot.slane %v953, 4
        %v956 = vor.u32 %v955, %v951
        %v957 = vrot.slane %v956, 4
        %v959 = vshll.u32 %v862, 16
        %v961 = vrot.slane %v959, 5
        %v962 = vsel %vm253, %v957, %v961
        %v964 = vshrl.u32 %v851, 16
        %v966 = vrot.slane %v964, 4
        %v967 = vshll.u32 %v851, 16
        %v969 = vrot.slane %v967, 5
        %v970 = vor.u32 %v966, %v969
        %v971 = vrot.slane %v970, 4
        %v973 = vshll.u32 %v852, 16
        %v975 = vrot.slane %v973, 5
        %v976 = vsel %vm253, %v971, %v975
        %v977 = vshrl.u32 %v852, 16
        %v979 = vrot.slane %v977, 4
        %v980 = vor.u32 %v979, %v975
        %v981 = vrot.slane %v980, 4
        %v983 = vshll.u32 %v863, 16
        %v985 = vrot.slane %v983, 5
        %v986 = vsel %vm253, %v981, %v985
        %v988 = vshrl.u32 %v853, 16
        %v990 = vrot.slane %v988, 4
        %v991 = vshll.u32 %v853, 16
        %v993 = vrot.slane %v991, 5
        %v994 = vor.u32 %v990, %v993
        %v995 = vrot.slane %v994, 4
        %v997 = vshll.u32 %v854, 16
        %v999 = vrot.slane %v997, 5
        %v1000 = vsel %vm253, %v995, %v999
        %v1001 = vshrl.u32 %v854, 16
        %v1003 = vrot.slane %v1001, 4
        %v1004 = vor.u32 %v1003, %v999
        %v1005 = vrot.slane %v1004, 4
        %v1007 = vshll.u32 %v864, 16
        %v1009 = vrot.slane %v1007, 5
        %v1010 = vsel %vm253, %v1005, %v1009
        %v1012 = vshrl.u32 %v855, 16
        %v1014 = vrot.slane %v1012, 4
        %v1015 = vshll.u32 %v855, 16
        %v1017 = vrot.slane %v1015, 5
        %v1018 = vor.u32 %v1014, %v1017
        %v1019 = vrot.slane %v1018, 4
        %v1021 = vshll.u32 %v856, 16
        %v1023 = vrot.slane %v1021, 5
        %v1024 = vsel %vm253, %v1019, %v1023
        %v1025 = vshrl.u32 %v856, 16
        %v1027 = vrot.slane %v1025, 4
        %v1028 = vor.u32 %v1027, %v1023
        %v1029 = vrot.slane %v1028, 4
        %v1031 = vshll.u32 %v865, 16
        %v1033 = vrot.slane %v1031, 5
        %v1034 = vsel %vm253, %v1029, %v1033
        %v1036 = vshrl.u32 %v857, 16
        %v1038 = vrot.slane %v1036, 4
        %v1039 = vshll.u32 %v857, 16
        %v1041 = vrot.slane %v1039, 5
        %v1042 = vor.u32 %v1038, %v1041
        %v1043 = vrot.slane %v1042, 4
        %v1045 = vshll.u32 %v858, 16
        %v1047 = vrot.slane %v1045, 5
        %v1048 = vsel %vm253, %v1043, %v1047
        %v1049 = vshrl.u32 %v858, 16
        %v1051 = vrot.slane %v1049, 4
        %v1052 = vor.u32 %v1051, %v1047
        %v1053 = vrot.slane %v1052, 4
        %v1055 = vshll.u32 %v866, 16
        %v1057 = vrot.slane %v1055, 5
        %v1058 = vsel %vm253, %v1053, %v1057
        %v1059 = vld [vmem:[%s842] sm:$0xe]
        %v1060 = vld [vmem:[%s842 + $0xc] sm:$0xe]
        %v1061 = vld [vmem:[%s842 + $0x18] sm:$0xe]
        %v1062 = vld [vmem:[%s842 + $0x24] sm:$0xe]
        %v1063 = vld [vmem:[%s842 + $0x30] sm:$0xe]
        %v1064 = vld [vmem:[%s842 + $0x3c] sm:$0xe]
        %v1065 = vld [vmem:[%s842 + $0x48] sm:$0xe]
        %v1066 = vld [vmem:[%s842 + $0x54] sm:$0xe]
        %v1091 = vrot.slane %v1059, 5
        %v1092 = vrot.slane %v1091, 4
        %v1093 = vrot.slane %v844, 5
        %v1094 = vsel %vm480, %v1092, %v1093
        %v1095 = vrot.slane %v1093, 4
        %v1096 = vrot.slane %v859, 5
        %v1097 = vsel %vm480, %v1095, %v1096
        %v1098 = vrot.slane %v1060, 5
        %v1099 = vrot.slane %v1098, 4
        %v1100 = vrot.slane %v846, 5
        %v1101 = vsel %vm480, %v1099, %v1100
        %v1102 = vrot.slane %v1100, 4
        %v1103 = vrot.slane %v860, 5
        %v1104 = vsel %vm480, %v1102, %v1103
        %v1105 = vrot.slane %v1061, 5
        %v1106 = vrot.slane %v1105, 4
        %v1107 = vrot.slane %v848, 5
        %v1108 = vsel %vm480, %v1106, %v1107
        %v1109 = vrot.slane %v1107, 4
        %v1110 = vrot.slane %v861, 5
        %v1111 = vsel %vm480, %v1109, %v1110
        %v1112 = vrot.slane %v1062, 5
        %v1113 = vrot.slane %v1112, 4
        %v1114 = vrot.slane %v850, 5
        %v1115 = vsel %vm480, %v1113, %v1114
        %v1116 = vrot.slane %v1114, 4
        %v1117 = vrot.slane %v862, 5
        %v1118 = vsel %vm480, %v1116, %v1117
        %v1119 = vrot.slane %v1063, 5
        %v1120 = vrot.slane %v1119, 4
        %v1121 = vrot.slane %v852, 5
        %v1122 = vsel %vm480, %v1120, %v1121
        %v1123 = vrot.slane %v1121, 4
        %v1124 = vrot.slane %v863, 5
        %v1125 = vsel %vm480, %v1123, %v1124
        %v1126 = vrot.slane %v1064, 5
        %v1127 = vrot.slane %v1126, 4
        %v1128 = vrot.slane %v854, 5
        %v1129 = vsel %vm480, %v1127, %v1128
        %v1130 = vrot.slane %v1128, 4
        %v1131 = vrot.slane %v864, 5
        %v1132 = vsel %vm480, %v1130, %v1131
        %v1133 = vrot.slane %v1065, 5
        %v1134 = vrot.slane %v1133, 4
        %v1135 = vrot.slane %v856, 5
        %v1136 = vsel %vm480, %v1134, %v1135
        %v1137 = vrot.slane %v1135, 4
        %v1138 = vrot.slane %v865, 5
        %v1139 = vsel %vm480, %v1137, %v1138
        %v1140 = vrot.slane %v1066, 5
        %v1141 = vrot.slane %v1140, 4
        %v1142 = vrot.slane %v858, 5
        %v1143 = vsel %vm480, %v1141, %v1142
        %v1144 = vrot.slane %v1142, 4
        %v1145 = vrot.slane %v866, 5
        %v1146 = vsel %vm480, %v1144, %v1145
        %v1155 = vunpack.c.l.b16 %v227
        %v1156 = vunpack.c.l.b16 %v228
        %v1157 = vunpack.c.l.b16 %v229
        %v1158 = vunpack.c.l.b16 %v230
        %v1159 = vunpack.c.l.b16 %v231
        %v1160 = vunpack.c.l.b16 %v232
        %v1161 = vunpack.c.l.b16 %v233
        %v1162 = vunpack.c.l.b16 %v234
        %v1163 = vunpack.c.l.b16 %v235
        %v1164 = vunpack.c.l.b16 %v236
        %v1165 = vunpack.c.l.b16 %v237
        %v1166 = vunpack.c.l.b16 %v238
        %v1167 = vunpack.c.l.b16 %v239
        %v1168 = vunpack.c.l.b16 %v240
        %v1169 = vunpack.c.l.b16 %v241
        %v1170 = vunpack.c.l.b16 %v242
        %v1171 = vpack.c.b16 %v1156, %v1155
        %v1172 = vpack.c.b16 %v1158, %v1157
        %v1173 = vpack.c.b16 %v1160, %v1159
        %v1174 = vpack.c.b16 %v1162, %v1161
        %v1175 = vpack.c.b16 %v1164, %v1163
        %v1176 = vpack.c.b16 %v1166, %v1165
        %v1177 = vpack.c.b16 %v1168, %v1167
        %v1178 = vpack.c.b16 %v1170, %v1169
        %v1187 = vunpack.c.l.b16 %v267
        %v1188 = vunpack.c.l.b16 %v277
        %v1189 = vunpack.c.l.b16 %v291
        %v1190 = vunpack.c.l.b16 %v301
        %v1191 = vunpack.c.l.b16 %v315
        %v1192 = vunpack.c.l.b16 %v325
        %v1193 = vunpack.c.l.b16 %v339
        %v1194 = vunpack.c.l.b16 %v349
        %v1195 = vunpack.c.l.b16 %v363
        %v1196 = vunpack.c.l.b16 %v373
        %v1197 = vunpack.c.l.b16 %v387
        %v1198 = vunpack.c.l.b16 %v397
        %v1199 = vunpack.c.l.b16 %v411
        %v1200 = vunpack.c.l.b16 %v421
        %v1201 = vunpack.c.l.b16 %v435
        %v1202 = vunpack.c.l.b16 %v445
        %v1203 = vpack.c.b16 %v1188, %v1187
        %v1204 = vpack.c.b16 %v1190, %v1189
        %v1205 = vpack.c.b16 %v1192, %v1191
        %v1206 = vpack.c.b16 %v1194, %v1193
        %v1207 = vpack.c.b16 %v1196, %v1195
        %v1208 = vpack.c.b16 %v1198, %v1197
        %v1209 = vpack.c.b16 %v1200, %v1199
        %v1210 = vpack.c.b16 %v1202, %v1201
        %v1219 = vunpack.c.l.b16 %v484
        %v1220 = vunpack.c.l.b16 %v487
        %v1221 = vunpack.c.l.b16 %v491
        %v1222 = vunpack.c.l.b16 %v494
        %v1223 = vunpack.c.l.b16 %v498
        %v1224 = vunpack.c.l.b16 %v501
        %v1225 = vunpack.c.l.b16 %v505
        %v1226 = vunpack.c.l.b16 %v508
        %v1227 = vunpack.c.l.b16 %v512
        %v1228 = vunpack.c.l.b16 %v515
        %v1229 = vunpack.c.l.b16 %v519
        %v1230 = vunpack.c.l.b16 %v522
        %v1231 = vunpack.c.l.b16 %v526
        %v1232 = vunpack.c.l.b16 %v529
        %v1233 = vunpack.c.l.b16 %v533
        %v1234 = vunpack.c.l.b16 %v536
        %v1235 = vpack.c.b16 %v1220, %v1219
        %v1236 = vpack.c.b16 %v1222, %v1221
        %v1237 = vpack.c.b16 %v1224, %v1223
        %v1238 = vpack.c.b16 %v1226, %v1225
        %v1239 = vpack.c.b16 %v1228, %v1227
        %v1240 = vpack.c.b16 %v1230, %v1229
        %v1241 = vpack.c.b16 %v1232, %v1231
        %v1242 = vpack.c.b16 %v1234, %v1233
        %v1259 = vunpack.c.l.b16 %v538
        %v1260 = vunpack.c.l.b16 %v539
        %v1261 = vunpack.c.l.b16 %v540
        %v1262 = vunpack.c.l.b16 %v541
        %v1263 = vunpack.c.l.b16 %v542
        %v1264 = vunpack.c.l.b16 %v543
        %v1265 = vunpack.c.l.b16 %v544
        %v1266 = vunpack.c.l.b16 %v545
        %v1267 = vunpack.c.l.b16 %v546
        %v1268 = vunpack.c.l.b16 %v547
        %v1269 = vunpack.c.l.b16 %v548
        %v1270 = vunpack.c.l.b16 %v549
        %v1271 = vunpack.c.l.b16 %v550
        %v1272 = vunpack.c.l.b16 %v551
        %v1273 = vunpack.c.l.b16 %v552
        %v1274 = vunpack.c.l.b16 %v553
        %v1275 = vpack.c.b16 %v1260, %v1259
        %v1276 = vpack.c.b16 %v1262, %v1261
        %v1277 = vpack.c.b16 %v1264, %v1263
        %v1278 = vpack.c.b16 %v1266, %v1265
        %v1279 = vpack.c.b16 %v1268, %v1267
        %v1280 = vpack.c.b16 %v1270, %v1269
        %v1281 = vpack.c.b16 %v1272, %v1271
        %v1282 = vpack.c.b16 %v1274, %v1273
        %v1291 = vunpack.c.l.b16 %v575
        %v1292 = vunpack.c.l.b16 %v585
        %v1293 = vunpack.c.l.b16 %v599
        %v1294 = vunpack.c.l.b16 %v609
        %v1295 = vunpack.c.l.b16 %v623
        %v1296 = vunpack.c.l.b16 %v633
        %v1297 = vunpack.c.l.b16 %v647
        %v1298 = vunpack.c.l.b16 %v657
        %v1299 = vunpack.c.l.b16 %v671
        %v1300 = vunpack.c.l.b16 %v681
        %v1301 = vunpack.c.l.b16 %v695
        %v1302 = vunpack.c.l.b16 %v705
        %v1303 = vunpack.c.l.b16 %v719
        %v1304 = vunpack.c.l.b16 %v729
        %v1305 = vunpack.c.l.b16 %v743
        %v1306 = vunpack.c.l.b16 %v753
        %v1307 = vpack.c.b16 %v1292, %v1291
        %v1308 = vpack.c.b16 %v1294, %v1293
        %v1309 = vpack.c.b16 %v1296, %v1295
        %v1310 = vpack.c.b16 %v1298, %v1297
        %v1311 = vpack.c.b16 %v1300, %v1299
        %v1312 = vpack.c.b16 %v1302, %v1301
        %v1313 = vpack.c.b16 %v1304, %v1303
        %v1314 = vpack.c.b16 %v1306, %v1305
        %v1323 = vunpack.c.l.b16 %v789
        %v1324 = vunpack.c.l.b16 %v792
        %v1325 = vunpack.c.l.b16 %v796
        %v1326 = vunpack.c.l.b16 %v799
        %v1327 = vunpack.c.l.b16 %v803
        %v1328 = vunpack.c.l.b16 %v806
        %v1329 = vunpack.c.l.b16 %v810
        %v1330 = vunpack.c.l.b16 %v813
        %v1331 = vunpack.c.l.b16 %v817
        %v1332 = vunpack.c.l.b16 %v820
        %v1333 = vunpack.c.l.b16 %v824
        %v1334 = vunpack.c.l.b16 %v827
        %v1335 = vunpack.c.l.b16 %v831
        %v1336 = vunpack.c.l.b16 %v834
        %v1337 = vunpack.c.l.b16 %v838
        %v1338 = vunpack.c.l.b16 %v841
        %v1339 = vpack.c.b16 %v1324, %v1323
        %v1340 = vpack.c.b16 %v1326, %v1325
        %v1341 = vpack.c.b16 %v1328, %v1327
        %v1342 = vpack.c.b16 %v1330, %v1329
        %v1343 = vpack.c.b16 %v1332, %v1331
        %v1344 = vpack.c.b16 %v1334, %v1333
        %v1345 = vpack.c.b16 %v1336, %v1335
        %v1346 = vpack.c.b16 %v1338, %v1337
        %v1363 = vunpack.c.l.b16 %v843
        %v1364 = vunpack.c.l.b16 %v844
        %v1365 = vunpack.c.l.b16 %v845
        %v1366 = vunpack.c.l.b16 %v846
        %v1367 = vunpack.c.l.b16 %v847
        %v1368 = vunpack.c.l.b16 %v848
        %v1369 = vunpack.c.l.b16 %v849
        %v1370 = vunpack.c.l.b16 %v850
        %v1371 = vunpack.c.l.b16 %v851
        %v1372 = vunpack.c.l.b16 %v852
        %v1373 = vunpack.c.l.b16 %v853
        %v1374 = vunpack.c.l.b16 %v854
        %v1375 = vunpack.c.l.b16 %v855
        %v1376 = vunpack.c.l.b16 %v856
        %v1377 = vunpack.c.l.b16 %v857
        %v1378 = vunpack.c.l.b16 %v858
        %v1379 = vpack.c.b16 %v1364, %v1363
        %v1380 = vpack.c.b16 %v1366, %v1365
        %v1381 = vpack.c.b16 %v1368, %v1367
        %v1382 = vpack.c.b16 %v1370, %v1369
        %v1383 = vpack.c.b16 %v1372, %v1371
        %v1384 = vpack.c.b16 %v1374, %v1373
        %v1385 = vpack.c.b16 %v1376, %v1375
        %v1386 = vpack.c.b16 %v1378, %v1377
        %v1395 = vunpack.c.l.b16 %v880
        %v1396 = vunpack.c.l.b16 %v890
        %v1397 = vunpack.c.l.b16 %v904
        %v1398 = vunpack.c.l.b16 %v914
        %v1399 = vunpack.c.l.b16 %v928
        %v1400 = vunpack.c.l.b16 %v938
        %v1401 = vunpack.c.l.b16 %v952
        %v1402 = vunpack.c.l.b16 %v962
        %v1403 = vunpack.c.l.b16 %v976
        %v1404 = vunpack.c.l.b16 %v986
        %v1405 = vunpack.c.l.b16 %v1000
        %v1406 = vunpack.c.l.b16 %v1010
        %v1407 = vunpack.c.l.b16 %v1024
        %v1408 = vunpack.c.l.b16 %v1034
        %v1409 = vunpack.c.l.b16 %v1048
        %v1410 = vunpack.c.l.b16 %v1058
        %v1411 = vpack.c.b16 %v1396, %v1395
        %v1412 = vpack.c.b16 %v1398, %v1397
        %v1413 = vpack.c.b16 %v1400, %v1399
        %v1414 = vpack.c.b16 %v1402, %v1401
        %v1415 = vpack.c.b16 %v1404, %v1403
        %v1416 = vpack.c.b16 %v1406, %v1405
        %v1417 = vpack.c.b16 %v1408, %v1407
        %v1418 = vpack.c.b16 %v1410, %v1409
        %v1427 = vunpack.c.l.b16 %v1094
        %v1428 = vunpack.c.l.b16 %v1097
        %v1429 = vunpack.c.l.b16 %v1101
        %v1430 = vunpack.c.l.b16 %v1104
        %v1431 = vunpack.c.l.b16 %v1108
        %v1432 = vunpack.c.l.b16 %v1111
        %v1433 = vunpack.c.l.b16 %v1115
        %v1434 = vunpack.c.l.b16 %v1118
        %v1435 = vunpack.c.l.b16 %v1122
        %v1436 = vunpack.c.l.b16 %v1125
        %v1437 = vunpack.c.l.b16 %v1129
        %v1438 = vunpack.c.l.b16 %v1132
        %v1439 = vunpack.c.l.b16 %v1136
        %v1440 = vunpack.c.l.b16 %v1139
        %v1441 = vunpack.c.l.b16 %v1143
        %v1442 = vunpack.c.l.b16 %v1146
        %v1443 = vpack.c.b16 %v1428, %v1427
        %v1444 = vpack.c.b16 %v1430, %v1429
        %v1445 = vpack.c.b16 %v1432, %v1431
        %v1446 = vpack.c.b16 %v1434, %v1433
        %v1447 = vpack.c.b16 %v1436, %v1435
        %v1448 = vpack.c.b16 %v1438, %v1437
        %v1449 = vpack.c.b16 %v1440, %v1439
        %v1450 = vpack.c.b16 %v1442, %v1441
        %v1459 = vld [vmem:[%s1] sm:$0xf]
        %v1460 = vld [vmem:[%s1 + $0x4] sm:$0xf]
        %v1461 = vld [vmem:[%s1 + $0x8] sm:$0xf]
        %v1462 = vld [vmem:[%s1 + $0xc] sm:$0xf]
        %v1463 = vld [vmem:[%s1 + $0x10] sm:$0xf]
        %v1464 = vld [vmem:[%s1 + $0x14] sm:$0xf]
        %v1465 = vld [vmem:[%s1 + $0x18] sm:$0xf]
        %v1466 = vld [vmem:[%s1 + $0x1c] sm:$0xf]
        %v1467 = vld [vmem:[%s1 + $0x20] sm:$0xf]
        %v1468 = vld [vmem:[%s1 + $0x24] sm:$0xf]
        %v1469 = vld [vmem:[%s1 + $0x28] sm:$0xf]
        %v1470 = vld [vmem:[%s1 + $0x2c] sm:$0xf]
        %v1471 = vld [vmem:[%s1 + $0x30] sm:$0xf]
        %v1472 = vld [vmem:[%s1 + $0x34] sm:$0xf]
        %v1473 = vld [vmem:[%s1 + $0x38] sm:$0xf]
        %v1474 = vld [vmem:[%s1 + $0x3c] sm:$0xf]
        %v1475 = vld [vmem:[%s1 + $0x40] sm:$0xf]
        %v1476 = vld [vmem:[%s1 + $0x44] sm:$0xf]
        %v1477 = vld [vmem:[%s1 + $0x48] sm:$0xf]
        %v1478 = vld [vmem:[%s1 + $0x4c] sm:$0xf]
        %v1479 = vld [vmem:[%s1 + $0x50] sm:$0xf]
        %v1480 = vld [vmem:[%s1 + $0x54] sm:$0xf]
        %v1481 = vld [vmem:[%s1 + $0x58] sm:$0xf]
        %v1482 = vld [vmem:[%s1 + $0x5c] sm:$0xf]
        %v1483 = vld [vmem:[%s1 + $0x60] sm:$0xf]
        %v1484 = vld [vmem:[%s1 + $0x64] sm:$0xf]
        %v1485 = vld [vmem:[%s1 + $0x68] sm:$0xf]
        %v1486 = vld [vmem:[%s1 + $0x6c] sm:$0xf]
        %v1487 = vld [vmem:[%s1 + $0x70] sm:$0xf]
        %v1488 = vld [vmem:[%s1 + $0x74] sm:$0xf]
        %v1489 = vld [vmem:[%s1 + $0x78] sm:$0xf]
        %v1490 = vld [vmem:[%s1 + $0x7c] sm:$0xf]
        %v1491 = vld [vmem:[%s1 + $0x80] sm:$0xf]
        %v1492 = vld [vmem:[%s1 + $0x84] sm:$0xf]
        %v1493 = vld [vmem:[%s1 + $0x88] sm:$0xf]
        %v1494 = vld [vmem:[%s1 + $0x8c] sm:$0xf]
        %v1495 = vld [vmem:[%s1 + $0x90] sm:$0xf]
        %v1496 = vld [vmem:[%s1 + $0x94] sm:$0xf]
        %v1497 = vld [vmem:[%s1 + $0x98] sm:$0xf]
        %v1498 = vld [vmem:[%s1 + $0x9c] sm:$0xf]
        %v1499 = vld [vmem:[%s1 + $0xa0] sm:$0xf]
        %v1500 = vld [vmem:[%s1 + $0xa4] sm:$0xf]
        %v1501 = vld [vmem:[%s1 + $0xa8] sm:$0xf]
        %v1502 = vld [vmem:[%s1 + $0xac] sm:$0xf]
        %v1503 = vld [vmem:[%s1 + $0xb0] sm:$0xf]
        %v1504 = vld [vmem:[%s1 + $0xb4] sm:$0xf]
        %v1505 = vld [vmem:[%s1 + $0xb8] sm:$0xf]
        %v1506 = vld [vmem:[%s1 + $0xbc] sm:$0xf]
        %v1507 = vld [vmem:[%s1 + $0xc0] sm:$0xf]
        %v1508 = vld [vmem:[%s1 + $0xc4] sm:$0xf]
        %v1509 = vld [vmem:[%s1 + $0xc8] sm:$0xf]
        %v1510 = vld [vmem:[%s1 + $0xcc] sm:$0xf]
        %v1511 = vld [vmem:[%s1 + $0xd0] sm:$0xf]
        %v1512 = vld [vmem:[%s1 + $0xd4] sm:$0xf]
        %v1513 = vld [vmem:[%s1 + $0xd8] sm:$0xf]
        %v1514 = vld [vmem:[%s1 + $0xdc] sm:$0xf]
        %v1515 = vld [vmem:[%s1 + $0xe0] sm:$0xf]
        %v1516 = vld [vmem:[%s1 + $0xe4] sm:$0xf]
        %v1517 = vld [vmem:[%s1 + $0xe8] sm:$0xf]
        %v1518 = vld [vmem:[%s1 + $0xec] sm:$0xf]
        %v1519 = vld [vmem:[%s1 + $0xf0] sm:$0xf]
        %v1520 = vld [vmem:[%s1 + $0xf4] sm:$0xf]
        %v1521 = vld [vmem:[%s1 + $0xf8] sm:$0xf]
        %v1522 = vld [vmem:[%s1 + $0xfc] sm:$0xf]
        %v1523 = vld [vmem:[%s1 + $0x100] sm:$0xf]
        %v1524 = vld [vmem:[%s1 + $0x104] sm:$0xf]
        %v1525 = vld [vmem:[%s1 + $0x108] sm:$0xf]
        %v1526 = vld [vmem:[%s1 + $0x10c] sm:$0xf]
        %v1527 = vld [vmem:[%s1 + $0x110] sm:$0xf]
        %v1528 = vld [vmem:[%s1 + $0x114] sm:$0xf]
        %v1529 = vld [vmem:[%s1 + $0x118] sm:$0xf]
        %v1530 = vld [vmem:[%s1 + $0x11c] sm:$0xf]
        %v1531 = vld [vmem:[%s1 + $0x120] sm:$0xf]
        %v1532 = vld [vmem:[%s1 + $0x124] sm:$0xf]
        %v1533 = vld [vmem:[%s1 + $0x128] sm:$0xf]
        %v1534 = vld [vmem:[%s1 + $0x12c] sm:$0xf]
        %v1535 = vld [vmem:[%s1 + $0x130] sm:$0xf]
        %v1536 = vld [vmem:[%s1 + $0x134] sm:$0xf]
        %v1537 = vld [vmem:[%s1 + $0x138] sm:$0xf]
        %v1538 = vld [vmem:[%s1 + $0x13c] sm:$0xf]
        %v1539 = vld [vmem:[%s1 + $0x140] sm:$0xf]
        %v1540 = vld [vmem:[%s1 + $0x144] sm:$0xf]
        %v1541 = vld [vmem:[%s1 + $0x148] sm:$0xf]
        %v1542 = vld [vmem:[%s1 + $0x14c] sm:$0xf]
        %v1543 = vld [vmem:[%s1 + $0x150] sm:$0xf]
        %v1544 = vld [vmem:[%s1 + $0x154] sm:$0xf]
        %v1545 = vld [vmem:[%s1 + $0x158] sm:$0xf]
        %v1546 = vld [vmem:[%s1 + $0x15c] sm:$0xf]
        %v1547 = vld [vmem:[%s1 + $0x160] sm:$0xf]
        %v1548 = vld [vmem:[%s1 + $0x164] sm:$0xf]
        %v1549 = vld [vmem:[%s1 + $0x168] sm:$0xf]
        %v1550 = vld [vmem:[%s1 + $0x16c] sm:$0xf]
        %v1551 = vld [vmem:[%s1 + $0x170] sm:$0xf]
        %v1552 = vld [vmem:[%s1 + $0x174] sm:$0xf]
        %v1553 = vld [vmem:[%s1 + $0x178] sm:$0xf]
        %v1554 = vld [vmem:[%s1 + $0x17c] sm:$0xf]
        %v1555 = vld [vmem:[%s1 + $0x180] sm:$0xf]
        %v1556 = vld [vmem:[%s1 + $0x184] sm:$0xf]
        %v1557 = vld [vmem:[%s1 + $0x188] sm:$0xf]
        %v1558 = vld [vmem:[%s1 + $0x18c] sm:$0xf]
        %v1559 = vld [vmem:[%s1 + $0x190] sm:$0xf]
        %v1560 = vld [vmem:[%s1 + $0x194] sm:$0xf]
        %v1561 = vld [vmem:[%s1 + $0x198] sm:$0xf]
        %v1562 = vld [vmem:[%s1 + $0x19c] sm:$0xf]
        %v1563 = vld [vmem:[%s1 + $0x1a0] sm:$0xf]
        %v1564 = vld [vmem:[%s1 + $0x1a4] sm:$0xf]
        %v1565 = vld [vmem:[%s1 + $0x1a8] sm:$0xf]
        %v1566 = vld [vmem:[%s1 + $0x1ac] sm:$0xf]
        %v1567 = vld [vmem:[%s1 + $0x1b0] sm:$0xf]
        %v1568 = vld [vmem:[%s1 + $0x1b4] sm:$0xf]
        %v1569 = vld [vmem:[%s1 + $0x1b8] sm:$0xf]
        %v1570 = vld [vmem:[%s1 + $0x1bc] sm:$0xf]
        %v1571 = vld [vmem:[%s1 + $0x1c0] sm:$0xf]
        %v1572 = vld [vmem:[%s1 + $0x1c4] sm:$0xf]
        %v1573 = vld [vmem:[%s1 + $0x1c8] sm:$0xf]
        %v1574 = vld [vmem:[%s1 + $0x1cc] sm:$0xf]
        %v1575 = vld [vmem:[%s1 + $0x1d0] sm:$0xf]
        %v1576 = vld [vmem:[%s1 + $0x1d4] sm:$0xf]
        %v1577 = vld [vmem:[%s1 + $0x1d8] sm:$0xf]
        %v1578 = vld [vmem:[%s1 + $0x1dc] sm:$0xf]
        %v1579 = vld [vmem:[%s1 + $0x1e0] sm:$0xf]
        %v1580 = vld [vmem:[%s1 + $0x1e4] sm:$0xf]
        %v1581 = vld [vmem:[%s1 + $0x1e8] sm:$0xf]
        %v1582 = vld [vmem:[%s1 + $0x1ec] sm:$0xf]
        %v1583 = vld [vmem:[%s1 + $0x1f0] sm:$0xf]
        %v1584 = vld [vmem:[%s1 + $0x1f4] sm:$0xf]
        %v1585 = vld [vmem:[%s1 + $0x1f8] sm:$0xf]
        %v1586 = vld [vmem:[%s1 + $0x1fc] sm:$0xf]
        %v1587 = vld [vmem:[%s1 + $0x200] sm:$0xf]
        %v1588 = vld [vmem:[%s1 + $0x204] sm:$0xf]
        %v1589 = vld [vmem:[%s1 + $0x208] sm:$0xf]
        %v1590 = vld [vmem:[%s1 + $0x20c] sm:$0xf]
        %v1591 = vld [vmem:[%s1 + $0x210] sm:$0xf]
        %v1592 = vld [vmem:[%s1 + $0x214] sm:$0xf]
        %v1593 = vld [vmem:[%s1 + $0x218] sm:$0xf]
        %v1594 = vld [vmem:[%s1 + $0x21c] sm:$0xf]
        %v1595 = vld [vmem:[%s1 + $0x220] sm:$0xf]
        %v1596 = vld [vmem:[%s1 + $0x224] sm:$0xf]
        %v1597 = vld [vmem:[%s1 + $0x228] sm:$0xf]
        %v1598 = vld [vmem:[%s1 + $0x22c] sm:$0xf]
        %v1599 = vld [vmem:[%s1 + $0x230] sm:$0xf]
        %v1600 = vld [vmem:[%s1 + $0x234] sm:$0xf]
        %v1601 = vld [vmem:[%s1 + $0x238] sm:$0xf]
        %v1602 = vld [vmem:[%s1 + $0x23c] sm:$0xf]
        %v1603 = vld [vmem:[%s3] sm:$0x1]
        %v1604 = vperm.slane %v1603, 0
        %v1749 = vunpack.c.l.b16 %v1459
        %v1750 = vunpack.c.l.b16 %v1460
        %v1751 = vunpack.c.l.b16 %v1461
        %v1752 = vunpack.c.l.b16 %v1462
        %v1753 = vunpack.c.l.b16 %v1463
        %v1754 = vunpack.c.l.b16 %v1464
        %v1755 = vunpack.c.l.b16 %v1465
        %v1756 = vunpack.c.l.b16 %v1466
        %v1757 = vunpack.c.l.b16 %v1467
        %v1758 = vunpack.c.l.b16 %v1468
        %v1759 = vunpack.c.l.b16 %v1469
        %v1760 = vunpack.c.l.b16 %v1470
        %v1761 = vunpack.c.l.b16 %v1471
        %v1762 = vunpack.c.l.b16 %v1472
        %v1763 = vunpack.c.l.b16 %v1473
        %v1764 = vunpack.c.l.b16 %v1474
        %v1765 = vunpack.c.l.b16 %v1475
        %v1766 = vunpack.c.l.b16 %v1476
        %v1767 = vunpack.c.l.b16 %v1477
        %v1768 = vunpack.c.l.b16 %v1478
        %v1769 = vunpack.c.l.b16 %v1479
        %v1770 = vunpack.c.l.b16 %v1480
        %v1771 = vunpack.c.l.b16 %v1481
        %v1772 = vunpack.c.l.b16 %v1482
        %v1773 = vunpack.c.l.b16 %v1483
        %v1774 = vunpack.c.l.b16 %v1484
        %v1775 = vunpack.c.l.b16 %v1485
        %v1776 = vunpack.c.l.b16 %v1486
        %v1777 = vunpack.c.l.b16 %v1487
        %v1778 = vunpack.c.l.b16 %v1488
        %v1779 = vunpack.c.l.b16 %v1489
        %v1780 = vunpack.c.l.b16 %v1490
        %v1781 = vunpack.c.l.b16 %v1491
        %v1782 = vunpack.c.l.b16 %v1492
        %v1783 = vunpack.c.l.b16 %v1493
        %v1784 = vunpack.c.l.b16 %v1494
        %v1785 = vunpack.c.l.b16 %v1495
        %v1786 = vunpack.c.l.b16 %v1496
        %v1787 = vunpack.c.l.b16 %v1497
        %v1788 = vunpack.c.l.b16 %v1498
        %v1789 = vunpack.c.l.b16 %v1499
        %v1790 = vunpack.c.l.b16 %v1500
        %v1791 = vunpack.c.l.b16 %v1501
        %v1792 = vunpack.c.l.b16 %v1502
        %v1793 = vunpack.c.l.b16 %v1503
        %v1794 = vunpack.c.l.b16 %v1504
        %v1795 = vunpack.c.l.b16 %v1505
        %v1796 = vunpack.c.l.b16 %v1506
        %v1797 = vunpack.c.l.b16 %v1507
        %v1798 = vunpack.c.l.b16 %v1508
        %v1799 = vunpack.c.l.b16 %v1509
        %v1800 = vunpack.c.l.b16 %v1510
        %v1801 = vunpack.c.l.b16 %v1511
        %v1802 = vunpack.c.l.b16 %v1512
        %v1803 = vunpack.c.l.b16 %v1513
        %v1804 = vunpack.c.l.b16 %v1514
        %v1805 = vunpack.c.l.b16 %v1515
        %v1806 = vunpack.c.l.b16 %v1516
        %v1807 = vunpack.c.l.b16 %v1517
        %v1808 = vunpack.c.l.b16 %v1518
        %v1809 = vunpack.c.l.b16 %v1519
        %v1810 = vunpack.c.l.b16 %v1520
        %v1811 = vunpack.c.l.b16 %v1521
        %v1812 = vunpack.c.l.b16 %v1522
        %v1813 = vunpack.c.l.b16 %v1523
        %v1814 = vunpack.c.l.b16 %v1524
        %v1815 = vunpack.c.l.b16 %v1525
        %v1816 = vunpack.c.l.b16 %v1526
        %v1817 = vunpack.c.l.b16 %v1527
        %v1818 = vunpack.c.l.b16 %v1528
        %v1819 = vunpack.c.l.b16 %v1529
        %v1820 = vunpack.c.l.b16 %v1530
        %v1821 = vunpack.c.l.b16 %v1531
        %v1822 = vunpack.c.l.b16 %v1532
        %v1823 = vunpack.c.l.b16 %v1533
        %v1824 = vunpack.c.l.b16 %v1534
        %v1825 = vunpack.c.l.b16 %v1535
        %v1826 = vunpack.c.l.b16 %v1536
        %v1827 = vunpack.c.l.b16 %v1537
        %v1828 = vunpack.c.l.b16 %v1538
        %v1829 = vunpack.c.l.b16 %v1539
        %v1830 = vunpack.c.l.b16 %v1540
        %v1831 = vunpack.c.l.b16 %v1541
        %v1832 = vunpack.c.l.b16 %v1542
        %v1833 = vunpack.c.l.b16 %v1543
        %v1834 = vunpack.c.l.b16 %v1544
        %v1835 = vunpack.c.l.b16 %v1545
        %v1836 = vunpack.c.l.b16 %v1546
        %v1837 = vunpack.c.l.b16 %v1547
        %v1838 = vunpack.c.l.b16 %v1548
        %v1839 = vunpack.c.l.b16 %v1549
        %v1840 = vunpack.c.l.b16 %v1550
        %v1841 = vunpack.c.l.b16 %v1551
        %v1842 = vunpack.c.l.b16 %v1552
        %v1843 = vunpack.c.l.b16 %v1553
        %v1844 = vunpack.c.l.b16 %v1554
        %v1845 = vunpack.c.l.b16 %v1555
        %v1846 = vunpack.c.l.b16 %v1556
        %v1847 = vunpack.c.l.b16 %v1557
        %v1848 = vunpack.c.l.b16 %v1558
        %v1849 = vunpack.c.l.b16 %v1559
        %v1850 = vunpack.c.l.b16 %v1560
        %v1851 = vunpack.c.l.b16 %v1561
        %v1852 = vunpack.c.l.b16 %v1562
        %v1853 = vunpack.c.l.b16 %v1563
        %v1854 = vunpack.c.l.b16 %v1564
        %v1855 = vunpack.c.l.b16 %v1565
        %v1856 = vunpack.c.l.b16 %v1566
        %v1857 = vunpack.c.l.b16 %v1567
        %v1858 = vunpack.c.l.b16 %v1568
        %v1859 = vunpack.c.l.b16 %v1569
        %v1860 = vunpack.c.l.b16 %v1570
        %v1861 = vunpack.c.l.b16 %v1571
        %v1862 = vunpack.c.l.b16 %v1572
        %v1863 = vunpack.c.l.b16 %v1573
        %v1864 = vunpack.c.l.b16 %v1574
        %v1865 = vunpack.c.l.b16 %v1575
        %v1866 = vunpack.c.l.b16 %v1576
        %v1867 = vunpack.c.l.b16 %v1577
        %v1868 = vunpack.c.l.b16 %v1578
        %v1869 = vunpack.c.l.b16 %v1579
        %v1870 = vunpack.c.l.b16 %v1580
        %v1871 = vunpack.c.l.b16 %v1581
        %v1872 = vunpack.c.l.b16 %v1582
        %v1873 = vunpack.c.l.b16 %v1583
        %v1874 = vunpack.c.l.b16 %v1584
        %v1875 = vunpack.c.l.b16 %v1585
        %v1876 = vunpack.c.l.b16 %v1586
        %v1877 = vunpack.c.l.b16 %v1587
        %v1878 = vunpack.c.l.b16 %v1588
        %v1879 = vunpack.c.l.b16 %v1589
        %v1880 = vunpack.c.l.b16 %v1590
        %v1881 = vunpack.c.l.b16 %v1591
        %v1882 = vunpack.c.l.b16 %v1592
        %v1883 = vunpack.c.l.b16 %v1593
        %v1884 = vunpack.c.l.b16 %v1594
        %v1885 = vunpack.c.l.b16 %v1595
        %v1886 = vunpack.c.l.b16 %v1596
        %v1887 = vunpack.c.l.b16 %v1597
        %v1888 = vunpack.c.l.b16 %v1598
        %v1889 = vunpack.c.l.b16 %v1599
        %v1890 = vunpack.c.l.b16 %v1600
        %v1891 = vunpack.c.l.b16 %v1601
        %v1892 = vunpack.c.l.b16 %v1602
        %v1893 = vpack.c.b16 %v1750, %v1749
        %v1894 = vpack.c.b16 %v1752, %v1751
        %v1895 = vpack.c.b16 %v1754, %v1753
        %v1896 = vpack.c.b16 %v1756, %v1755
        %v1897 = vpack.c.b16 %v1758, %v1757
        %v1898 = vpack.c.b16 %v1760, %v1759
        %v1899 = vpack.c.b16 %v1762, %v1761
        %v1900 = vpack.c.b16 %v1764, %v1763
        %v1901 = vpack.c.b16 %v1766, %v1765
        %v1902 = vpack.c.b16 %v1768, %v1767
        %v1903 = vpack.c.b16 %v1770, %v1769
        %v1904 = vpack.c.b16 %v1772, %v1771
        %v1905 = vpack.c.b16 %v1774, %v1773
        %v1906 = vpack.c.b16 %v1776, %v1775
        %v1907 = vpack.c.b16 %v1778, %v1777
        %v1908 = vpack.c.b16 %v1780, %v1779
        %v1909 = vpack.c.b16 %v1782, %v1781
        %v1910 = vpack.c.b16 %v1784, %v1783
        %v1911 = vpack.c.b16 %v1786, %v1785
        %v1912 = vpack.c.b16 %v1788, %v1787
        %v1913 = vpack.c.b16 %v1790, %v1789
        %v1914 = vpack.c.b16 %v1792, %v1791
        %v1915 = vpack.c.b16 %v1794, %v1793
        %v1916 = vpack.c.b16 %v1796, %v1795
        %v1917 = vpack.c.b16 %v1798, %v1797
        %v1918 = vpack.c.b16 %v1800, %v1799
        %v1919 = vpack.c.b16 %v1802, %v1801
        %v1920 = vpack.c.b16 %v1804, %v1803
        %v1921 = vpack.c.b16 %v1806, %v1805
        %v1922 = vpack.c.b16 %v1808, %v1807
        %v1923 = vpack.c.b16 %v1810, %v1809
        %v1924 = vpack.c.b16 %v1812, %v1811
        %v1925 = vpack.c.b16 %v1814, %v1813
        %v1926 = vpack.c.b16 %v1816, %v1815
        %v1927 = vpack.c.b16 %v1818, %v1817
        %v1928 = vpack.c.b16 %v1820, %v1819
        %v1929 = vpack.c.b16 %v1822, %v1821
        %v1930 = vpack.c.b16 %v1824, %v1823
        %v1931 = vpack.c.b16 %v1826, %v1825
        %v1932 = vpack.c.b16 %v1828, %v1827
        %v1933 = vpack.c.b16 %v1830, %v1829
        %v1934 = vpack.c.b16 %v1832, %v1831
        %v1935 = vpack.c.b16 %v1834, %v1833
        %v1936 = vpack.c.b16 %v1836, %v1835
        %v1937 = vpack.c.b16 %v1838, %v1837
        %v1938 = vpack.c.b16 %v1840, %v1839
        %v1939 = vpack.c.b16 %v1842, %v1841
        %v1940 = vpack.c.b16 %v1844, %v1843
        %v1941 = vpack.c.b16 %v1846, %v1845
        %v1942 = vpack.c.b16 %v1848, %v1847
        %v1943 = vpack.c.b16 %v1850, %v1849
        %v1944 = vpack.c.b16 %v1852, %v1851
        %v1945 = vpack.c.b16 %v1854, %v1853
        %v1946 = vpack.c.b16 %v1856, %v1855
        %v1947 = vpack.c.b16 %v1858, %v1857
        %v1948 = vpack.c.b16 %v1860, %v1859
        %v1949 = vpack.c.b16 %v1862, %v1861
        %v1950 = vpack.c.b16 %v1864, %v1863
        %v1951 = vpack.c.b16 %v1866, %v1865
        %v1952 = vpack.c.b16 %v1868, %v1867
        %v1953 = vpack.c.b16 %v1870, %v1869
        %v1954 = vpack.c.b16 %v1872, %v1871
        %v1955 = vpack.c.b16 %v1874, %v1873
        %v1956 = vpack.c.b16 %v1876, %v1875
        %v1957 = vpack.c.b16 %v1878, %v1877
        %v1958 = vpack.c.b16 %v1880, %v1879
        %v1959 = vpack.c.b16 %v1882, %v1881
        %v1960 = vpack.c.b16 %v1884, %v1883
        %v1961 = vpack.c.b16 %v1886, %v1885
        %v1962 = vpack.c.b16 %v1888, %v1887
        %v1963 = vpack.c.b16 %v1890, %v1889
        %v1964 = vpack.c.b16 %v1892, %v1891
        %2037 = vmatpush.bf16.msra.mxu0 %v1900
        %2038 = vmatpush.bf16.msra.mxu0 %v1899
        %2039 = vmatpush.bf16.msra.mxu0 %v1898
        %2040 = vmatpush.bf16.msra.mxu0 %v1897
        %2041 = vmatpush.bf16.msra.mxu0 %v1896
        %2042 = vmatpush.bf16.msra.mxu0 %v1895
        %2043 = vmatpush.bf16.msra.mxu0 %v1894
        %2044 = vmatpush.bf16.msra.mxu0 %v1893
        %2045 = vmatmul.bf16.gmra.mxu0 %v1171
        %v2046 = vpop.f32.mrf.mxu0
        %v2047 = vadd.f32 %v1604, %v2046
        %v2048 = vpop.f32.mrf.mxu0
        %v2049 = vadd.f32 %v1604, %v2048
        %2050 = vmatmul.bf16.gmra.mxu0 %v1172
        %v2051 = vpop.f32.mrf.mxu0
        %v2052 = vadd.f32 %v1604, %v2051
        %v2053 = vpop.f32.mrf.mxu0
        %v2054 = vadd.f32 %v1604, %v2053
        %2055 = vmatmul.bf16.gmra.mxu0 %v1173
        %v2056 = vpop.f32.mrf.mxu0
        %v2057 = vadd.f32 %v1604, %v2056
        %v2058 = vpop.f32.mrf.mxu0
        %v2059 = vadd.f32 %v1604, %v2058
        %2060 = vmatmul.bf16.gmra.mxu0 %v1174
        %v2061 = vpop.f32.mrf.mxu0
        %v2062 = vadd.f32 %v1604, %v2061
        %v2063 = vpop.f32.mrf.mxu0
        %v2064 = vadd.f32 %v1604, %v2063
        %2065 = vmatmul.bf16.gmra.mxu0 %v1175
        %v2066 = vpop.f32.mrf.mxu0
        %v2067 = vadd.f32 %v1604, %v2066
        %v2068 = vpop.f32.mrf.mxu0
        %v2069 = vadd.f32 %v1604, %v2068
        %2070 = vmatmul.bf16.gmra.mxu0 %v1176
        %v2071 = vpop.f32.mrf.mxu0
        %v2072 = vadd.f32 %v1604, %v2071
        %v2073 = vpop.f32.mrf.mxu0
        %v2074 = vadd.f32 %v1604, %v2073
        %2075 = vmatmul.bf16.gmra.mxu0 %v1177
        %v2076 = vpop.f32.mrf.mxu0
        %v2077 = vadd.f32 %v1604, %v2076
        %v2078 = vpop.f32.mrf.mxu0
        %v2079 = vadd.f32 %v1604, %v2078
        %2080 = vmatmul.bf16.gmra.mxu0 %v1178
        %v2081 = vpop.f32.mrf.mxu0
        %v2082 = vadd.f32 %v1604, %v2081
        %v2083 = vpop.f32.mrf.mxu0
        %v2084 = vadd.f32 %v1604, %v2083
        %2085 = vdwg.mxu0
        %2086 = vmatpush.bf16.msra.mxu0 %v1908
        %2087 = vmatpush.bf16.msra.mxu0 %v1907
        %2088 = vmatpush.bf16.msra.mxu0 %v1906
        %2089 = vmatpush.bf16.msra.mxu0 %v1905
        %2090 = vmatpush.bf16.msra.mxu0 %v1904
        %2091 = vmatpush.bf16.msra.mxu0 %v1903
        %2092 = vmatpush.bf16.msra.mxu0 %v1902
        %2093 = vmatpush.bf16.msra.mxu0 %v1901
        %2094 = vmatmul.bf16.gmra.mxu0 %v1203
        %v2095 = vpop.f32.mrf.mxu0
        %v2096 = vadd.f32 %v2047, %v2095
        %v2097 = vpop.f32.mrf.mxu0
        %v2098 = vadd.f32 %v2049, %v2097
        %2099 = vmatmul.bf16.gmra.mxu0 %v1204
        %v2100 = vpop.f32.mrf.mxu0
        %v2101 = vadd.f32 %v2052, %v2100
        %v2102 = vpop.f32.mrf.mxu0
        %v2103 = vadd.f32 %v2054, %v2102
        %2104 = vmatmul.bf16.gmra.mxu0 %v1205
        %v2105 = vpop.f32.mrf.mxu0
        %v2106 = vadd.f32 %v2057, %v2105
        %v2107 = vpop.f32.mrf.mxu0
        %v2108 = vadd.f32 %v2059, %v2107
        %2109 = vmatmul.bf16.gmra.mxu0 %v1206
        %v2110 = vpop.f32.mrf.mxu0
        %v2111 = vadd.f32 %v2062, %v2110
        %v2112 = vpop.f32.mrf.mxu0
        %v2113 = vadd.f32 %v2064, %v2112
        %2114 = vmatmul.bf16.gmra.mxu0 %v1207
        %v2115 = vpop.f32.mrf.mxu0
        %v2116 = vadd.f32 %v2067, %v2115
        %v2117 = vpop.f32.mrf.mxu0
        %v2118 = vadd.f32 %v2069, %v2117
        %2119 = vmatmul.bf16.gmra.mxu0 %v1208
        %v2120 = vpop.f32.mrf.mxu0
        %v2121 = vadd.f32 %v2072, %v2120
        %v2122 = vpop.f32.mrf.mxu0
        %v2123 = vadd.f32 %v2074, %v2122
        %2124 = vmatmul.bf16.gmra.mxu0 %v1209
        %v2125 = vpop.f32.mrf.mxu0
        %v2126 = vadd.f32 %v2077, %v2125
        %v2127 = vpop.f32.mrf.mxu0
        %v2128 = vadd.f32 %v2079, %v2127
        %2129 = vmatmul.bf16.gmra.mxu0 %v1210
        %v2130 = vpop.f32.mrf.mxu0
        %v2131 = vadd.f32 %v2082, %v2130
        %v2132 = vpop.f32.mrf.mxu0
        %v2133 = vadd.f32 %v2084, %v2132
        %2134 = vdwg.mxu0
        %2135 = vmatpush.bf16.msra.mxu0 %v1916
        %2136 = vmatpush.bf16.msra.mxu0 %v1915
        %2137 = vmatpush.bf16.msra.mxu0 %v1914
        %2138 = vmatpush.bf16.msra.mxu0 %v1913
        %2139 = vmatpush.bf16.msra.mxu0 %v1912
        %2140 = vmatpush.bf16.msra.mxu0 %v1911
        %2141 = vmatpush.bf16.msra.mxu0 %v1910
        %2142 = vmatpush.bf16.msra.mxu0 %v1909
        %2143 = vmatmul.bf16.gmra.mxu0 %v1235
        %v2144 = vpop.f32.mrf.mxu0
        %v2145 = vadd.f32 %v2096, %v2144
        %v2146 = vpop.f32.mrf.mxu0
        %v2147 = vadd.f32 %v2098, %v2146
        %2148 = vmatmul.bf16.gmra.mxu0 %v1236
        %v2149 = vpop.f32.mrf.mxu0
        %v2150 = vadd.f32 %v2101, %v2149
        %v2151 = vpop.f32.mrf.mxu0
        %v2152 = vadd.f32 %v2103, %v2151
        %2153 = vmatmul.bf16.gmra.mxu0 %v1237
        %v2154 = vpop.f32.mrf.mxu0
        %v2155 = vadd.f32 %v2106, %v2154
        %v2156 = vpop.f32.mrf.mxu0
        %v2157 = vadd.f32 %v2108, %v2156
        %2158 = vmatmul.bf16.gmra.mxu0 %v1238
        %v2159 = vpop.f32.mrf.mxu0
        %v2160 = vadd.f32 %v2111, %v2159
        %v2161 = vpop.f32.mrf.mxu0
        %v2162 = vadd.f32 %v2113, %v2161
        %2163 = vmatmul.bf16.gmra.mxu0 %v1239
        %v2164 = vpop.f32.mrf.mxu0
        %v2165 = vadd.f32 %v2116, %v2164
        %v2166 = vpop.f32.mrf.mxu0
        %v2167 = vadd.f32 %v2118, %v2166
        %2168 = vmatmul.bf16.gmra.mxu0 %v1240
        %v2169 = vpop.f32.mrf.mxu0
        %v2170 = vadd.f32 %v2121, %v2169
        %v2171 = vpop.f32.mrf.mxu0
        %v2172 = vadd.f32 %v2123, %v2171
        %2173 = vmatmul.bf16.gmra.mxu0 %v1241
        %v2174 = vpop.f32.mrf.mxu0
        %v2175 = vadd.f32 %v2126, %v2174
        %v2176 = vpop.f32.mrf.mxu0
        %v2177 = vadd.f32 %v2128, %v2176
        %2178 = vmatmul.bf16.gmra.mxu0 %v1242
        %v2179 = vpop.f32.mrf.mxu0
        %v2180 = vadd.f32 %v2131, %v2179
        %v2181 = vpop.f32.mrf.mxu0
        %v2182 = vadd.f32 %v2133, %v2181
        %2183 = vdwg.mxu0
        %2184 = vmatpush.bf16.msra.mxu0 %v1924
        %2185 = vmatpush.bf16.msra.mxu0 %v1923
        %2186 = vmatpush.bf16.msra.mxu0 %v1922
        %2187 = vmatpush.bf16.msra.mxu0 %v1921
        %2188 = vmatpush.bf16.msra.mxu0 %v1920
        %2189 = vmatpush.bf16.msra.mxu0 %v1919
        %2190 = vmatpush.bf16.msra.mxu0 %v1918
        %2191 = vmatpush.bf16.msra.mxu0 %v1917
        %2192 = vmatmul.bf16.gmra.mxu0 %v1275
        %v2193 = vpop.f32.mrf.mxu0
        %v2194 = vadd.f32 %v2145, %v2193
        %v2195 = vpop.f32.mrf.mxu0
        %v2196 = vadd.f32 %v2147, %v2195
        %2197 = vmatmul.bf16.gmra.mxu0 %v1276
        %v2198 = vpop.f32.mrf.mxu0
        %v2199 = vadd.f32 %v2150, %v2198
        %v2200 = vpop.f32.mrf.mxu0
        %v2201 = vadd.f32 %v2152, %v2200
        %2202 = vmatmul.bf16.gmra.mxu0 %v1277
        %v2203 = vpop.f32.mrf.mxu0
        %v2204 = vadd.f32 %v2155, %v2203
        %v2205 = vpop.f32.mrf.mxu0
        %v2206 = vadd.f32 %v2157, %v2205
        %2207 = vmatmul.bf16.gmra.mxu0 %v1278
        %v2208 = vpop.f32.mrf.mxu0
        %v2209 = vadd.f32 %v2160, %v2208
        %v2210 = vpop.f32.mrf.mxu0
        %v2211 = vadd.f32 %v2162, %v2210
        %2212 = vmatmul.bf16.gmra.mxu0 %v1279
        %v2213 = vpop.f32.mrf.mxu0
        %v2214 = vadd.f32 %v2165, %v2213
        %v2215 = vpop.f32.mrf.mxu0
        %v2216 = vadd.f32 %v2167, %v2215
        %2217 = vmatmul.bf16.gmra.mxu0 %v1280
        %v2218 = vpop.f32.mrf.mxu0
        %v2219 = vadd.f32 %v2170, %v2218
        %v2220 = vpop.f32.mrf.mxu0
        %v2221 = vadd.f32 %v2172, %v2220
        %2222 = vmatmul.bf16.gmra.mxu0 %v1281
        %v2223 = vpop.f32.mrf.mxu0
        %v2224 = vadd.f32 %v2175, %v2223
        %v2225 = vpop.f32.mrf.mxu0
        %v2226 = vadd.f32 %v2177, %v2225
        %2227 = vmatmul.bf16.gmra.mxu0 %v1282
        %v2228 = vpop.f32.mrf.mxu0
        %v2229 = vadd.f32 %v2180, %v2228
        %v2230 = vpop.f32.mrf.mxu0
        %v2231 = vadd.f32 %v2182, %v2230
        %2232 = vdwg.mxu0
        %2233 = vmatpush.bf16.msra.mxu0 %v1932
        %2234 = vmatpush.bf16.msra.mxu0 %v1931
        %2235 = vmatpush.bf16.msra.mxu0 %v1930
        %2236 = vmatpush.bf16.msra.mxu0 %v1929
        %2237 = vmatpush.bf16.msra.mxu0 %v1928
        %2238 = vmatpush.bf16.msra.mxu0 %v1927
        %2239 = vmatpush.bf16.msra.mxu0 %v1926
        %2240 = vmatpush.bf16.msra.mxu0 %v1925
        %2241 = vmatmul.bf16.gmra.mxu0 %v1307
        %v2242 = vpop.f32.mrf.mxu0
        %v2243 = vadd.f32 %v2194, %v2242
        %v2244 = vpop.f32.mrf.mxu0
        %v2245 = vadd.f32 %v2196, %v2244
        %2246 = vmatmul.bf16.gmra.mxu0 %v1308
        %v2247 = vpop.f32.mrf.mxu0
        %v2248 = vadd.f32 %v2199, %v2247
        %v2249 = vpop.f32.mrf.mxu0
        %v2250 = vadd.f32 %v2201, %v2249
        %2251 = vmatmul.bf16.gmra.mxu0 %v1309
        %v2252 = vpop.f32.mrf.mxu0
        %v2253 = vadd.f32 %v2204, %v2252
        %v2254 = vpop.f32.mrf.mxu0
        %v2255 = vadd.f32 %v2206, %v2254
        %2256 = vmatmul.bf16.gmra.mxu0 %v1310
        %v2257 = vpop.f32.mrf.mxu0
        %v2258 = vadd.f32 %v2209, %v2257
        %v2259 = vpop.f32.mrf.mxu0
        %v2260 = vadd.f32 %v2211, %v2259
        %2261 = vmatmul.bf16.gmra.mxu0 %v1311
        %v2262 = vpop.f32.mrf.mxu0
        %v2263 = vadd.f32 %v2214, %v2262
        %v2264 = vpop.f32.mrf.mxu0
        %v2265 = vadd.f32 %v2216, %v2264
        %2266 = vmatmul.bf16.gmra.mxu0 %v1312
        %v2267 = vpop.f32.mrf.mxu0
        %v2268 = vadd.f32 %v2219, %v2267
        %v2269 = vpop.f32.mrf.mxu0
        %v2270 = vadd.f32 %v2221, %v2269
        %2271 = vmatmul.bf16.gmra.mxu0 %v1313
        %v2272 = vpop.f32.mrf.mxu0
        %v2273 = vadd.f32 %v2224, %v2272
        %v2274 = vpop.f32.mrf.mxu0
        %v2275 = vadd.f32 %v2226, %v2274
        %2276 = vmatmul.bf16.gmra.mxu0 %v1314
        %v2277 = vpop.f32.mrf.mxu0
        %v2278 = vadd.f32 %v2229, %v2277
        %v2279 = vpop.f32.mrf.mxu0
        %v2280 = vadd.f32 %v2231, %v2279
        %2281 = vdwg.mxu0
        %2282 = vmatpush.bf16.msra.mxu0 %v1940
        %2283 = vmatpush.bf16.msra.mxu0 %v1939
        %2284 = vmatpush.bf16.msra.mxu0 %v1938
        %2285 = vmatpush.bf16.msra.mxu0 %v1937
        %2286 = vmatpush.bf16.msra.mxu0 %v1936
        %2287 = vmatpush.bf16.msra.mxu0 %v1935
        %2288 = vmatpush.bf16.msra.mxu0 %v1934
        %2289 = vmatpush.bf16.msra.mxu0 %v1933
        %2290 = vmatmul.bf16.gmra.mxu0 %v1339
        %v2291 = vpop.f32.mrf.mxu0
        %v2292 = vadd.f32 %v2243, %v2291
        %v2293 = vpop.f32.mrf.mxu0
        %v2294 = vadd.f32 %v2245, %v2293
        %2295 = vmatmul.bf16.gmra.mxu0 %v1340
        %v2296 = vpop.f32.mrf.mxu0
        %v2297 = vadd.f32 %v2248, %v2296
        %v2298 = vpop.f32.mrf.mxu0
        %v2299 = vadd.f32 %v2250, %v2298
        %2300 = vmatmul.bf16.gmra.mxu0 %v1341
        %v2301 = vpop.f32.mrf.mxu0
        %v2302 = vadd.f32 %v2253, %v2301
        %v2303 = vpop.f32.mrf.mxu0
        %v2304 = vadd.f32 %v2255, %v2303
        %2305 = vmatmul.bf16.gmra.mxu0 %v1342
        %v2306 = vpop.f32.mrf.mxu0
        %v2307 = vadd.f32 %v2258, %v2306
        %v2308 = vpop.f32.mrf.mxu0
        %v2309 = vadd.f32 %v2260, %v2308
        %2310 = vmatmul.bf16.gmra.mxu0 %v1343
        %v2311 = vpop.f32.mrf.mxu0
        %v2312 = vadd.f32 %v2263, %v2311
        %v2313 = vpop.f32.mrf.mxu0
        %v2314 = vadd.f32 %v2265, %v2313
        %2315 = vmatmul.bf16.gmra.mxu0 %v1344
        %v2316 = vpop.f32.mrf.mxu0
        %v2317 = vadd.f32 %v2268, %v2316
        %v2318 = vpop.f32.mrf.mxu0
        %v2319 = vadd.f32 %v2270, %v2318
        %2320 = vmatmul.bf16.gmra.mxu0 %v1345
        %v2321 = vpop.f32.mrf.mxu0
        %v2322 = vadd.f32 %v2273, %v2321
        %v2323 = vpop.f32.mrf.mxu0
        %v2324 = vadd.f32 %v2275, %v2323
        %2325 = vmatmul.bf16.gmra.mxu0 %v1346
        %v2326 = vpop.f32.mrf.mxu0
        %v2327 = vadd.f32 %v2278, %v2326
        %v2328 = vpop.f32.mrf.mxu0
        %v2329 = vadd.f32 %v2280, %v2328
        %2330 = vdwg.mxu0
        %2331 = vmatpush.bf16.msra.mxu0 %v1948
        %2332 = vmatpush.bf16.msra.mxu0 %v1947
        %2333 = vmatpush.bf16.msra.mxu0 %v1946
        %2334 = vmatpush.bf16.msra.mxu0 %v1945
        %2335 = vmatpush.bf16.msra.mxu0 %v1944
        %2336 = vmatpush.bf16.msra.mxu0 %v1943
        %2337 = vmatpush.bf16.msra.mxu0 %v1942
        %2338 = vmatpush.bf16.msra.mxu0 %v1941
        %2339 = vmatmul.bf16.gmra.mxu0 %v1379
        %v2340 = vpop.f32.mrf.mxu0
        %v2341 = vadd.f32 %v2292, %v2340
        %v2342 = vpop.f32.mrf.mxu0
        %v2343 = vadd.f32 %v2294, %v2342
        %2344 = vmatmul.bf16.gmra.mxu0 %v1380
        %v2345 = vpop.f32.mrf.mxu0
        %v2346 = vadd.f32 %v2297, %v2345
        %v2347 = vpop.f32.mrf.mxu0
        %v2348 = vadd.f32 %v2299, %v2347
        %2349 = vmatmul.bf16.gmra.mxu0 %v1381
        %v2350 = vpop.f32.mrf.mxu0
        %v2351 = vadd.f32 %v2302, %v2350
        %v2352 = vpop.f32.mrf.mxu0
        %v2353 = vadd.f32 %v2304, %v2352
        %2354 = vmatmul.bf16.gmra.mxu0 %v1382
        %v2355 = vpop.f32.mrf.mxu0
        %v2356 = vadd.f32 %v2307, %v2355
        %v2357 = vpop.f32.mrf.mxu0
        %v2358 = vadd.f32 %v2309, %v2357
        %2359 = vmatmul.bf16.gmra.mxu0 %v1383
        %v2360 = vpop.f32.mrf.mxu0
        %v2361 = vadd.f32 %v2312, %v2360
        %v2362 = vpop.f32.mrf.mxu0
        %v2363 = vadd.f32 %v2314, %v2362
        %2364 = vmatmul.bf16.gmra.mxu0 %v1384
        %v2365 = vpop.f32.mrf.mxu0
        %v2366 = vadd.f32 %v2317, %v2365
        %v2367 = vpop.f32.mrf.mxu0
        %v2368 = vadd.f32 %v2319, %v2367
        %2369 = vmatmul.bf16.gmra.mxu0 %v1385
        %v2370 = vpop.f32.mrf.mxu0
        %v2371 = vadd.f32 %v2322, %v2370
        %v2372 = vpop.f32.mrf.mxu0
        %v2373 = vadd.f32 %v2324, %v2372
        %2374 = vmatmul.bf16.gmra.mxu0 %v1386
        %v2375 = vpop.f32.mrf.mxu0
        %v2376 = vadd.f32 %v2327, %v2375
        %v2377 = vpop.f32.mrf.mxu0
        %v2378 = vadd.f32 %v2329, %v2377
        %2379 = vdwg.mxu0
        %2380 = vmatpush.bf16.msra.mxu0 %v1956
        %2381 = vmatpush.bf16.msra.mxu0 %v1955
        %2382 = vmatpush.bf16.msra.mxu0 %v1954
        %2383 = vmatpush.bf16.msra.mxu0 %v1953
        %2384 = vmatpush.bf16.msra.mxu0 %v1952
        %2385 = vmatpush.bf16.msra.mxu0 %v1951
        %2386 = vmatpush.bf16.msra.mxu0 %v1950
        %2387 = vmatpush.bf16.msra.mxu0 %v1949
        %2388 = vmatmul.bf16.gmra.mxu0 %v1411
        %v2389 = vpop.f32.mrf.mxu0
        %v2390 = vadd.f32 %v2341, %v2389
        %v2391 = vpop.f32.mrf.mxu0
        %v2392 = vadd.f32 %v2343, %v2391
        %2393 = vmatmul.bf16.gmra.mxu0 %v1412
        %v2394 = vpop.f32.mrf.mxu0
        %v2395 = vadd.f32 %v2346, %v2394
        %v2396 = vpop.f32.mrf.mxu0
        %v2397 = vadd.f32 %v2348, %v2396
        %2398 = vmatmul.bf16.gmra.mxu0 %v1413
        %v2399 = vpop.f32.mrf.mxu0
        %v2400 = vadd.f32 %v2351, %v2399
        %v2401 = vpop.f32.mrf.mxu0
        %v2402 = vadd.f32 %v2353, %v2401
        %2403 = vmatmul.bf16.gmra.mxu0 %v1414
        %v2404 = vpop.f32.mrf.mxu0
        %v2405 = vadd.f32 %v2356, %v2404
        %v2406 = vpop.f32.mrf.mxu0
        %v2407 = vadd.f32 %v2358, %v2406
        %2408 = vmatmul.bf16.gmra.mxu0 %v1415
        %v2409 = vpop.f32.mrf.mxu0
        %v2410 = vadd.f32 %v2361, %v2409
        %v2411 = vpop.f32.mrf.mxu0
        %v2412 = vadd.f32 %v2363, %v2411
        %2413 = vmatmul.bf16.gmra.mxu0 %v1416
        %v2414 = vpop.f32.mrf.mxu0
        %v2415 = vadd.f32 %v2366, %v2414
        %v2416 = vpop.f32.mrf.mxu0
        %v2417 = vadd.f32 %v2368, %v2416
        %2418 = vmatmul.bf16.gmra.mxu0 %v1417
        %v2419 = vpop.f32.mrf.mxu0
        %v2420 = vadd.f32 %v2371, %v2419
        %v2421 = vpop.f32.mrf.mxu0
        %v2422 = vadd.f32 %v2373, %v2421
        %2423 = vmatmul.bf16.gmra.mxu0 %v1418
        %v2424 = vpop.f32.mrf.mxu0
        %v2425 = vadd.f32 %v2376, %v2424
        %v2426 = vpop.f32.mrf.mxu0
        %v2427 = vadd.f32 %v2378, %v2426
        %2428 = vdwg.mxu0
        %2429 = vmatpush.bf16.msra.mxu0 %v1964
        %2430 = vmatpush.bf16.msra.mxu0 %v1963
        %2431 = vmatpush.bf16.msra.mxu0 %v1962
        %2432 = vmatpush.bf16.msra.mxu0 %v1961
        %2433 = vmatpush.bf16.msra.mxu0 %v1960
        %2434 = vmatpush.bf16.msra.mxu0 %v1959
        %2435 = vmatpush.bf16.msra.mxu0 %v1958
        %2436 = vmatpush.bf16.msra.mxu0 %v1957
        %2437 = vmatmul.bf16.gmra.mxu0 %v1443
        %v2438 = vpop.f32.mrf.mxu0
        %v2439 = vadd.f32 %v2390, %v2438
        %v2440 = vpop.f32.mrf.mxu0
        %v2441 = vadd.f32 %v2392, %v2440
        %2442 = vmatmul.bf16.gmra.mxu0 %v1444
        %v2443 = vpop.f32.mrf.mxu0
        %v2444 = vadd.f32 %v2395, %v2443
        %v2445 = vpop.f32.mrf.mxu0
        %v2446 = vadd.f32 %v2397, %v2445
        %2447 = vmatmul.bf16.gmra.mxu0 %v1445
        %v2448 = vpop.f32.mrf.mxu0
        %v2449 = vadd.f32 %v2400, %v2448
        %v2450 = vpop.f32.mrf.mxu0
        %v2451 = vadd.f32 %v2402, %v2450
        %2452 = vmatmul.bf16.gmra.mxu0 %v1446
        %v2453 = vpop.f32.mrf.mxu0
        %v2454 = vadd.f32 %v2405, %v2453
        %v2455 = vpop.f32.mrf.mxu0
        %v2456 = vadd.f32 %v2407, %v2455
        %2457 = vmatmul.bf16.gmra.mxu0 %v1447
        %v2458 = vpop.f32.mrf.mxu0
        %v2459 = vadd.f32 %v2410, %v2458
        %v2460 = vpop.f32.mrf.mxu0
        %v2461 = vadd.f32 %v2412, %v2460
        %2462 = vmatmul.bf16.gmra.mxu0 %v1448
        %v2463 = vpop.f32.mrf.mxu0
        %v2464 = vadd.f32 %v2415, %v2463
        %v2465 = vpop.f32.mrf.mxu0
        %v2466 = vadd.f32 %v2417, %v2465
        %2467 = vmatmul.bf16.gmra.mxu0 %v1449
        %v2468 = vpop.f32.mrf.mxu0
        %v2469 = vadd.f32 %v2420, %v2468
        %v2470 = vpop.f32.mrf.mxu0
        %v2471 = vadd.f32 %v2422, %v2470
        %2472 = vmatmul.bf16.gmra.mxu0 %v1450
        %v2473 = vpop.f32.mrf.mxu0
        %v2474 = vadd.f32 %v2425, %v2473
        %v2475 = vpop.f32.mrf.mxu0
        %v2476 = vadd.f32 %v2427, %v2475
        %2477 = vdwg.mxu0
        %v2478 = vmax.f32 %v2439, 0.0
        %v2479 = vmax.f32 %v2441, 0.0
        %v2480 = vmax.f32 %v2444, 0.0
        %v2481 = vmax.f32 %v2446, 0.0
        %v2482 = vmax.f32 %v2449, 0.0
        %v2483 = vmax.f32 %v2451, 0.0
        %v2484 = vmax.f32 %v2454, 0.0
        %v2485 = vmax.f32 %v2456, 0.0
        %v2486 = vmax.f32 %v2459, 0.0
        %v2487 = vmax.f32 %v2461, 0.0
        %v2488 = vmax.f32 %v2464, 0.0
        %v2489 = vmax.f32 %v2466, 0.0
        %v2490 = vmax.f32 %v2469, 0.0
        %v2491 = vmax.f32 %v2471, 0.0
        %v2492 = vmax.f32 %v2474, 0.0
        %v2493 = vmax.f32 %v2476, 0.0
        %v2494 = vld [vmem:[#allocation3] sm:$0x1]
        %v2495 = vadd.f32 %v2478, %v2479
        %v2496 = vadd.f32 %v2495, %v2480
        %v2497 = vadd.f32 %v2496, %v2481
        %v2498 = vadd.f32 %v2497, %v2482
        %v2499 = vadd.f32 %v2498, %v2483
        %v2500 = vadd.f32 %v2499, %v2484
        %v2501 = vadd.f32 %v2500, %v2485
        %v2502 = vadd.f32 %v2501, %v2486
        %v2503 = vadd.f32 %v2502, %v2487
        %v2504 = vadd.f32 %v2503, %v2488
        %v2505 = vadd.f32 %v2504, %v2489
        %v2506 = vadd.f32 %v2505, %v2490
        %v2507 = vadd.f32 %v2506, %v2491
        %v2508 = vadd.f32 %v2507, %v2492
        %v2509 = vadd.f32 %v2508, %v2493
        %v2510 = vrot.slane %v2509, 4
        %v2511 = vadd.f32 %v2509, %v2510
        %v2512 = vrot.slane %v2511, 2
        %v2513 = vadd.f32 %v2511, %v2512
        %v2514 = vrot.slane %v2513, 1
        %v2515 = vadd.f32 %v2513, %v2514
        %v2516 = vadd.f32 %v2494, %v2515
        %2517 = vst [vmem:[#allocation3] sm:$0x1] %v2516
        %s2518 = smul.u32 %s23, 128
        %s2519 = scalar_lea.vmem [#allocation2], %s2518
        %2520 = vst [vmem:[%s2519] sm:$0xff] %v2478
        %2521 = vst [vmem:[%s2519 + $0x8] sm:$0xff] %v2479
        %2522 = vst [vmem:[%s2519 + $0x10] sm:$0xff] %v2480
        %2523 = vst [vmem:[%s2519 + $0x18] sm:$0xff] %v2481
        %2524 = vst [vmem:[%s2519 + $0x20] sm:$0xff] %v2482
        %2525 = vst [vmem:[%s2519 + $0x28] sm:$0xff] %v2483
        %2526 = vst [vmem:[%s2519 + $0x30] sm:$0xff] %v2484
        %2527 = vst [vmem:[%s2519 + $0x38] sm:$0xff] %v2485
        %2528 = vst [vmem:[%s2519 + $0x40] sm:$0xff] %v2486
        %2529 = vst [vmem:[%s2519 + $0x48] sm:$0xff] %v2487
        %2530 = vst [vmem:[%s2519 + $0x50] sm:$0xff] %v2488
        %2531 = vst [vmem:[%s2519 + $0x58] sm:$0xff] %v2489
        %2532 = vst [vmem:[%s2519 + $0x60] sm:$0xff] %v2490
        %2533 = vst [vmem:[%s2519 + $0x68] sm:$0xff] %v2491
        %2534 = vst [vmem:[%s2519 + $0x70] sm:$0xff] %v2492
        %2535 = vst [vmem:[%s2519 + $0x78] sm:$0xff] %v2493
        %p2536 = scmp.eq.s32.totalorder %s23, 1
        // Predicated region
        $region41: #{tpu_custom_call.1} parent=35 // pred_check
          %p2537 = pneg %p2536
        $region42: #{tpu_custom_call.1} parent=35 // pred_check_branch
          %2539 = sbr.rel (%p2537) target = $region44
        $region43: #{tpu_custom_call.1} parent=35 // pred_region
          %v2540 = vld [vmem:[#allocation3] sm:$0x1]
          %v2541 = vld [vmem:[%s2] sm:$0xff]
          %v2542 = vld [vmem:[%s2 + $0x8] sm:$0xff]
          %v2543 = vld [vmem:[%s2 + $0x10] sm:$0xff]
          %v2544 = vld [vmem:[%s2 + $0x18] sm:$0xff]
          %v2545 = vld [vmem:[%s2 + $0x20] sm:$0xff]
          %v2546 = vld [vmem:[%s2 + $0x28] sm:$0xff]
          %v2547 = vld [vmem:[%s2 + $0x30] sm:$0xff]
          %v2548 = vld [vmem:[%s2 + $0x38] sm:$0xff]
          %v2549 = vld [vmem:[%s2 + $0x40] sm:$0xff]
          %v2550 = vld [vmem:[%s2 + $0x48] sm:$0xff]
          %v2551 = vld [vmem:[%s2 + $0x50] sm:$0xff]
          %v2552 = vld [vmem:[%s2 + $0x58] sm:$0xff]
          %v2553 = vld [vmem:[%s2 + $0x60] sm:$0xff]
          %v2554 = vld [vmem:[%s2 + $0x68] sm:$0xff]
          %v2555 = vld [vmem:[%s2 + $0x70] sm:$0xff]
          %v2556 = vld [vmem:[%s2 + $0x78] sm:$0xff]
          %v2557 = vld [vmem:[%s3 + $0x1] sm:$0x1]
          %2558 = vmatpush.msra.mxu0 %v2556
          %2559 = vmatpush.msra.mxu0 %v2555
          %2560 = vmatpush.msra.mxu0 %v2554
          %2561 = vmatpush.msra.mxu0 %v2553
          %2562 = vmatpush.msra.mxu0 %v2552
          %2563 = vmatpush.msra.mxu0 %v2551
          %2564 = vmatpush.msra.mxu0 %v2550
          %2565 = vmatpush.msra.mxu0 %v2549
          %2566 = vmatpush.msra.mxu0 %v2548
          %2567 = vmatpush.msra.mxu0 %v2547
          %2568 = vmatpush.msra.mxu0 %v2546
          %2569 = vmatpush.msra.mxu0 %v2545
          %2570 = vmatpush.msra.mxu0 %v2544
          %2571 = vmatpush.msra.mxu0 %v2543
          %2572 = vmatpush.msra.mxu0 %v2542
          %2573 = vmatpush.msra.mxu0 %v2541
          %2574 = vmatmul.f32.gmra.mxu0 %v2540
          %v2575 = vpop.f32.mrf.mxu0
          %v2576 = vadd.f32 %v2557, %v2575
          %2577 = vdwg.mxu0
          %v2578 = vxor.u32 %v2576, 2147483648
          %v2579 = vmul.f32 %v2578, 1.442695
          %v2580 = vpow.pop %v2579
          %v2581 = vadd.f32 %v2580, 1.0
          %v2582 = vrcp.pop %v2581
          %v2583 = vmul.f32 %v2581, %v2582
          %v2584 = vsub.f32 1.0, %v2583
          %v2585 = vmul.f32 %v2582, %v2584
          %v2586 = vadd.f32 %v2582, %v2585
          %vm2587 = vweird.f32 %v2581
          %vm2588 = vweird.f32 %v2582
          %vm2589 = vmor %vm2587, %vm2588
          %v2590 = vsel %vm2589, %v2582, %v2586
          %v2591 = vand.u32 2147483647, %v2581
          %vm2592 = vcmp.eq.f32.partialorder %v2591, 8.507059e+37
          %v2593 = vand.u32 %v2581, 2147483648
          %v2594 = vor.u32 1.1754944e-38, %v2593
          %v2595 = vsel %vm2592, %v2594, %v2590
          %v2596 = vmul.f32 1.0, %v2595
          %v2597 = vld [vmem:[#allocation2] sm:$0xff]
          %v2598 = vld [vmem:[#allocation2 + $0x8] sm:$0xff]
          %v2599 = vld [vmem:[#allocation2 + $0x10] sm:$0xff]
          %v2600 = vld [vmem:[#allocation2 + $0x18] sm:$0xff]
          %v2601 = vld [vmem:[#allocation2 + $0x20] sm:$0xff]
          %v2602 = vld [vmem:[#allocation2 + $0x28] sm:$0xff]
          %v2603 = vld [vmem:[#allocation2 + $0x30] sm:$0xff]
          %v2604 = vld [vmem:[#allocation2 + $0x38] sm:$0xff]
          %v2605 = vld [vmem:[#allocation2 + $0x40] sm:$0xff]
          %v2606 = vld [vmem:[#allocation2 + $0x48] sm:$0xff]
          %v2607 = vld [vmem:[#allocation2 + $0x50] sm:$0xff]
          %v2608 = vld [vmem:[#allocation2 + $0x58] sm:$0xff]
          %v2609 = vld [vmem:[#allocation2 + $0x60] sm:$0xff]
          %v2610 = vld [vmem:[#allocation2 + $0x68] sm:$0xff]
          %v2611 = vld [vmem:[#allocation2 + $0x70] sm:$0xff]
          %v2612 = vld [vmem:[#allocation2 + $0x78] sm:$0xff]
          %v2613 = vld [vmem:[#allocation2 + $0x80] sm:$0xff]
          %v2614 = vld [vmem:[#allocation2 + $0x88] sm:$0xff]
          %v2615 = vld [vmem:[#allocation2 + $0x90] sm:$0xff]
          %v2616 = vld [vmem:[#allocation2 + $0x98] sm:$0xff]
          %v2617 = vld [vmem:[#allocation2 + $0xa0] sm:$0xff]
          %v2618 = vld [vmem:[#allocation2 + $0xa8] sm:$0xff]
          %v2619 = vld [vmem:[#allocation2 + $0xb0] sm:$0xff]
          %v2620 = vld [vmem:[#allocation2 + $0xb8] sm:$0xff]
          %v2621 = vld [vmem:[#allocation2 + $0xc0] sm:$0xff]
          %v2622 = vld [vmem:[#allocation2 + $0xc8] sm:$0xff]
          %v2623 = vld [vmem:[#allocation2 + $0xd0] sm:$0xff]
          %v2624 = vld [vmem:[#allocation2 + $0xd8] sm:$0xff]
          %v2625 = vld [vmem:[#allocation2 + $0xe0] sm:$0xff]
          %v2626 = vld [vmem:[#allocation2 + $0xe8] sm:$0xff]
          %v2627 = vld [vmem:[#allocation2 + $0xf0] sm:$0xff]
          %v2628 = vld [vmem:[#allocation2 + $0xf8] sm:$0xff]
          %v2629 = vperm.slane %v2596, 0
          %v2630 = vmul.f32 %v2597, %v2629
          %v2631 = vmul.f32 %v2598, %v2629
          %v2632 = vmul.f32 %v2599, %v2629
          %v2633 = vmul.f32 %v2600, %v2629
          %v2634 = vmul.f32 %v2601, %v2629
          %v2635 = vmul.f32 %v2602, %v2629
          %v2636 = vmul.f32 %v2603, %v2629
          %v2637 = vmul.f32 %v2604, %v2629
          %v2638 = vmul.f32 %v2605, %v2629
          %v2639 = vmul.f32 %v2606, %v2629
          %v2640 = vmul.f32 %v2607, %v2629
          %v2641 = vmul.f32 %v2608, %v2629
          %v2642 = vmul.f32 %v2609, %v2629
          %v2643 = vmul.f32 %v2610, %v2629
          %v2644 = vmul.f32 %v2611, %v2629
          %v2645 = vmul.f32 %v2612, %v2629
          %v2646 = vmul.f32 %v2613, %v2629
          %v2647 = vmul.f32 %v2614, %v2629
          %v2648 = vmul.f32 %v2615, %v2629
          %v2649 = vmul.f32 %v2616, %v2629
          %v2650 = vmul.f32 %v2617, %v2629
          %v2651 = vmul.f32 %v2618, %v2629
          %v2652 = vmul.f32 %v2619, %v2629
          %v2653 = vmul.f32 %v2620, %v2629
          %v2654 = vmul.f32 %v2621, %v2629
          %v2655 = vmul.f32 %v2622, %v2629
          %v2656 = vmul.f32 %v2623, %v2629
          %v2657 = vmul.f32 %v2624, %v2629
          %v2658 = vmul.f32 %v2625, %v2629
          %v2659 = vmul.f32 %v2626, %v2629
          %v2660 = vmul.f32 %v2627, %v2629
          %v2661 = vmul.f32 %v2628, %v2629
          %2662 = vxpose.xlu0.b32.start [1/16] %v2630, 128
          %2663 = vxpose.xlu0.b32.cont [2/16] %v2631, 128
          %2664 = vxpose.xlu0.b32.cont [3/16] %v2632, 128
          %2665 = vxpose.xlu0.b32.cont [4/16] %v2633, 128
          %2666 = vxpose.xlu0.b32.cont [5/16] %v2634, 128
          %2667 = vxpose.xlu0.b32.cont [6/16] %v2635, 128
          %2668 = vxpose.xlu0.b32.cont [7/16] %v2636, 128
          %2669 = vxpose.xlu0.b32.cont [8/16] %v2637, 128
          %2670 = vxpose.xlu0.b32.cont [9/16] %v2638, 128
          %2671 = vxpose.xlu0.b32.cont [10/16] %v2639, 128
          %2672 = vxpose.xlu0.b32.cont [11/16] %v2640, 128
          %2673 = vxpose.xlu0.b32.cont [12/16] %v2641, 128
          %2674 = vxpose.xlu0.b32.cont [13/16] %v2642, 128
          %2675 = vxpose.xlu0.b32.cont [14/16] %v2643, 128
          %2676 = vxpose.xlu0.b32.cont [15/16] %v2644, 128
          %2677 = vxpose.xlu0.b32.end [16/16] %v2645, 128
          %v2678 = vpop.trf.xlu0
          %v2679 = vpop.trf.xlu0
          %v2680 = vpop.trf.xlu0
          %v2681 = vpop.trf.xlu0
          %v2682 = vpop.trf.xlu0
          %v2683 = vpop.trf.xlu0
          %v2684 = vpop.trf.xlu0
          %v2685 = vpop.trf.xlu0
          %v2686 = vpop.trf.xlu0
          %v2687 = vpop.trf.xlu0
          %v2688 = vpop.trf.xlu0
          %v2689 = vpop.trf.xlu0
          %v2690 = vpop.trf.xlu0
          %v2691 = vpop.trf.xlu0
          %v2692 = vpop.trf.xlu0
          %v2693 = vpop.trf.xlu0
          %2694 = vxpose.xlu0.b32.start [1/16] %v2646, 128
          %2695 = vxpose.xlu0.b32.cont [2/16] %v2647, 128
          %2696 = vxpose.xlu0.b32.cont [3/16] %v2648, 128
          %2697 = vxpose.xlu0.b32.cont [4/16] %v2649, 128
          %2698 = vxpose.xlu0.b32.cont [5/16] %v2650, 128
          %2699 = vxpose.xlu0.b32.cont [6/16] %v2651, 128
          %2700 = vxpose.xlu0.b32.cont [7/16] %v2652, 128
          %2701 = vxpose.xlu0.b32.cont [8/16] %v2653, 128
          %2702 = vxpose.xlu0.b32.cont [9/16] %v2654, 128
          %2703 = vxpose.xlu0.b32.cont [10/16] %v2655, 128
          %2704 = vxpose.xlu0.b32.cont [11/16] %v2656, 128
          %2705 = vxpose.xlu0.b32.cont [12/16] %v2657, 128
          %2706 = vxpose.xlu0.b32.cont [13/16] %v2658, 128
          %2707 = vxpose.xlu0.b32.cont [14/16] %v2659, 128
          %2708 = vxpose.xlu0.b32.cont [15/16] %v2660, 128
          %2709 = vxpose.xlu0.b32.end [16/16] %v2661, 128
          %v2710 = vpop.trf.xlu0
          %v2711 = vpop.trf.xlu0
          %v2712 = vpop.trf.xlu0
          %v2713 = vpop.trf.xlu0
          %v2714 = vpop.trf.xlu0
          %v2715 = vpop.trf.xlu0
          %v2716 = vpop.trf.xlu0
          %v2717 = vpop.trf.xlu0
          %v2718 = vpop.trf.xlu0
          %v2719 = vpop.trf.xlu0
          %v2720 = vpop.trf.xlu0
          %v2721 = vpop.trf.xlu0
          %v2722 = vpop.trf.xlu0
          %v2723 = vpop.trf.xlu0
          %v2724 = vpop.trf.xlu0
          %v2725 = vpop.trf.xlu0
          %2726 = vst [vmem:[%s212] sm:$0xff] %v2678
          %2727 = vst [vmem:[%s212 + $0x8] sm:$0xff] %v2710
        $region44: #{tpu_custom_call.1} parent=35 // pred_fallthru
          _
        %s2728 = sand.u32 %s129, 1
        %s2729 = scalar_lea.sflag [#allocation5], %s2728
        %s2730 = sand.u32 %s129, 1
        %s2731 = smul.addr %s2730, 16
        %s2732 = scalar_lea.vmem [#allocation4], %s2731
        // Predicated region
        $region45: #{tpu_custom_call.1} parent=35 // pred_check
          %p2733 = pneg %p139
        $region46: #{tpu_custom_call.1} parent=35 // pred_check_branch
          %2735 = sbr.rel (%p2733) target = $region48
        $region47: #{tpu_custom_call.1} parent=35 // pred_region
          %2737 = vsyncadd %s2729, 0
          %s2738 = smul.addr %s22, 2
          %s2739 = smul.addr %s2738, 8
          %s2740 = scalar_lea.hbm %s4, %s2739
          %s2742 = sshll.u32 %s2732, 4
          %s2743 = int_to_ptr.vmem [resolvable:$true] %s2742
          %s2744 = sshll.u32 %s2740, 4
          %s2745 = int_to_ptr.hbm [resolvable:$true] %s2744
          %2747 = dma.vmem_to_hbm [thread:$0]  %s2743, 256, %s2745, %s2729
        $region48: #{tpu_custom_call.1} parent=35 // pred_fallthru
          _
      $region36: #{tpu_custom_call.1} parent=5 // pred_fallthru
        _
      %p2748 = scmp.le.s32.totalorder 2, %s13
      // Predicated region
      $region49: #{tpu_custom_call.1} parent=5 // pred_check
        %p2749 = pneg %p2748
      $region50: #{tpu_custom_call.1} parent=5 // pred_check_branch
        %2751 = sbr.rel (%p2749) target = $region52
      $region51: #{tpu_custom_call.1} parent=5 // pred_region
        %s2752 = ssub.s32 %s13, 2
        // Predicated region
        $region53: #{tpu_custom_call.1} parent=51 // pred_check
          %p2753 = pneg %p145
        $region54: #{tpu_custom_call.1} parent=51 // pred_check_branch
          %2755 = sbr.rel (%p2753) target = $region56
        $region55: #{tpu_custom_call.1} parent=51 // pred_region
          %s2756 = sand.u32 %s130, 1
          %s2757 = scalar_lea.sflag [#allocation5], %s2756
          %s2758 = sand.u32 %s130, 1
          %s2759 = smul.addr %s2758, 16
          %s2760 = scalar_lea.vmem [#allocation4], %s2759
          %2762 = dma.done %s2757, 256
        $region56: #{tpu_custom_call.1} parent=51 // pred_fallthru
          _
      $region52: #{tpu_custom_call.1} parent=5 // pred_fallthru
        _
    $region6: #{tpu_custom_call.1} parent=1 // loop_footer
      %s17 = sadd.s32 1, %s13
    $region7: #{tpu_custom_call.1} parent=1 // loop_footer_branch
      %12 = sbr.rel target = $region3
    $region8: #{tpu_custom_call.1} parent=1 // loop_exit
      _
    %2763 = vsyncpa [#allocation5], 1
    %s2764 = scalar_lea.sflag [#allocation5], 1
    %2765 = vsyncpa %s2764, 1

</llo_original>
